<compile_context>
chip_gen: v7x
topology: tpu7x:2x2x1
jax: 0.10.0
libtpu: 0.0.40
codegen_flags: <defaults>
</compile_context>

<pallas_src>
import jax
import jax.numpy as jnp
from jax.experimental import pallas as pl
from jax.experimental.pallas import tpu as pltpu


LANES = 128      # lane width; pooled features are zero-padded to this many channels
KBAND = 128      # one 128-lane K band per conv row tap (di)
BN_MAX = 64      # max images per conv grid step (VMEM-safe on v5e/v6e/v7x)
TQ_MAX = 256     # max query rows per distance grid step

# Matmul-operand dtype for the conv kernel.  Set to jnp.bfloat16 on v6e/v7x for
# ~2x MXU throughput / half the input DMA (accumulation is always f32); kept
# f32 by default for bit-closeness to the PyTorch module and the 1e-3 check.
CONV_DTYPE = jnp.float32


def _round_up(n, m):
    return ((n + m - 1) // m) * m


def _block_rows(n, cap):
    """Row-block size: multiple of 8, <= cap; when there is enough work, small
    enough that the grid has >= 2 steps so the 'parallel' axis can be split
    across both TensorCores on v7x (irrelevant but harmless on v5e/v6e)."""
    n8 = _round_up(max(n, 1), 8)
    if n8 < 32:                      # tiny batch: padding waste beats a 2-way split
        return min(n8, cap)
    return max(8, min(cap, _round_up(n8 // 2, 8)))


# ----------------------------------------------------------------------------
# Wrapper-side, once-per-parameter-update preparation (hoisted out of the
# per-episode jitted path).
# ----------------------------------------------------------------------------
def prepare_encoder_params(w, b, H, W):
    """Build the banded conv weight, tiled bias and pooling matrix.

    wbd : [3*KBAND, W*Cout]  row (di*KBAND + wp*Cin + cin), col (v*Cout + cout)
          = w[cout, cin, di, wp - v]  when 0 <= wp - v <= 2, else 0.
          Rows >= Wp*Cin inside each band are zero (lane padding of the band).
    bias: [1, W*Cout]        bias tiled over the W output columns.
    pool: [W*Cout, LANES]    sums over W, scales by 1/(H*W), pads channels
                             to 128 lanes (extra columns exactly zero).
    """
    Cout, Cin, KH, KW = w.shape
    assert (KH, KW) == (3, 3), "synthetic encoder uses a 3x3 conv"
    Wp = W + 2
    WpCin = Wp * Cin
    assert WpCin <= KBAND, "packed padded row (W+2)*Cin must fit one 128-lane band"
    assert Cout <= LANES

    wk = w.transpose(2, 3, 1, 0).astype(jnp.float32)          # [di, dj, Cin, Cout]
    dj = jnp.arange(3)[:, None, None]
    wp = jnp.arange(Wp)[None, :, None]
    v = jnp.arange(W)[None, None, :]
    sel = (wp - v == dj).astype(jnp.float32)                  # [3(dj), Wp, W]
    band = jnp.einsum("jwv,ijco->iwcvo", sel, wk)             # [3(di), Wp, Cin, W, Cout]
    band = band.reshape(3, WpCin, W * Cout)
    band = jnp.pad(band, ((0, 0), (0, KBAND - WpCin), (0, 0)))  # zero K-pad rows
    wbd = band.reshape(3 * KBAND, W * Cout).astype(CONV_DTYPE)

    b_tiled = jnp.tile(b.astype(jnp.float32), (W,)).reshape(1, W * Cout)
    pool = jnp.tile(jnp.eye(Cout, dtype=jnp.float32), (W, 1)) / float(H * W)
    pool = jnp.pad(pool, ((0, 0), (0, LANES - Cout)))           # [W*Cout, 128]
    return {"wbd": wbd, "bias": b_tiled, "pool": pool}


# ----------------------------------------------------------------------------
# Kernel 1: fused conv(3x3, pad=1) + bias + ReLU + global average pool
# ----------------------------------------------------------------------------
def _make_conv_pool_kernel(bn, H, W, Cin, Cout):
    Wp = W + 2
    WpCin = Wp * Cin
    WCout = W * Cout
    pad_w = KBAND - WpCin

    def kernel(x_ref, w_ref, b_ref, pool_ref, o_ref):
        # x_ref   : [bn, Hp, Wp*Cin]   NHWC-packed, spatially padded input
        # w_ref   : [3*KBAND, W*Cout]  banded conv weight (dj folded in)
        # b_ref   : [1, W*Cout]        bias tiled over W
        # pool_ref: [W*Cout, LANES]    spatial-mean + channel-pad matrix
        # o_ref   : [bn, LANES]        pooled features (columns >= Cout are zero)
        dt = x_ref.dtype
        zpad = jnp.zeros((bn * H, pad_w), dt) if pad_w > 0 else None
        parts = []
        for di in range(3):
            slab = x_ref[:, di:di + H, :].reshape(bn * H, WpCin)   # row-tap slab
            parts.append(slab)
            if zpad is not None:
                parts.append(zpad)
        xk = jnp.concatenate(parts, axis=1)                        # [bn*H, 3*128]

        # One MXU matmul covers all 9 conv taps; K accumulated inside the MXU.
        acc = jnp.dot(xk, w_ref[...], preferred_element_type=jnp.float32)
        acts = jnp.maximum(acc + b_ref[...], 0.0)                  # bias + ReLU
        acts = acts.reshape(bn, H, WCout).sum(axis=1)              # sum over H
        # sum over W, 1/(H*W) scale, channel pad to 128 lanes: one small matmul
        o_ref[...] = jnp.dot(acts, pool_ref[...],
                             preferred_element_type=jnp.float32)   # [bn, 128]

    return kernel


def _encoder_features(x, prep):
    """Fused conv+ReLU+GAP.  Returns [N, LANES] f32; columns >= Cout are 0."""
    N, Cin, H, W = x.shape
    Hp, Wp = H + 2, W + 2
    WpCin = Wp * Cin
    wbd, b_tiled, pool = prep["wbd"], prep["bias"], prep["pool"]
    Cout = b_tiled.shape[1] // W
    assert wbd.shape == (3 * KBAND, W * Cout), "prepared params do not match x"
    assert WpCin <= KBAND and Cout <= LANES

    # Layout prep: spatial pad, NCHW -> (N, Hp, Wp*Cin) packing. The packed row
    # is left at its natural width (no lane padding) to minimise input DMA.
    xp = jnp.pad(x, ((0, 0), (0, 0), (1, 1), (1, 1)))
    xr = xp.transpose(0, 2, 3, 1).reshape(N, Hp, WpCin).astype(CONV_DTYPE)

    bn = _block_rows(N, BN_MAX)
    Npad = _round_up(N, bn)
    xr = jnp.pad(xr, ((0, Npad - N), (0, 0), (0, 0)))

    kernel = _make_conv_pool_kernel(bn, H, W, Cin, Cout)
    feats = pl.pallas_call(
        kernel,
        out_shape=jax.ShapeDtypeStruct((Npad, LANES), jnp.float32),
        grid=(Npad // bn,),
        in_specs=[
            pl.BlockSpec((bn, Hp, WpCin), lambda i: (i, 0, 0)),
            pl.BlockSpec((3 * KBAND, W * Cout), lambda i: (0, 0)),  # resident
            pl.BlockSpec((1, W * Cout), lambda i: (0, 0)),          # resident
            pl.BlockSpec((W * Cout, LANES), lambda i: (0, 0)),      # resident
        ],
        out_specs=pl.BlockSpec((bn, LANES), lambda i: (i, 0)),
        compiler_params=pltpu.CompilerParams(
            dimension_semantics=("parallel",)),
    )(xr, wbd, b_tiled, pool)
    return feats[:N]


# ----------------------------------------------------------------------------
# Kernel 2: -SquaredL2Distance in gram form (MXU), tiled over query rows
# ----------------------------------------------------------------------------
def _neg_sqdist_kernel(q_ref, p_ref, pn_ref, o_ref):
    q = q_ref[...]                                   # [tq, D]
    dn = (((1,), (1,)), ((), ()))                    # q @ p^T (contract features)
    qp = jax.lax.dot_general(q, p_ref[...], dn,
                             preferred_element_type=jnp.float32)    # [tq, Cpad]
    qn = jnp.sum(q * q, axis=1, keepdims=True)                       # [tq, 1]
    # -(|q|^2 + |p|^2 - 2 q.p) == the module's -dists; negation fused in store.
    o_ref[...] = 2.0 * qp - qn - pn_ref[...]


def neg_squared_l2_distance(qf, pf):
    Nq, D = qf.shape
    C = pf.shape[0]
    assert D % LANES == 0, "feature dim must be lane-dense (padded to 128)"

    Cpad = _round_up(max(C, 1), LANES)               # lane-dense output columns
    tq = _block_rows(Nq, TQ_MAX)
    Nqp = _round_up(Nq, tq)

    qf_p = jnp.pad(qf, ((0, Nqp - Nq), (0, 0))).astype(jnp.float32)
    pf_p = jnp.pad(pf, ((0, Cpad - C), (0, 0))).astype(jnp.float32)
    pn = jnp.sum(pf_p * pf_p, axis=1)[None, :]       # [1, Cpad], hoisted norms

    out = pl.pallas_call(
        _neg_sqdist_kernel,
        out_shape=jax.ShapeDtypeStruct((Nqp, Cpad), jnp.float32),
        grid=(Nqp // tq,),
        in_specs=[
            pl.BlockSpec((tq, D), lambda i: (i, 0)),
            pl.BlockSpec((Cpad, D), lambda i: (0, 0)),   # prototypes resident
            pl.BlockSpec((1, Cpad), lambda i: (0, 0)),   # prototype norms resident
        ],
        out_specs=pl.BlockSpec((tq, Cpad), lambda i: (i, 0)),
        compiler_params=pltpu.CompilerParams(
            dimension_semantics=("parallel",)),
    )(qf_p, pf_p, pn)
    return out[:Nq, :C]


# ----------------------------------------------------------------------------
# ProtoNet API (matches the PyTorch module's forward / forward_train)
# ----------------------------------------------------------------------------
def protonet_forward(x, prep):
    W = x.shape[3]
    Cout = prep["bias"].shape[1] // W
    return _encoder_features(x, prep)[:, :Cout]


def protonet_forward_train(query_samples, support_samples, prep):
    num_classes, num_support = support_samples.shape[:2]
    # Keep the zero-padded 128-wide features: padded columns are exactly zero
    # for queries and prototypes, so distances are unchanged while the distance
    # kernel's contraction and output stay lane-dense.
    qf = _encoder_features(query_samples, prep)                      # [Nq, 128]
    flat_support = support_samples.reshape(
        (num_classes * num_support,) + support_samples.shape[2:])
    sf = _encoder_features(flat_support, prep)                       # [C*S, 128]
    pf = sf.reshape(num_classes, num_support, -1).mean(axis=1)       # [C, 128]
    return neg_squared_l2_distance(qf, pf)                           # [Nq, C]


# ----------------------------------------------------------------------------
# Pure-JAX reference (correctness check)
# ----------------------------------------------------------------------------
def _ref_encoder(x, params):
    w, b = params["w"], params["b"]
    y = jax.lax.conv_general_dilated(
        x, w, window_strides=(1, 1), padding="SAME",
        dimension_numbers=("NCHW", "OIHW", "NCHW"))
    y = jax.nn.relu(y + b[None, :, None, None])
    return y.mean(axis=(2, 3))


def _ref_forward_train(q, s, params):
    C, S = s.shape[:2]
    qf = _ref_encoder(q, params)
    sf = _ref_encoder(s.reshape((C * S,) + s.shape[2:]), params)
    pf = sf.reshape(C, S, -1).mean(axis=1)
    d = ((qf[:, None, :] - pf[None, :, :]) ** 2).sum(axis=2)
    return -d


if __name__ == "__main__":
    key = jax.random.PRNGKey(0)
    k_w, k_b, k_q, k_s = jax.random.split(key, 4)

    Cin, Cout = 4, 32
    H = W = 16
    # num_query=40 exercises multi-step grids (grid=2) on both kernels while
    # keeping shapes small; support encoder runs the single-step path.
    num_classes, num_support, num_query = 3, 2, 40

    w = jax.random.normal(k_w, (Cout, Cin, 3, 3), jnp.float32) * 0.1
    b = jax.random.normal(k_b, (Cout,), jnp.float32) * 0.1
    params = {"w": w, "b": b}
    query_samples = jax.random.normal(k_q, (num_query, Cin, H, W), jnp.float32)
    support_samples = jax.random.normal(
        k_s, (num_classes, num_support, Cin, H, W), jnp.float32)

    # Built once per parameter update, outside the jitted per-episode path.
    prep = prepare_encoder_params(w, b, H, W)

    fwd = jax.jit(protonet_forward)
    fwd_train = jax.jit(protonet_forward_train)

    # plain forward (encoder only)
    feats = jax.block_until_ready(fwd(query_samples, prep))
    # episodic forward_train
    logits = jax.block_until_ready(
        fwd_train(query_samples, support_samples, prep))

    feats_ref = _ref_encoder(query_samples, params)
    logits_ref = _ref_forward_train(query_samples, support_samples, params)

    assert feats.shape == (num_query, Cout)
    assert logits.shape == (num_query, num_classes)
    assert jnp.allclose(feats, feats_ref, rtol=1e-3, atol=1e-3), (
        f"encoder mismatch: max abs err {jnp.max(jnp.abs(feats - feats_ref))}")
    assert jnp.allclose(logits, logits_ref, rtol=1e-3, atol=1e-3), (
        f"forward_train mismatch: max abs err "
        f"{jnp.max(jnp.abs(logits - logits_ref))}")

    print("KERNEL_OK")
</pallas_src>

<mosaic_0001>
module attributes {stable_mosaic.version = 11 : i64} {
  func.func @kernel(%arg0: i32, %arg1: memref<24x18x72xf32, #tpu.memory_space<vmem>>, %arg2: memref<384x512xf32, #tpu.memory_space<vmem>>, %arg3: memref<1x512xf32, #tpu.memory_space<vmem>>, %arg4: memref<512x128xf32, #tpu.memory_space<vmem>>, %arg5: memref<24x128xf32, #tpu.memory_space<vmem>>) attributes {dimension_semantics = [#tpu.dimension_semantics<parallel>], iteration_bounds = array<i64: 2>, scalar_prefetch = 0 : i64, scratch_operands = 0 : i64, tpu.core_type = #tpu.core_type<tc>, window_params = [{transform_indices = @transform_0, window_bounds = array<i64: 24, 18, 72>}, {pipeline_mode = #tpu.pipeline_mode<synchronous>, transform_indices = @transform_1, window_bounds = array<i64: 384, 512>}, {pipeline_mode = #tpu.pipeline_mode<synchronous>, transform_indices = @transform_2, window_bounds = array<i64: 1, 512>}, {pipeline_mode = #tpu.pipeline_mode<synchronous>, transform_indices = @transform_3, window_bounds = array<i64: 512, 128>}, {transform_indices = @transform_4, window_bounds = array<i64: 24, 128>}]} {
    %cst = arith.constant 0.000000e+00 : f32
    %0 = vector.broadcast %cst : f32 to vector<384x56xf32>
    %c0 = arith.constant 0 : index
    %c0_0 = arith.constant 0 : index
    %c0_1 = arith.constant 0 : index
    %1 = vector.load %arg1[%c0, %c0_0, %c0_1] : memref<24x18x72xf32, #tpu.memory_space<vmem>>, vector<24x16x72xf32>
    %2 = vector.shape_cast %1 : vector<24x16x72xf32> to vector<384x72xf32>
    %c0_2 = arith.constant 0 : index
    %c1 = arith.constant 1 : index
    %c0_3 = arith.constant 0 : index
    %3 = vector.load %arg1[%c0_2, %c1, %c0_3] : memref<24x18x72xf32, #tpu.memory_space<vmem>>, vector<24x16x72xf32>
    %4 = vector.shape_cast %3 : vector<24x16x72xf32> to vector<384x72xf32>
    %c0_4 = arith.constant 0 : index
    %c2 = arith.constant 2 : index
    %c0_5 = arith.constant 0 : index
    %5 = vector.load %arg1[%c0_4, %c2, %c0_5] : memref<24x18x72xf32, #tpu.memory_space<vmem>>, vector<24x16x72xf32>
    %6 = vector.shape_cast %5 : vector<24x16x72xf32> to vector<384x72xf32>
    %7 = tpu.concatenate %2, %0, %4, %0, %6, %0 in 1 : vector<384x72xf32>, vector<384x56xf32>, vector<384x72xf32>, vector<384x56xf32>, vector<384x72xf32>, vector<384x56xf32> -> vector<384x384xf32>
    %c0_6 = arith.constant 0 : index
    %c0_7 = arith.constant 0 : index
    %8 = vector.load %arg2[%c0_6, %c0_7] : memref<384x512xf32, #tpu.memory_space<vmem>>, vector<384x512xf32>
    %cst_8 = arith.constant dense<0.000000e+00> : vector<384x512xf32>
    %9 = tpu.matmul %7, %8, %cst_8 {dimension_numbers = #tpu.dot_dimension_numbers<[1], [0], [0], [1], [0, 0, 1, 1], [], []>} : vector<384x384xf32>, vector<384x512xf32>, vector<384x512xf32> -> vector<384x512xf32>
    %c0_9 = arith.constant 0 : index
    %c0_10 = arith.constant 0 : index
    %10 = vector.load %arg3[%c0_9, %c0_10] : memref<1x512xf32, #tpu.memory_space<vmem>>, vector<1x512xf32>
    %11 = vector.broadcast %10 : vector<1x512xf32> to vector<384x512xf32>
    %12 = arith.addf %9, %11 : vector<384x512xf32>
    %cst_11 = arith.constant 0.000000e+00 : f32
    %13 = vector.broadcast %cst_11 : f32 to vector<384x512xf32>
    %14 = arith.maximumf %12, %13 : vector<384x512xf32>
    %15 = vector.shape_cast %14 : vector<384x512xf32> to vector<24x16x512xf32>
    %cst_12 = arith.constant dense<0.000000e+00> : vector<24x512xf32>
    %16 = vector.multi_reduction <add>, %15, %cst_12 [1] : vector<24x16x512xf32> to vector<24x512xf32>
    %c0_13 = arith.constant 0 : index
    %c0_14 = arith.constant 0 : index
    %17 = vector.load %arg4[%c0_13, %c0_14] : memref<512x128xf32, #tpu.memory_space<vmem>>, vector<512x128xf32>
    %cst_15 = arith.constant dense<0.000000e+00> : vector<24x128xf32>
    %18 = tpu.matmul %16, %17, %cst_15 {dimension_numbers = #tpu.dot_dimension_numbers<[1], [0], [0], [1], [0, 0, 1, 1], [], []>} : vector<24x512xf32>, vector<512x128xf32>, vector<24x128xf32> -> vector<24x128xf32>
    %c0_16 = arith.constant 0 : index
    %c0_17 = arith.constant 0 : index
    %19 = vector.load %arg5[%c0_16, %c0_17] : memref<24x128xf32, #tpu.memory_space<vmem>>, vector<24x128xf32>
    tpu.vector_store %arg5[%c0_16, %c0_17], %18 {strides = array<i32>} : memref<24x128xf32, #tpu.memory_space<vmem>>, vector<24x128xf32>,
    return
  }
  func.func @transform_0(%arg0: i32) -> (i32, i32, i32) {
    %c0_i32 = arith.constant 0 : i32
    %c0_i32_0 = arith.constant 0 : i32
    %c0_i32_1 = arith.constant 0 : i32
    return %arg0, %c0_i32, %c0_i32_0 : i32, i32, i32
  }
  func.func @transform_1(%arg0: i32) -> (i32, i32) {
    %c0_i32 = arith.constant 0 : i32
    %c0_i32_0 = arith.constant 0 : i32
    %c0_i32_1 = arith.constant 0 : i32
    return %c0_i32, %c0_i32_0 : i32, i32
  }
  func.func @transform_2(%arg0: i32) -> (i32, i32) {
    %c0_i32 = arith.constant 0 : i32
    %c0_i32_0 = arith.constant 0 : i32
    %c0_i32_1 = arith.constant 0 : i32
    return %c0_i32, %c0_i32_0 : i32, i32
  }
  func.func @transform_3(%arg0: i32) -> (i32, i32) {
    %c0_i32 = arith.constant 0 : i32
    %c0_i32_0 = arith.constant 0 : i32
    %c0_i32_1 = arith.constant 0 : i32
    return %c0_i32, %c0_i32_0 : i32, i32
  }
  func.func @transform_4(%arg0: i32) -> (i32, i32) {
    %c0_i32 = arith.constant 0 : i32
    %c0_i32_0 = arith.constant 0 : i32
    return %arg0, %c0_i32 : i32, i32
  }
}

</mosaic_0001>

<llo_original>
// kernel: protonet_forward.1
$region0: #{protonet_forward.1}
  #allocation0 [shape = 'u32[]', space=smem, size = 0x4, offset = 0x4, fixed_abs, tag = 'smem constant byte address 0x4 - core index']
  #allocation1 [shape = 'u32[144,128]{1,0:T(1,128)}', space=vmem, size = 0x12000, scoped, tag = 'internal scratch']
  %s0 = inlined_call_operand.vmem [shape: f32[48,18,72], index: 0, kind: input, shape index: {}]
  %s1 = inlined_call_operand.vmem [shape: f32[384,512], index: 1, kind: input, shape index: {}]
  %s2 = inlined_call_operand.vmem [shape: f32[1,512], index: 2, kind: input, shape index: {}]
  %s3 = inlined_call_operand.vmem [shape: f32[512,128], index: 3, kind: input, shape index: {}]
  %s4 = inlined_call_operand.vmem [shape: f32[48,128], index: 4, kind: output, shape index: {}]
  %s5 = sld [smem:[#allocation0]]
  $region49: #{protonet_forward.1} parent=0
    _
  %s7 = ssub.s32 1, %s5
  %s8 = scalar_select 0, %s7, %s5
  loop: start=0, step=1, limit=4
  $region2: #{protonet_forward.1} parent=0 // loop_pre_header
    _
  $region3: #{protonet_forward.1} parent=0 // loop_header
    %s10 = sphi 0, %s14
    %p11 = scmp.ge.s32.totalorder %s10, 4
    %s20 = sphi 0, %s22
    %s23 = sphi 0, %s20
    %s24 = sphi 0, %s23
    %s40 = sphi 0, %s24
    %s44 = sphi 0, %s44
    %s46 = sphi 0, %s44
    %s47 = sphi 0, %s46
    %s61 = sphi 0, %s47
    %s65 = sphi 0, %s65
    %s67 = sphi 0, %s65
    %s68 = sphi 0, %s67
    %s82 = sphi 0, %s68
    %s86 = sphi 0, %s86
    %s88 = sphi 0, %s86
    %s89 = sphi 0, %s88
    %s103 = sphi 0, %s89
    %s109 = sphi 0, %s111
    %s112 = sphi 0, %s109
    %s113 = sphi 0, %s112
    %s129 = sphi 0, %s113
  $region4: #{protonet_forward.1} parent=0 // loop_header_branch
    %13 = sbr.rel (%p11) target = $region8
  $region5: #{protonet_forward.1} parent=0 // loop_body
    %s15 = ssub.s32 %s10, 1
    %s16 = ssub.s32 %s10, 2
    %s17 = sadd.s32 %s10, 1
    %s18 = ssub.s32 %s10, %s17
    %p19 = scmp.eq.s32.totalorder %s18, 0
    %s21 = sadd.s32 %s20, 1
    %s22 = scalar_select %p19, %s20, %s21
    %p25 = pneg %p19
    %p26 = scmp.eq.s32.totalorder %s10, 1
    %p27 = por %p25, %p26
    %p28 = scmp.ne.s32.totalorder %s20, %s23
    %p29 = scmp.eq.s32.totalorder %s10, 0
    %p30 = por %p28, %p29
    %p31 = scmp.ne.s32.totalorder %s20, %s23
    %p32 = scmp.eq.s32.totalorder %s15, 1
    %p33 = por %p31, %p32
    %p34 = scmp.ne.s32.totalorder %s23, %s24
    %p35 = scmp.eq.s32.totalorder %s15, 0
    %p36 = por %p34, %p35
    %p37 = scmp.ne.s32.totalorder %s23, %s24
    %p38 = scmp.eq.s32.totalorder %s16, 1
    %p39 = por %p37, %p38
    %p41 = scmp.ne.s32.totalorder %s24, %s40
    %p42 = scmp.eq.s32.totalorder %s16, 0
    %p43 = por %p41, %p42
    %s45 = sadd.s32 %s44, 1
    %p48 = scmp.eq.s32.totalorder %s10, 1
    %p49 = scmp.ne.s32.totalorder %s44, %s46
    %p50 = scmp.eq.s32.totalorder %s10, 0
    %p51 = por %p49, %p50
    %p52 = scmp.ne.s32.totalorder %s44, %s46
    %p53 = scmp.eq.s32.totalorder %s15, 1
    %p54 = por %p52, %p53
    %p55 = scmp.ne.s32.totalorder %s46, %s47
    %p56 = scmp.eq.s32.totalorder %s15, 0
    %p57 = por %p55, %p56
    %p58 = scmp.ne.s32.totalorder %s46, %s47
    %p59 = scmp.eq.s32.totalorder %s16, 1
    %p60 = por %p58, %p59
    %p62 = scmp.ne.s32.totalorder %s47, %s61
    %p63 = scmp.eq.s32.totalorder %s16, 0
    %p64 = por %p62, %p63
    %s66 = sadd.s32 %s65, 1
    %p69 = scmp.eq.s32.totalorder %s10, 1
    %p70 = scmp.ne.s32.totalorder %s65, %s67
    %p71 = scmp.eq.s32.totalorder %s10, 0
    %p72 = por %p70, %p71
    %p73 = scmp.ne.s32.totalorder %s65, %s67
    %p74 = scmp.eq.s32.totalorder %s15, 1
    %p75 = por %p73, %p74
    %p76 = scmp.ne.s32.totalorder %s67, %s68
    %p77 = scmp.eq.s32.totalorder %s15, 0
    %p78 = por %p76, %p77
    %p79 = scmp.ne.s32.totalorder %s67, %s68
    %p80 = scmp.eq.s32.totalorder %s16, 1
    %p81 = por %p79, %p80
    %p83 = scmp.ne.s32.totalorder %s68, %s82
    %p84 = scmp.eq.s32.totalorder %s16, 0
    %p85 = por %p83, %p84
    %s87 = sadd.s32 %s86, 1
    %p90 = scmp.eq.s32.totalorder %s10, 1
    %p91 = scmp.ne.s32.totalorder %s86, %s88
    %p92 = scmp.eq.s32.totalorder %s10, 0
    %p93 = por %p91, %p92
    %p94 = scmp.ne.s32.totalorder %s86, %s88
    %p95 = scmp.eq.s32.totalorder %s15, 1
    %p96 = por %p94, %p95
    %p97 = scmp.ne.s32.totalorder %s88, %s89
    %p98 = scmp.eq.s32.totalorder %s15, 0
    %p99 = por %p97, %p98
    %p100 = scmp.ne.s32.totalorder %s88, %s89
    %p101 = scmp.eq.s32.totalorder %s16, 1
    %p102 = por %p100, %p101
    %p104 = scmp.ne.s32.totalorder %s89, %s103
    %p105 = scmp.eq.s32.totalorder %s16, 0
    %p106 = por %p104, %p105
    %s107 = ssub.s32 %s10, %s17
    %p108 = scmp.eq.s32.totalorder %s107, 0
    %s110 = sadd.s32 %s109, 1
    %s111 = scalar_select %p108, %s109, %s110
    %p114 = pneg %p108
    %p115 = scmp.eq.s32.totalorder %s10, 1
    %p116 = por %p114, %p115
    %p117 = scmp.ne.s32.totalorder %s109, %s112
    %p118 = scmp.eq.s32.totalorder %s10, 0
    %p119 = por %p117, %p118
    %p120 = scmp.ne.s32.totalorder %s109, %s112
    %p121 = scmp.eq.s32.totalorder %s15, 1
    %p122 = por %p120, %p121
    %p123 = scmp.ne.s32.totalorder %s112, %s113
    %p124 = scmp.eq.s32.totalorder %s15, 0
    %p125 = por %p123, %p124
    %p126 = scmp.ne.s32.totalorder %s112, %s113
    %p127 = scmp.eq.s32.totalorder %s16, 1
    %p128 = por %p126, %p127
    %p130 = scmp.ne.s32.totalorder %s113, %s129
    %p131 = scmp.eq.s32.totalorder %s16, 0
    %p132 = por %p130, %p131
    %p133 = scmp.le.s32.totalorder 1, %s10
    %p134 = scmp.lt.s32.totalorder %s10, 3
    %p135 = pnand %p133, %p134
    %p136 = pneg %p135
    // Predicated region
    $region9: #{protonet_forward.1} parent=5 // pred_check
      _
    $region10: #{protonet_forward.1} parent=5 // pred_check_branch
      %138 = sbr.rel (%p135) target = $region12
    $region11: #{protonet_forward.1} parent=5 // pred_region
      %s139 = ssub.s32 %s10, 1
      // Predicated region
      $region13: #{protonet_forward.1} parent=11 // pred_check
        %p140 = pneg %p57
      $region14: #{protonet_forward.1} parent=11 // pred_check_branch
        %142 = sbr.rel (%p140) target = $region16
      $region15: #{protonet_forward.1} parent=11 // pred_region
        _
      $region16: #{protonet_forward.1} parent=11 // pred_fallthru
        _
      // Predicated region
      $region17: #{protonet_forward.1} parent=11 // pred_check
        %p143 = pneg %p78
      $region18: #{protonet_forward.1} parent=11 // pred_check_branch
        %145 = sbr.rel (%p143) target = $region20
      $region19: #{protonet_forward.1} parent=11 // pred_region
        _
      $region20: #{protonet_forward.1} parent=11 // pred_fallthru
        _
      // Predicated region
      $region21: #{protonet_forward.1} parent=11 // pred_check
        %p146 = pneg %p99
      $region22: #{protonet_forward.1} parent=11 // pred_check_branch
        %148 = sbr.rel (%p146) target = $region24
      $region23: #{protonet_forward.1} parent=11 // pred_region
        _
      $region24: #{protonet_forward.1} parent=11 // pred_fallthru
        _
    $region12: #{protonet_forward.1} parent=5 // pred_fallthru
      _
    %p149 = scmp.lt.s32.totalorder %s10, 2
    // Predicated region
    $region25: #{protonet_forward.1} parent=5 // pred_check
      %p150 = pneg %p149
    $region26: #{protonet_forward.1} parent=5 // pred_check_branch
      %152 = sbr.rel (%p150) target = $region28
    $region27: #{protonet_forward.1} parent=5 // pred_region
      // Predicated region
      $region29: #{protonet_forward.1} parent=27 // pred_check
        %p153 = pneg %p30
      $region30: #{protonet_forward.1} parent=27 // pred_check_branch
        %155 = sbr.rel (%p153) target = $region32
      $region31: #{protonet_forward.1} parent=27 // pred_region
        %s156 = smul.u32 24, %s10
        %p157 = scmp.lt.s32.totalorder %s156, 47
        %s158 = scalar_select %p157, %s156, 47
        %s159 = smul.addr %s158, 3
        %s160 = smul.addr %s159, 8
        %s161 = scalar_lea.vmem %s0, %s160
        %s162 = smul.u32 24, %s10
      $region32: #{protonet_forward.1} parent=27 // pred_fallthru
        _
    $region28: #{protonet_forward.1} parent=5 // pred_fallthru
      _
    %p163 = scmp.le.s32.totalorder 1, %s10
    %p164 = scmp.lt.s32.totalorder %s10, 3
    %p165 = pnand %p163, %p164
    %p166 = pneg %p165
    // Predicated region
    $region33: #{protonet_forward.1} parent=5 // pred_check
      _
    $region34: #{protonet_forward.1} parent=5 // pred_check_branch
      %168 = sbr.rel (%p165) target = $region36
    $region35: #{protonet_forward.1} parent=5 // pred_region
      %s169 = ssub.s32 %s10, 1
      %s170 = smul.u32 24, %s15
      %p171 = scmp.lt.s32.totalorder %s170, 47
      %s172 = scalar_select %p171, %s170, 47
      %s173 = smul.addr %s172, 3
      %s174 = smul.addr %s173, 8
      %s175 = scalar_lea.vmem %s0, %s174
      %p176 = pneg %p36
      %p177 = pneg %p33
      %p178 = pneg %p57
      %p179 = pneg %p54
      %p180 = pneg %p78
      %p181 = pneg %p75
      %p182 = pneg %p99
      %p183 = pneg %p96
      %p184 = pneg %p125
      %p185 = pneg %p122
      %s186 = smul.u32 3, %s15
      %p187 = scmp.lt.s32.totalorder %s186, 5
      %s188 = scalar_select %p187, %s186, 5
      %s189 = smul.addr %s188, 8
      %s190 = scalar_lea.vmem %s4, %s189
      %s191 = smul.u32 24, %s15
      %p192 = scmp.lt.s32.totalorder %s191, 47
      %s193 = scalar_select %p192, %s191, 47
      %s194 = smul.addr %s193, 3
      %s195 = smul.addr %s194, 8
      %s196 = scalar_lea.vmem %s0, %s195
      %s197 = smul.u32 24, %s15
      %s198 = smul.u32 3, %s15
      %p199 = scmp.lt.s32.totalorder %s198, 5
      %s200 = scalar_select %p199, %s198, 5
      %s201 = smul.addr %s200, 8
      %s202 = scalar_lea.vmem %s4, %s201
      %s203 = smul.u32 3, %s15
      %v204 = vld [vmem:[%s196] sm:$0xff]
      %v205 = vld [vmem:[%s196 + $0x8] sm:$0xff]
      %v206 = vld [vmem:[%s196 + $0x18] sm:$0xff]
      %v207 = vld [vmem:[%s196 + $0x20] sm:$0xff]
      %v208 = vld [vmem:[%s196 + $0x30] sm:$0xff]
      %v209 = vld [vmem:[%s196 + $0x38] sm:$0xff]
      %v210 = vld [vmem:[%s196 + $0x48] sm:$0xff]
      %v211 = vld [vmem:[%s196 + $0x50] sm:$0xff]
      %v212 = vld [vmem:[%s196 + $0x60] sm:$0xff]
      %v213 = vld [vmem:[%s196 + $0x68] sm:$0xff]
      %v214 = vld [vmem:[%s196 + $0x78] sm:$0xff]
      %v215 = vld [vmem:[%s196 + $0x80] sm:$0xff]
      %v216 = vld [vmem:[%s196 + $0x90] sm:$0xff]
      %v217 = vld [vmem:[%s196 + $0x98] sm:$0xff]
      %v218 = vld [vmem:[%s196 + $0xa8] sm:$0xff]
      %v219 = vld [vmem:[%s196 + $0xb0] sm:$0xff]
      %v220 = vld [vmem:[%s196 + $0xc0] sm:$0xff]
      %v221 = vld [vmem:[%s196 + $0xc8] sm:$0xff]
      %v222 = vld [vmem:[%s196 + $0xd8] sm:$0xff]
      %v223 = vld [vmem:[%s196 + $0xe0] sm:$0xff]
      %v224 = vld [vmem:[%s196 + $0xf0] sm:$0xff]
      %v225 = vld [vmem:[%s196 + $0xf8] sm:$0xff]
      %v226 = vld [vmem:[%s196 + $0x108] sm:$0xff]
      %v227 = vld [vmem:[%s196 + $0x110] sm:$0xff]
      %v228 = vld [vmem:[%s196 + $0x120] sm:$0xff]
      %v229 = vld [vmem:[%s196 + $0x128] sm:$0xff]
      %v230 = vld [vmem:[%s196 + $0x138] sm:$0xff]
      %v231 = vld [vmem:[%s196 + $0x140] sm:$0xff]
      %v232 = vld [vmem:[%s196 + $0x150] sm:$0xff]
      %v233 = vld [vmem:[%s196 + $0x158] sm:$0xff]
      %v234 = vld [vmem:[%s196 + $0x168] sm:$0xff]
      %v235 = vld [vmem:[%s196 + $0x170] sm:$0xff]
      %v236 = vld [vmem:[%s196 + $0x180] sm:$0xff]
      %v237 = vld [vmem:[%s196 + $0x188] sm:$0xff]
      %v238 = vld [vmem:[%s196 + $0x198] sm:$0xff]
      %v239 = vld [vmem:[%s196 + $0x1a0] sm:$0xff]
      %v240 = vld [vmem:[%s196 + $0x1b0] sm:$0xff]
      %v241 = vld [vmem:[%s196 + $0x1b8] sm:$0xff]
      %v242 = vld [vmem:[%s196 + $0x1c8] sm:$0xff]
      %v243 = vld [vmem:[%s196 + $0x1d0] sm:$0xff]
      %v244 = vld [vmem:[%s196 + $0x1e0] sm:$0xff]
      %v245 = vld [vmem:[%s196 + $0x1e8] sm:$0xff]
      %v246 = vld [vmem:[%s196 + $0x1f8] sm:$0xff]
      %v247 = vld [vmem:[%s196 + $0x200] sm:$0xff]
      %v248 = vld [vmem:[%s196 + $0x210] sm:$0xff]
      %v249 = vld [vmem:[%s196 + $0x218] sm:$0xff]
      %v250 = vld [vmem:[%s196 + $0x228] sm:$0xff]
      %v251 = vld [vmem:[%s196 + $0x230] sm:$0xff]
      %v252 = vld [vmem:[%s196 + $0x1] sm:$0xff]
      %v253 = vld [vmem:[%s196 + $0x9] sm:$0xff]
      %v254 = vld [vmem:[%s196 + $0x19] sm:$0xff]
      %v255 = vld [vmem:[%s196 + $0x21] sm:$0xff]
      %v256 = vld [vmem:[%s196 + $0x31] sm:$0xff]
      %v257 = vld [vmem:[%s196 + $0x39] sm:$0xff]
      %v258 = vld [vmem:[%s196 + $0x49] sm:$0xff]
      %v259 = vld [vmem:[%s196 + $0x51] sm:$0xff]
      %v260 = vld [vmem:[%s196 + $0x61] sm:$0xff]
      %v261 = vld [vmem:[%s196 + $0x69] sm:$0xff]
      %v262 = vld [vmem:[%s196 + $0x79] sm:$0xff]
      %v263 = vld [vmem:[%s196 + $0x81] sm:$0xff]
      %v264 = vld [vmem:[%s196 + $0x91] sm:$0xff]
      %v265 = vld [vmem:[%s196 + $0x99] sm:$0xff]
      %v266 = vld [vmem:[%s196 + $0xa9] sm:$0xff]
      %v267 = vld [vmem:[%s196 + $0xb1] sm:$0xff]
      %v268 = vld [vmem:[%s196 + $0xc1] sm:$0xff]
      %v269 = vld [vmem:[%s196 + $0xc9] sm:$0xff]
      %v270 = vld [vmem:[%s196 + $0xd9] sm:$0xff]
      %v271 = vld [vmem:[%s196 + $0xe1] sm:$0xff]
      %v272 = vld [vmem:[%s196 + $0xf1] sm:$0xff]
      %v273 = vld [vmem:[%s196 + $0xf9] sm:$0xff]
      %v274 = vld [vmem:[%s196 + $0x109] sm:$0xff]
      %v275 = vld [vmem:[%s196 + $0x111] sm:$0xff]
      %v276 = vld [vmem:[%s196 + $0x121] sm:$0xff]
      %v277 = vld [vmem:[%s196 + $0x129] sm:$0xff]
      %v278 = vld [vmem:[%s196 + $0x139] sm:$0xff]
      %v279 = vld [vmem:[%s196 + $0x141] sm:$0xff]
      %v280 = vld [vmem:[%s196 + $0x151] sm:$0xff]
      %v281 = vld [vmem:[%s196 + $0x159] sm:$0xff]
      %v282 = vld [vmem:[%s196 + $0x169] sm:$0xff]
      %v283 = vld [vmem:[%s196 + $0x171] sm:$0xff]
      %v284 = vld [vmem:[%s196 + $0x181] sm:$0xff]
      %v285 = vld [vmem:[%s196 + $0x189] sm:$0xff]
      %v286 = vld [vmem:[%s196 + $0x199] sm:$0xff]
      %v287 = vld [vmem:[%s196 + $0x1a1] sm:$0xff]
      %v288 = vld [vmem:[%s196 + $0x1b1] sm:$0xff]
      %v289 = vld [vmem:[%s196 + $0x1b9] sm:$0xff]
      %v290 = vld [vmem:[%s196 + $0x1c9] sm:$0xff]
      %v291 = vld [vmem:[%s196 + $0x1d1] sm:$0xff]
      %v292 = vld [vmem:[%s196 + $0x1e1] sm:$0xff]
      %v293 = vld [vmem:[%s196 + $0x1e9] sm:$0xff]
      %v294 = vld [vmem:[%s196 + $0x1f9] sm:$0xff]
      %v295 = vld [vmem:[%s196 + $0x201] sm:$0xff]
      %v296 = vld [vmem:[%s196 + $0x211] sm:$0xff]
      %v297 = vld [vmem:[%s196 + $0x219] sm:$0xff]
      %v298 = vld [vmem:[%s196 + $0x229] sm:$0xff]
      %v299 = vld [vmem:[%s196 + $0x231] sm:$0xff]
      %v300 = vld [vmem:[%s196 + $0x2] sm:$0xff]
      %v301 = vld [vmem:[%s196 + $0xa] sm:$0xff]
      %v302 = vld [vmem:[%s196 + $0x1a] sm:$0xff]
      %v303 = vld [vmem:[%s196 + $0x22] sm:$0xff]
      %v304 = vld [vmem:[%s196 + $0x32] sm:$0xff]
      %v305 = vld [vmem:[%s196 + $0x3a] sm:$0xff]
      %v306 = vld [vmem:[%s196 + $0x4a] sm:$0xff]
      %v307 = vld [vmem:[%s196 + $0x52] sm:$0xff]
      %v308 = vld [vmem:[%s196 + $0x62] sm:$0xff]
      %v309 = vld [vmem:[%s196 + $0x6a] sm:$0xff]
      %v310 = vld [vmem:[%s196 + $0x7a] sm:$0xff]
      %v311 = vld [vmem:[%s196 + $0x82] sm:$0xff]
      %v312 = vld [vmem:[%s196 + $0x92] sm:$0xff]
      %v313 = vld [vmem:[%s196 + $0x9a] sm:$0xff]
      %v314 = vld [vmem:[%s196 + $0xaa] sm:$0xff]
      %v315 = vld [vmem:[%s196 + $0xb2] sm:$0xff]
      %v316 = vld [vmem:[%s196 + $0xc2] sm:$0xff]
      %v317 = vld [vmem:[%s196 + $0xca] sm:$0xff]
      %v318 = vld [vmem:[%s196 + $0xda] sm:$0xff]
      %v319 = vld [vmem:[%s196 + $0xe2] sm:$0xff]
      %v320 = vld [vmem:[%s196 + $0xf2] sm:$0xff]
      %v321 = vld [vmem:[%s196 + $0xfa] sm:$0xff]
      %v322 = vld [vmem:[%s196 + $0x10a] sm:$0xff]
      %v323 = vld [vmem:[%s196 + $0x112] sm:$0xff]
      %v324 = vld [vmem:[%s196 + $0x122] sm:$0xff]
      %v325 = vld [vmem:[%s196 + $0x12a] sm:$0xff]
      %v326 = vld [vmem:[%s196 + $0x13a] sm:$0xff]
      %v327 = vld [vmem:[%s196 + $0x142] sm:$0xff]
      %v328 = vld [vmem:[%s196 + $0x152] sm:$0xff]
      %v329 = vld [vmem:[%s196 + $0x15a] sm:$0xff]
      %v330 = vld [vmem:[%s196 + $0x16a] sm:$0xff]
      %v331 = vld [vmem:[%s196 + $0x172] sm:$0xff]
      %v332 = vld [vmem:[%s196 + $0x182] sm:$0xff]
      %v333 = vld [vmem:[%s196 + $0x18a] sm:$0xff]
      %v334 = vld [vmem:[%s196 + $0x19a] sm:$0xff]
      %v335 = vld [vmem:[%s196 + $0x1a2] sm:$0xff]
      %v336 = vld [vmem:[%s196 + $0x1b2] sm:$0xff]
      %v337 = vld [vmem:[%s196 + $0x1ba] sm:$0xff]
      %v338 = vld [vmem:[%s196 + $0x1ca] sm:$0xff]
      %v339 = vld [vmem:[%s196 + $0x1d2] sm:$0xff]
      %v340 = vld [vmem:[%s196 + $0x1e2] sm:$0xff]
      %v341 = vld [vmem:[%s196 + $0x1ea] sm:$0xff]
      %v342 = vld [vmem:[%s196 + $0x1fa] sm:$0xff]
      %v343 = vld [vmem:[%s196 + $0x202] sm:$0xff]
      %v344 = vld [vmem:[%s196 + $0x212] sm:$0xff]
      %v345 = vld [vmem:[%s196 + $0x21a] sm:$0xff]
      %v346 = vld [vmem:[%s196 + $0x22a] sm:$0xff]
      %v347 = vld [vmem:[%s196 + $0x232] sm:$0xff]
      %vm348 = vcmask 588800
      %v349 = vsel %vm348, %v204, 0.0
      %v350 = vsel %vm348, %v205, 0.0
      %v351 = vsel %vm348, %v206, 0.0
      %v352 = vsel %vm348, %v207, 0.0
      %v353 = vsel %vm348, %v208, 0.0
      %v354 = vsel %vm348, %v209, 0.0
      %v355 = vsel %vm348, %v210, 0.0
      %v356 = vsel %vm348, %v211, 0.0
      %v357 = vsel %vm348, %v212, 0.0
      %v358 = vsel %vm348, %v213, 0.0
      %v359 = vsel %vm348, %v214, 0.0
      %v360 = vsel %vm348, %v215, 0.0
      %v361 = vsel %vm348, %v216, 0.0
      %v362 = vsel %vm348, %v217, 0.0
      %v363 = vsel %vm348, %v218, 0.0
      %v364 = vsel %vm348, %v219, 0.0
      %v365 = vsel %vm348, %v220, 0.0
      %v366 = vsel %vm348, %v221, 0.0
      %v367 = vsel %vm348, %v222, 0.0
      %v368 = vsel %vm348, %v223, 0.0
      %v369 = vsel %vm348, %v224, 0.0
      %v370 = vsel %vm348, %v225, 0.0
      %v371 = vsel %vm348, %v226, 0.0
      %v372 = vsel %vm348, %v227, 0.0
      %v373 = vsel %vm348, %v228, 0.0
      %v374 = vsel %vm348, %v229, 0.0
      %v375 = vsel %vm348, %v230, 0.0
      %v376 = vsel %vm348, %v231, 0.0
      %v377 = vsel %vm348, %v232, 0.0
      %v378 = vsel %vm348, %v233, 0.0
      %v379 = vsel %vm348, %v234, 0.0
      %v380 = vsel %vm348, %v235, 0.0
      %v381 = vsel %vm348, %v236, 0.0
      %v382 = vsel %vm348, %v237, 0.0
      %v383 = vsel %vm348, %v238, 0.0
      %v384 = vsel %vm348, %v239, 0.0
      %v385 = vsel %vm348, %v240, 0.0
      %v386 = vsel %vm348, %v241, 0.0
      %v387 = vsel %vm348, %v242, 0.0
      %v388 = vsel %vm348, %v243, 0.0
      %v389 = vsel %vm348, %v244, 0.0
      %v390 = vsel %vm348, %v245, 0.0
      %v391 = vsel %vm348, %v246, 0.0
      %v392 = vsel %vm348, %v247, 0.0
      %v393 = vsel %vm348, %v248, 0.0
      %v394 = vsel %vm348, %v249, 0.0
      %v395 = vsel %vm348, %v250, 0.0
      %v396 = vsel %vm348, %v251, 0.0
      %v397 = vsel %vm348, %v252, 0.0
      %v398 = vsel %vm348, %v253, 0.0
      %v399 = vsel %vm348, %v254, 0.0
      %v400 = vsel %vm348, %v255, 0.0
      %v401 = vsel %vm348, %v256, 0.0
      %v402 = vsel %vm348, %v257, 0.0
      %v403 = vsel %vm348, %v258, 0.0
      %v404 = vsel %vm348, %v259, 0.0
      %v405 = vsel %vm348, %v260, 0.0
      %v406 = vsel %vm348, %v261, 0.0
      %v407 = vsel %vm348, %v262, 0.0
      %v408 = vsel %vm348, %v263, 0.0
      %v409 = vsel %vm348, %v264, 0.0
      %v410 = vsel %vm348, %v265, 0.0
      %v411 = vsel %vm348, %v266, 0.0
      %v412 = vsel %vm348, %v267, 0.0
      %v413 = vsel %vm348, %v268, 0.0
      %v414 = vsel %vm348, %v269, 0.0
      %v415 = vsel %vm348, %v270, 0.0
      %v416 = vsel %vm348, %v271, 0.0
      %v417 = vsel %vm348, %v272, 0.0
      %v418 = vsel %vm348, %v273, 0.0
      %v419 = vsel %vm348, %v274, 0.0
      %v420 = vsel %vm348, %v275, 0.0
      %v421 = vsel %vm348, %v276, 0.0
      %v422 = vsel %vm348, %v277, 0.0
      %v423 = vsel %vm348, %v278, 0.0
      %v424 = vsel %vm348, %v279, 0.0
      %v425 = vsel %vm348, %v280, 0.0
      %v426 = vsel %vm348, %v281, 0.0
      %v427 = vsel %vm348, %v282, 0.0
      %v428 = vsel %vm348, %v283, 0.0
      %v429 = vsel %vm348, %v284, 0.0
      %v430 = vsel %vm348, %v285, 0.0
      %v431 = vsel %vm348, %v286, 0.0
      %v432 = vsel %vm348, %v287, 0.0
      %v433 = vsel %vm348, %v288, 0.0
      %v434 = vsel %vm348, %v289, 0.0
      %v435 = vsel %vm348, %v290, 0.0
      %v436 = vsel %vm348, %v291, 0.0
      %v437 = vsel %vm348, %v292, 0.0
      %v438 = vsel %vm348, %v293, 0.0
      %v439 = vsel %vm348, %v294, 0.0
      %v440 = vsel %vm348, %v295, 0.0
      %v441 = vsel %vm348, %v296, 0.0
      %v442 = vsel %vm348, %v297, 0.0
      %v443 = vsel %vm348, %v298, 0.0
      %v444 = vsel %vm348, %v299, 0.0
      %v445 = vsel %vm348, %v300, 0.0
      %v446 = vsel %vm348, %v301, 0.0
      %v447 = vsel %vm348, %v302, 0.0
      %v448 = vsel %vm348, %v303, 0.0
      %v449 = vsel %vm348, %v304, 0.0
      %v450 = vsel %vm348, %v305, 0.0
      %v451 = vsel %vm348, %v306, 0.0
      %v452 = vsel %vm348, %v307, 0.0
      %v453 = vsel %vm348, %v308, 0.0
      %v454 = vsel %vm348, %v309, 0.0
      %v455 = vsel %vm348, %v310, 0.0
      %v456 = vsel %vm348, %v311, 0.0
      %v457 = vsel %vm348, %v312, 0.0
      %v458 = vsel %vm348, %v313, 0.0
      %v459 = vsel %vm348, %v314, 0.0
      %v460 = vsel %vm348, %v315, 0.0
      %v461 = vsel %vm348, %v316, 0.0
      %v462 = vsel %vm348, %v317, 0.0
      %v463 = vsel %vm348, %v318, 0.0
      %v464 = vsel %vm348, %v319, 0.0
      %v465 = vsel %vm348, %v320, 0.0
      %v466 = vsel %vm348, %v321, 0.0
      %v467 = vsel %vm348, %v322, 0.0
      %v468 = vsel %vm348, %v323, 0.0
      %v469 = vsel %vm348, %v324, 0.0
      %v470 = vsel %vm348, %v325, 0.0
      %v471 = vsel %vm348, %v326, 0.0
      %v472 = vsel %vm348, %v327, 0.0
      %v473 = vsel %vm348, %v328, 0.0
      %v474 = vsel %vm348, %v329, 0.0
      %v475 = vsel %vm348, %v330, 0.0
      %v476 = vsel %vm348, %v331, 0.0
      %v477 = vsel %vm348, %v332, 0.0
      %v478 = vsel %vm348, %v333, 0.0
      %v479 = vsel %vm348, %v334, 0.0
      %v480 = vsel %vm348, %v335, 0.0
      %v481 = vsel %vm348, %v336, 0.0
      %v482 = vsel %vm348, %v337, 0.0
      %v483 = vsel %vm348, %v338, 0.0
      %v484 = vsel %vm348, %v339, 0.0
      %v485 = vsel %vm348, %v340, 0.0
      %v486 = vsel %vm348, %v341, 0.0
      %v487 = vsel %vm348, %v342, 0.0
      %v488 = vsel %vm348, %v343, 0.0
      %v489 = vsel %vm348, %v344, 0.0
      %v490 = vsel %vm348, %v345, 0.0
      %v491 = vsel %vm348, %v346, 0.0
      %v492 = vsel %vm348, %v347, 0.0
      %v493 = vld [vmem:[%s1] sm:$0xff]
      %v494 = vld [vmem:[%s1 + $0x8] sm:$0xff]
      %v495 = vld [vmem:[%s1 + $0x10] sm:$0xff]
      %v496 = vld [vmem:[%s1 + $0x18] sm:$0xff]
      %v497 = vld [vmem:[%s1 + $0x20] sm:$0xff]
      %v498 = vld [vmem:[%s1 + $0x28] sm:$0xff]
      %v499 = vld [vmem:[%s1 + $0x30] sm:$0xff]
      %v500 = vld [vmem:[%s1 + $0x38] sm:$0xff]
      %v501 = vld [vmem:[%s1 + $0x40] sm:$0xff]
      %v502 = vld [vmem:[%s1 + $0x48] sm:$0xff]
      %v503 = vld [vmem:[%s1 + $0x50] sm:$0xff]
      %v504 = vld [vmem:[%s1 + $0x58] sm:$0xff]
      %v505 = vld [vmem:[%s1 + $0x60] sm:$0xff]
      %v506 = vld [vmem:[%s1 + $0x68] sm:$0xff]
      %v507 = vld [vmem:[%s1 + $0x70] sm:$0xff]
      %v508 = vld [vmem:[%s1 + $0x78] sm:$0xff]
      %v509 = vld [vmem:[%s1 + $0x80] sm:$0xff]
      %v510 = vld [vmem:[%s1 + $0x88] sm:$0xff]
      %v511 = vld [vmem:[%s1 + $0x90] sm:$0xff]
      %v512 = vld [vmem:[%s1 + $0x98] sm:$0xff]
      %v513 = vld [vmem:[%s1 + $0xa0] sm:$0xff]
      %v514 = vld [vmem:[%s1 + $0xa8] sm:$0xff]
      %v515 = vld [vmem:[%s1 + $0xb0] sm:$0xff]
      %v516 = vld [vmem:[%s1 + $0xb8] sm:$0xff]
      %v517 = vld [vmem:[%s1 + $0xc0] sm:$0xff]
      %v518 = vld [vmem:[%s1 + $0xc8] sm:$0xff]
      %v519 = vld [vmem:[%s1 + $0xd0] sm:$0xff]
      %v520 = vld [vmem:[%s1 + $0xd8] sm:$0xff]
      %v521 = vld [vmem:[%s1 + $0xe0] sm:$0xff]
      %v522 = vld [vmem:[%s1 + $0xe8] sm:$0xff]
      %v523 = vld [vmem:[%s1 + $0xf0] sm:$0xff]
      %v524 = vld [vmem:[%s1 + $0xf8] sm:$0xff]
      %v525 = vld [vmem:[%s1 + $0x100] sm:$0xff]
      %v526 = vld [vmem:[%s1 + $0x108] sm:$0xff]
      %v527 = vld [vmem:[%s1 + $0x110] sm:$0xff]
      %v528 = vld [vmem:[%s1 + $0x118] sm:$0xff]
      %v529 = vld [vmem:[%s1 + $0x120] sm:$0xff]
      %v530 = vld [vmem:[%s1 + $0x128] sm:$0xff]
      %v531 = vld [vmem:[%s1 + $0x130] sm:$0xff]
      %v532 = vld [vmem:[%s1 + $0x138] sm:$0xff]
      %v533 = vld [vmem:[%s1 + $0x140] sm:$0xff]
      %v534 = vld [vmem:[%s1 + $0x148] sm:$0xff]
      %v535 = vld [vmem:[%s1 + $0x150] sm:$0xff]
      %v536 = vld [vmem:[%s1 + $0x158] sm:$0xff]
      %v537 = vld [vmem:[%s1 + $0x160] sm:$0xff]
      %v538 = vld [vmem:[%s1 + $0x168] sm:$0xff]
      %v539 = vld [vmem:[%s1 + $0x170] sm:$0xff]
      %v540 = vld [vmem:[%s1 + $0x178] sm:$0xff]
      %v541 = vld [vmem:[%s1 + $0x180] sm:$0xff]
      %v542 = vld [vmem:[%s1 + $0x188] sm:$0xff]
      %v543 = vld [vmem:[%s1 + $0x190] sm:$0xff]
      %v544 = vld [vmem:[%s1 + $0x198] sm:$0xff]
      %v545 = vld [vmem:[%s1 + $0x1a0] sm:$0xff]
      %v546 = vld [vmem:[%s1 + $0x1a8] sm:$0xff]
      %v547 = vld [vmem:[%s1 + $0x1b0] sm:$0xff]
      %v548 = vld [vmem:[%s1 + $0x1b8] sm:$0xff]
      %v549 = vld [vmem:[%s1 + $0x1c0] sm:$0xff]
      %v550 = vld [vmem:[%s1 + $0x1c8] sm:$0xff]
      %v551 = vld [vmem:[%s1 + $0x1d0] sm:$0xff]
      %v552 = vld [vmem:[%s1 + $0x1d8] sm:$0xff]
      %v553 = vld [vmem:[%s1 + $0x1e0] sm:$0xff]
      %v554 = vld [vmem:[%s1 + $0x1e8] sm:$0xff]
      %v555 = vld [vmem:[%s1 + $0x1f0] sm:$0xff]
      %v556 = vld [vmem:[%s1 + $0x1f8] sm:$0xff]
      %v557 = vld [vmem:[%s1 + $0x200] sm:$0xff]
      %v558 = vld [vmem:[%s1 + $0x208] sm:$0xff]
      %v559 = vld [vmem:[%s1 + $0x210] sm:$0xff]
      %v560 = vld [vmem:[%s1 + $0x218] sm:$0xff]
      %v561 = vld [vmem:[%s1 + $0x220] sm:$0xff]
      %v562 = vld [vmem:[%s1 + $0x228] sm:$0xff]
      %v563 = vld [vmem:[%s1 + $0x230] sm:$0xff]
      %v564 = vld [vmem:[%s1 + $0x238] sm:$0xff]
      %v565 = vld [vmem:[%s1 + $0x240] sm:$0xff]
      %v566 = vld [vmem:[%s1 + $0x248] sm:$0xff]
      %v567 = vld [vmem:[%s1 + $0x250] sm:$0xff]
      %v568 = vld [vmem:[%s1 + $0x258] sm:$0xff]
      %v569 = vld [vmem:[%s1 + $0x260] sm:$0xff]
      %v570 = vld [vmem:[%s1 + $0x268] sm:$0xff]
      %v571 = vld [vmem:[%s1 + $0x270] sm:$0xff]
      %v572 = vld [vmem:[%s1 + $0x278] sm:$0xff]
      %v573 = vld [vmem:[%s1 + $0x280] sm:$0xff]
      %v574 = vld [vmem:[%s1 + $0x288] sm:$0xff]
      %v575 = vld [vmem:[%s1 + $0x290] sm:$0xff]
      %v576 = vld [vmem:[%s1 + $0x298] sm:$0xff]
      %v577 = vld [vmem:[%s1 + $0x2a0] sm:$0xff]
      %v578 = vld [vmem:[%s1 + $0x2a8] sm:$0xff]
      %v579 = vld [vmem:[%s1 + $0x2b0] sm:$0xff]
      %v580 = vld [vmem:[%s1 + $0x2b8] sm:$0xff]
      %v581 = vld [vmem:[%s1 + $0x2c0] sm:$0xff]
      %v582 = vld [vmem:[%s1 + $0x2c8] sm:$0xff]
      %v583 = vld [vmem:[%s1 + $0x2d0] sm:$0xff]
      %v584 = vld [vmem:[%s1 + $0x2d8] sm:$0xff]
      %v585 = vld [vmem:[%s1 + $0x2e0] sm:$0xff]
      %v586 = vld [vmem:[%s1 + $0x2e8] sm:$0xff]
      %v587 = vld [vmem:[%s1 + $0x2f0] sm:$0xff]
      %v588 = vld [vmem:[%s1 + $0x2f8] sm:$0xff]
      %v589 = vld [vmem:[%s1 + $0x300] sm:$0xff]
      %v590 = vld [vmem:[%s1 + $0x308] sm:$0xff]
      %v591 = vld [vmem:[%s1 + $0x310] sm:$0xff]
      %v592 = vld [vmem:[%s1 + $0x318] sm:$0xff]
      %v593 = vld [vmem:[%s1 + $0x320] sm:$0xff]
      %v594 = vld [vmem:[%s1 + $0x328] sm:$0xff]
      %v595 = vld [vmem:[%s1 + $0x330] sm:$0xff]
      %v596 = vld [vmem:[%s1 + $0x338] sm:$0xff]
      %v597 = vld [vmem:[%s1 + $0x340] sm:$0xff]
      %v598 = vld [vmem:[%s1 + $0x348] sm:$0xff]
      %v599 = vld [vmem:[%s1 + $0x350] sm:$0xff]
      %v600 = vld [vmem:[%s1 + $0x358] sm:$0xff]
      %v601 = vld [vmem:[%s1 + $0x360] sm:$0xff]
      %v602 = vld [vmem:[%s1 + $0x368] sm:$0xff]
      %v603 = vld [vmem:[%s1 + $0x370] sm:$0xff]
      %v604 = vld [vmem:[%s1 + $0x378] sm:$0xff]
      %v605 = vld [vmem:[%s1 + $0x380] sm:$0xff]
      %v606 = vld [vmem:[%s1 + $0x388] sm:$0xff]
      %v607 = vld [vmem:[%s1 + $0x390] sm:$0xff]
      %v608 = vld [vmem:[%s1 + $0x398] sm:$0xff]
      %v609 = vld [vmem:[%s1 + $0x3a0] sm:$0xff]
      %v610 = vld [vmem:[%s1 + $0x3a8] sm:$0xff]
      %v611 = vld [vmem:[%s1 + $0x3b0] sm:$0xff]
      %v612 = vld [vmem:[%s1 + $0x3b8] sm:$0xff]
      %v613 = vld [vmem:[%s1 + $0x3c0] sm:$0xff]
      %v614 = vld [vmem:[%s1 + $0x3c8] sm:$0xff]
      %v615 = vld [vmem:[%s1 + $0x3d0] sm:$0xff]
      %v616 = vld [vmem:[%s1 + $0x3d8] sm:$0xff]
      %v617 = vld [vmem:[%s1 + $0x3e0] sm:$0xff]
      %v618 = vld [vmem:[%s1 + $0x3e8] sm:$0xff]
      %v619 = vld [vmem:[%s1 + $0x3f0] sm:$0xff]
      %v620 = vld [vmem:[%s1 + $0x3f8] sm:$0xff]
      %v621 = vld [vmem:[%s1 + $0x400] sm:$0xff]
      %v622 = vld [vmem:[%s1 + $0x408] sm:$0xff]
      %v623 = vld [vmem:[%s1 + $0x410] sm:$0xff]
      %v624 = vld [vmem:[%s1 + $0x418] sm:$0xff]
      %v625 = vld [vmem:[%s1 + $0x420] sm:$0xff]
      %v626 = vld [vmem:[%s1 + $0x428] sm:$0xff]
      %v627 = vld [vmem:[%s1 + $0x430] sm:$0xff]
      %v628 = vld [vmem:[%s1 + $0x438] sm:$0xff]
      %v629 = vld [vmem:[%s1 + $0x440] sm:$0xff]
      %v630 = vld [vmem:[%s1 + $0x448] sm:$0xff]
      %v631 = vld [vmem:[%s1 + $0x450] sm:$0xff]
      %v632 = vld [vmem:[%s1 + $0x458] sm:$0xff]
      %v633 = vld [vmem:[%s1 + $0x460] sm:$0xff]
      %v634 = vld [vmem:[%s1 + $0x468] sm:$0xff]
      %v635 = vld [vmem:[%s1 + $0x470] sm:$0xff]
      %v636 = vld [vmem:[%s1 + $0x478] sm:$0xff]
      %v637 = vld [vmem:[%s1 + $0x480] sm:$0xff]
      %v638 = vld [vmem:[%s1 + $0x488] sm:$0xff]
      %v639 = vld [vmem:[%s1 + $0x490] sm:$0xff]
      %v640 = vld [vmem:[%s1 + $0x498] sm:$0xff]
      %v641 = vld [vmem:[%s1 + $0x4a0] sm:$0xff]
      %v642 = vld [vmem:[%s1 + $0x4a8] sm:$0xff]
      %v643 = vld [vmem:[%s1 + $0x4b0] sm:$0xff]
      %v644 = vld [vmem:[%s1 + $0x4b8] sm:$0xff]
      %v645 = vld [vmem:[%s1 + $0x4c0] sm:$0xff]
      %v646 = vld [vmem:[%s1 + $0x4c8] sm:$0xff]
      %v647 = vld [vmem:[%s1 + $0x4d0] sm:$0xff]
      %v648 = vld [vmem:[%s1 + $0x4d8] sm:$0xff]
      %v649 = vld [vmem:[%s1 + $0x4e0] sm:$0xff]
      %v650 = vld [vmem:[%s1 + $0x4e8] sm:$0xff]
      %v651 = vld [vmem:[%s1 + $0x4f0] sm:$0xff]
      %v652 = vld [vmem:[%s1 + $0x4f8] sm:$0xff]
      %v653 = vld [vmem:[%s1 + $0x500] sm:$0xff]
      %v654 = vld [vmem:[%s1 + $0x508] sm:$0xff]
      %v655 = vld [vmem:[%s1 + $0x510] sm:$0xff]
      %v656 = vld [vmem:[%s1 + $0x518] sm:$0xff]
      %v657 = vld [vmem:[%s1 + $0x520] sm:$0xff]
      %v658 = vld [vmem:[%s1 + $0x528] sm:$0xff]
      %v659 = vld [vmem:[%s1 + $0x530] sm:$0xff]
      %v660 = vld [vmem:[%s1 + $0x538] sm:$0xff]
      %v661 = vld [vmem:[%s1 + $0x540] sm:$0xff]
      %v662 = vld [vmem:[%s1 + $0x548] sm:$0xff]
      %v663 = vld [vmem:[%s1 + $0x550] sm:$0xff]
      %v664 = vld [vmem:[%s1 + $0x558] sm:$0xff]
      %v665 = vld [vmem:[%s1 + $0x560] sm:$0xff]
      %v666 = vld [vmem:[%s1 + $0x568] sm:$0xff]
      %v667 = vld [vmem:[%s1 + $0x570] sm:$0xff]
      %v668 = vld [vmem:[%s1 + $0x578] sm:$0xff]
      %v669 = vld [vmem:[%s1 + $0x580] sm:$0xff]
      %v670 = vld [vmem:[%s1 + $0x588] sm:$0xff]
      %v671 = vld [vmem:[%s1 + $0x590] sm:$0xff]
      %v672 = vld [vmem:[%s1 + $0x598] sm:$0xff]
      %v673 = vld [vmem:[%s1 + $0x5a0] sm:$0xff]
      %v674 = vld [vmem:[%s1 + $0x5a8] sm:$0xff]
      %v675 = vld [vmem:[%s1 + $0x5b0] sm:$0xff]
      %v676 = vld [vmem:[%s1 + $0x5b8] sm:$0xff]
      %v677 = vld [vmem:[%s1 + $0x5c0] sm:$0xff]
      %v678 = vld [vmem:[%s1 + $0x5c8] sm:$0xff]
      %v679 = vld [vmem:[%s1 + $0x5d0] sm:$0xff]
      %v680 = vld [vmem:[%s1 + $0x5d8] sm:$0xff]
      %v681 = vld [vmem:[%s1 + $0x5e0] sm:$0xff]
      %v682 = vld [vmem:[%s1 + $0x5e8] sm:$0xff]
      %v683 = vld [vmem:[%s1 + $0x5f0] sm:$0xff]
      %v684 = vld [vmem:[%s1 + $0x5f8] sm:$0xff]
      %v685 = vld [vmem:[%s2] sm:$0xf]
      %v687 = vlaneseq
      %v688 = vshrl.u32 %v687, 7
      %v689 = vsub.s32 0, %v688
      %v690 = vrot.slane %v685, %v689
      %v691 = vlaneseq
      %v692 = vshrl.u32 %v691, 7
      %v693 = vsub.s32 1, %v692
      %v694 = vrot.slane %v685, %v693
      %v695 = vlaneseq
      %v696 = vshrl.u32 %v695, 7
      %v697 = vsub.s32 2, %v696
      %v698 = vrot.slane %v685, %v697
      %v699 = vlaneseq
      %v700 = vshrl.u32 %v699, 7
      %v701 = vsub.s32 3, %v700
      %v702 = vrot.slane %v685, %v701
      %707 = vmatprep.subr.mxu0 %v494
      %708 = vmatpush1.msra.mxu0 %v493
      %709 = vmatprep.subr.mxu0 %v498
      %710 = vmatpush1.msra.mxu0 %v497
      %711 = vmatprep.subr.mxu0 %v502
      %712 = vmatpush1.msra.mxu0 %v501
      %713 = vmatprep.subr.mxu0 %v506
      %714 = vmatpush1.msra.mxu0 %v505
      %715 = vmatprep.subr.mxu0 %v510
      %716 = vmatpush1.msra.mxu0 %v509
      %717 = vmatprep.subr.mxu0 %v514
      %718 = vmatpush1.msra.mxu0 %v513
      %719 = vmatprep.subr.mxu0 %v518
      %720 = vmatpush1.msra.mxu0 %v517
      %721 = vmatprep.subr.mxu0 %v522
      %722 = vmatpush1.msra.mxu0 %v521
      %723 = vmatprep.subr.mxu0 %v526
      %724 = vmatpush1.msra.mxu0 %v525
      %725 = vmatprep.subr.mxu0 %v530
      %726 = vmatpush1.msra.mxu0 %v529
      %727 = vmatprep.subr.mxu0 %v534
      %728 = vmatpush1.msra.mxu0 %v533
      %729 = vmatprep.subr.mxu0 %v538
      %730 = vmatpush1.msra.mxu0 %v537
      %731 = vmatprep.subr.mxu0 %v542
      %732 = vmatpush1.msra.mxu0 %v541
      %733 = vmatprep.subr.mxu0 %v546
      %734 = vmatpush1.msra.mxu0 %v545
      %735 = vmatprep.subr.mxu0 %v550
      %736 = vmatpush1.msra.mxu0 %v549
      %737 = vmatprep.subr.mxu0 %v554
      %738 = vmatpush1.msra.mxu0 %v553
      %739 = vmatprep.subr.mxu0 %v558
      %740 = vmatpush1.msra.mxu0 %v557
      %741 = vmatprep.subr.mxu0 %v562
      %742 = vmatpush1.msra.mxu0 %v561
      %743 = vmatprep.subr.mxu0 %v566
      %744 = vmatpush1.msra.mxu0 %v565
      %745 = vmatprep.subr.mxu0 %v570
      %746 = vmatpush1.msra.mxu0 %v569
      %747 = vmatprep.subr.mxu0 %v574
      %748 = vmatpush1.msra.mxu0 %v573
      %749 = vmatprep.subr.mxu0 %v578
      %750 = vmatpush1.msra.mxu0 %v577
      %751 = vmatprep.subr.mxu0 %v582
      %752 = vmatpush1.msra.mxu0 %v581
      %753 = vmatprep.subr.mxu0 %v586
      %754 = vmatpush1.msra.mxu0 %v585
      %755 = vmatprep.subr.mxu0 %v590
      %756 = vmatpush1.msra.mxu0 %v589
      %757 = vmatprep.subr.mxu0 %v594
      %758 = vmatpush1.msra.mxu0 %v593
      %759 = vmatprep.subr.mxu0 %v598
      %760 = vmatpush1.msra.mxu0 %v597
      %761 = vmatprep.subr.mxu0 %v602
      %762 = vmatpush1.msra.mxu0 %v601
      %763 = vmatprep.subr.mxu0 %v606
      %764 = vmatpush1.msra.mxu0 %v605
      %765 = vmatprep.subr.mxu0 %v610
      %766 = vmatpush1.msra.mxu0 %v609
      %767 = vmatprep.subr.mxu0 %v614
      %768 = vmatpush1.msra.mxu0 %v613
      %769 = vmatprep.subr.mxu0 %v618
      %770 = vmatpush1.msra.mxu0 %v617
      %771 = vmatprep.mubr.f32.mxu0 %v397
      %772 = vmatmul.mubr.f32.gmra.mrb[0].mxu0 %v349
      %v773 = vpop.f32.mrb[0].mxu0
      %v774 = vadd.f32 %v690, %v773
      %v775 = vpop.f32.mrb[0].mxu0
      %v776 = vadd.f32 %v694, %v775
      %777 = vmatprep.mubr.f32.mxu0 %v398
      %778 = vmatmul.mubr.f32.gmra.mrb[0].mxu0 %v350
      %v779 = vpop.f32.mrb[0].mxu0
      %v780 = vadd.f32 %v690, %v779
      %v781 = vpop.f32.mrb[0].mxu0
      %v782 = vadd.f32 %v694, %v781
      %783 = vmatprep.mubr.f32.mxu0 %v399
      %784 = vmatmul.mubr.f32.gmra.mrb[0].mxu0 %v351
      %v785 = vpop.f32.mrb[0].mxu0
      %v786 = vadd.f32 %v690, %v785
      %v787 = vpop.f32.mrb[0].mxu0
      %v788 = vadd.f32 %v694, %v787
      %789 = vmatprep.mubr.f32.mxu0 %v400
      %790 = vmatmul.mubr.f32.gmra.mrb[0].mxu0 %v352
      %v791 = vpop.f32.mrb[0].mxu0
      %v792 = vadd.f32 %v690, %v791
      %v793 = vpop.f32.mrb[0].mxu0
      %v794 = vadd.f32 %v694, %v793
      %795 = vmatprep.mubr.f32.mxu0 %v401
      %796 = vmatmul.mubr.f32.gmra.mrb[0].mxu0 %v353
      %v797 = vpop.f32.mrb[0].mxu0
      %v798 = vadd.f32 %v690, %v797
      %v799 = vpop.f32.mrb[0].mxu0
      %v800 = vadd.f32 %v694, %v799
      %801 = vmatprep.mubr.f32.mxu0 %v402
      %802 = vmatmul.mubr.f32.gmra.mrb[0].mxu0 %v354
      %v803 = vpop.f32.mrb[0].mxu0
      %v804 = vadd.f32 %v690, %v803
      %v805 = vpop.f32.mrb[0].mxu0
      %v806 = vadd.f32 %v694, %v805
      %807 = vmatprep.mubr.f32.mxu0 %v403
      %808 = vmatmul.mubr.f32.gmra.mrb[0].mxu0 %v355
      %v809 = vpop.f32.mrb[0].mxu0
      %v810 = vadd.f32 %v690, %v809
      %v811 = vpop.f32.mrb[0].mxu0
      %v812 = vadd.f32 %v694, %v811
      %813 = vmatprep.mubr.f32.mxu0 %v404
      %814 = vmatmul.mubr.f32.gmra.mrb[0].mxu0 %v356
      %v815 = vpop.f32.mrb[0].mxu0
      %v816 = vadd.f32 %v690, %v815
      %v817 = vpop.f32.mrb[0].mxu0
      %v818 = vadd.f32 %v694, %v817
      %819 = vmatprep.mubr.f32.mxu0 %v405
      %820 = vmatmul.mubr.f32.gmra.mrb[0].mxu0 %v357
      %v821 = vpop.f32.mrb[0].mxu0
      %v822 = vadd.f32 %v690, %v821
      %v823 = vpop.f32.mrb[0].mxu0
      %v824 = vadd.f32 %v694, %v823
      %825 = vmatprep.mubr.f32.mxu0 %v406
      %826 = vmatmul.mubr.f32.gmra.mrb[0].mxu0 %v358
      %v827 = vpop.f32.mrb[0].mxu0
      %v828 = vadd.f32 %v690, %v827
      %v829 = vpop.f32.mrb[0].mxu0
      %v830 = vadd.f32 %v694, %v829
      %831 = vmatprep.mubr.f32.mxu0 %v407
      %832 = vmatmul.mubr.f32.gmra.mrb[0].mxu0 %v359
      %v833 = vpop.f32.mrb[0].mxu0
      %v834 = vadd.f32 %v690, %v833
      %v835 = vpop.f32.mrb[0].mxu0
      %v836 = vadd.f32 %v694, %v835
      %837 = vmatprep.mubr.f32.mxu0 %v408
      %838 = vmatmul.mubr.f32.gmra.mrb[0].mxu0 %v360
      %v839 = vpop.f32.mrb[0].mxu0
      %v840 = vadd.f32 %v690, %v839
      %v841 = vpop.f32.mrb[0].mxu0
      %v842 = vadd.f32 %v694, %v841
      %843 = vmatprep.mubr.f32.mxu0 %v409
      %844 = vmatmul.mubr.f32.gmra.mrb[0].mxu0 %v361
      %v845 = vpop.f32.mrb[0].mxu0
      %v846 = vadd.f32 %v690, %v845
      %v847 = vpop.f32.mrb[0].mxu0
      %v848 = vadd.f32 %v694, %v847
      %849 = vmatprep.mubr.f32.mxu0 %v410
      %850 = vmatmul.mubr.f32.gmra.mrb[0].mxu0 %v362
      %v851 = vpop.f32.mrb[0].mxu0
      %v852 = vadd.f32 %v690, %v851
      %v853 = vpop.f32.mrb[0].mxu0
      %v854 = vadd.f32 %v694, %v853
      %855 = vmatprep.mubr.f32.mxu0 %v411
      %856 = vmatmul.mubr.f32.gmra.mrb[0].mxu0 %v363
      %v857 = vpop.f32.mrb[0].mxu0
      %v858 = vadd.f32 %v690, %v857
      %v859 = vpop.f32.mrb[0].mxu0
      %v860 = vadd.f32 %v694, %v859
      %861 = vmatprep.mubr.f32.mxu0 %v412
      %862 = vmatmul.mubr.f32.gmra.mrb[0].mxu0 %v364
      %v863 = vpop.f32.mrb[0].mxu0
      %v864 = vadd.f32 %v690, %v863
      %v865 = vpop.f32.mrb[0].mxu0
      %v866 = vadd.f32 %v694, %v865
      %867 = vmatprep.mubr.f32.mxu0 %v413
      %868 = vmatmul.mubr.f32.gmra.mrb[0].mxu0 %v365
      %v869 = vpop.f32.mrb[0].mxu0
      %v870 = vadd.f32 %v690, %v869
      %v871 = vpop.f32.mrb[0].mxu0
      %v872 = vadd.f32 %v694, %v871
      %873 = vmatprep.mubr.f32.mxu0 %v414
      %874 = vmatmul.mubr.f32.gmra.mrb[0].mxu0 %v366
      %v875 = vpop.f32.mrb[0].mxu0
      %v876 = vadd.f32 %v690, %v875
      %v877 = vpop.f32.mrb[0].mxu0
      %v878 = vadd.f32 %v694, %v877
      %879 = vmatprep.mubr.f32.mxu0 %v415
      %880 = vmatmul.mubr.f32.gmra.mrb[0].mxu0 %v367
      %v881 = vpop.f32.mrb[0].mxu0
      %v882 = vadd.f32 %v690, %v881
      %v883 = vpop.f32.mrb[0].mxu0
      %v884 = vadd.f32 %v694, %v883
      %885 = vmatprep.mubr.f32.mxu0 %v416
      %886 = vmatmul.mubr.f32.gmra.mrb[0].mxu0 %v368
      %v887 = vpop.f32.mrb[0].mxu0
      %v888 = vadd.f32 %v690, %v887
      %v889 = vpop.f32.mrb[0].mxu0
      %v890 = vadd.f32 %v694, %v889
      %891 = vmatprep.mubr.f32.mxu0 %v417
      %892 = vmatmul.mubr.f32.gmra.mrb[0].mxu0 %v369
      %v893 = vpop.f32.mrb[0].mxu0
      %v894 = vadd.f32 %v690, %v893
      %v895 = vpop.f32.mrb[0].mxu0
      %v896 = vadd.f32 %v694, %v895
      %897 = vmatprep.mubr.f32.mxu0 %v418
      %898 = vmatmul.mubr.f32.gmra.mrb[0].mxu0 %v370
      %v899 = vpop.f32.mrb[0].mxu0
      %v900 = vadd.f32 %v690, %v899
      %v901 = vpop.f32.mrb[0].mxu0
      %v902 = vadd.f32 %v694, %v901
      %903 = vmatprep.mubr.f32.mxu0 %v419
      %904 = vmatmul.mubr.f32.gmra.mrb[0].mxu0 %v371
      %v905 = vpop.f32.mrb[0].mxu0
      %v906 = vadd.f32 %v690, %v905
      %v907 = vpop.f32.mrb[0].mxu0
      %v908 = vadd.f32 %v694, %v907
      %909 = vmatprep.mubr.f32.mxu0 %v420
      %910 = vmatmul.mubr.f32.gmra.mrb[0].mxu0 %v372
      %v911 = vpop.f32.mrb[0].mxu0
      %v912 = vadd.f32 %v690, %v911
      %v913 = vpop.f32.mrb[0].mxu0
      %v914 = vadd.f32 %v694, %v913
      %915 = vmatprep.mubr.f32.mxu0 %v421
      %916 = vmatmul.mubr.f32.gmra.mrb[0].mxu0 %v373
      %v917 = vpop.f32.mrb[0].mxu0
      %v918 = vadd.f32 %v690, %v917
      %v919 = vpop.f32.mrb[0].mxu0
      %v920 = vadd.f32 %v694, %v919
      %921 = vmatprep.mubr.f32.mxu0 %v422
      %922 = vmatmul.mubr.f32.gmra.mrb[0].mxu0 %v374
      %v923 = vpop.f32.mrb[0].mxu0
      %v924 = vadd.f32 %v690, %v923
      %v925 = vpop.f32.mrb[0].mxu0
      %v926 = vadd.f32 %v694, %v925
      %927 = vmatprep.mubr.f32.mxu0 %v423
      %928 = vmatmul.mubr.f32.gmra.mrb[0].mxu0 %v375
      %v929 = vpop.f32.mrb[0].mxu0
      %v930 = vadd.f32 %v690, %v929
      %v931 = vpop.f32.mrb[0].mxu0
      %v932 = vadd.f32 %v694, %v931
      %933 = vmatprep.mubr.f32.mxu0 %v424
      %934 = vmatmul.mubr.f32.gmra.mrb[0].mxu0 %v376
      %v935 = vpop.f32.mrb[0].mxu0
      %v936 = vadd.f32 %v690, %v935
      %v937 = vpop.f32.mrb[0].mxu0
      %v938 = vadd.f32 %v694, %v937
      %939 = vmatprep.mubr.f32.mxu0 %v425
      %940 = vmatmul.mubr.f32.gmra.mrb[0].mxu0 %v377
      %v941 = vpop.f32.mrb[0].mxu0
      %v942 = vadd.f32 %v690, %v941
      %v943 = vpop.f32.mrb[0].mxu0
      %v944 = vadd.f32 %v694, %v943
      %945 = vmatprep.mubr.f32.mxu0 %v426
      %946 = vmatmul.mubr.f32.gmra.mrb[0].mxu0 %v378
      %v947 = vpop.f32.mrb[0].mxu0
      %v948 = vadd.f32 %v690, %v947
      %v949 = vpop.f32.mrb[0].mxu0
      %v950 = vadd.f32 %v694, %v949
      %951 = vmatprep.mubr.f32.mxu0 %v427
      %952 = vmatmul.mubr.f32.gmra.mrb[0].mxu0 %v379
      %v953 = vpop.f32.mrb[0].mxu0
      %v954 = vadd.f32 %v690, %v953
      %v955 = vpop.f32.mrb[0].mxu0
      %v956 = vadd.f32 %v694, %v955
      %957 = vmatprep.mubr.f32.mxu0 %v428
      %958 = vmatmul.mubr.f32.gmra.mrb[0].mxu0 %v380
      %v959 = vpop.f32.mrb[0].mxu0
      %v960 = vadd.f32 %v690, %v959
      %v961 = vpop.f32.mrb[0].mxu0
      %v962 = vadd.f32 %v694, %v961
      %963 = vmatprep.mubr.f32.mxu0 %v429
      %964 = vmatmul.mubr.f32.gmra.mrb[0].mxu0 %v381
      %v965 = vpop.f32.mrb[0].mxu0
      %v966 = vadd.f32 %v690, %v965
      %v967 = vpop.f32.mrb[0].mxu0
      %v968 = vadd.f32 %v694, %v967
      %969 = vmatprep.mubr.f32.mxu0 %v430
      %970 = vmatmul.mubr.f32.gmra.mrb[0].mxu0 %v382
      %v971 = vpop.f32.mrb[0].mxu0
      %v972 = vadd.f32 %v690, %v971
      %v973 = vpop.f32.mrb[0].mxu0
      %v974 = vadd.f32 %v694, %v973
      %975 = vmatprep.mubr.f32.mxu0 %v431
      %976 = vmatmul.mubr.f32.gmra.mrb[0].mxu0 %v383
      %v977 = vpop.f32.mrb[0].mxu0
      %v978 = vadd.f32 %v690, %v977
      %v979 = vpop.f32.mrb[0].mxu0
      %v980 = vadd.f32 %v694, %v979
      %981 = vmatprep.mubr.f32.mxu0 %v432
      %982 = vmatmul.mubr.f32.gmra.mrb[0].mxu0 %v384
      %v983 = vpop.f32.mrb[0].mxu0
      %v984 = vadd.f32 %v690, %v983
      %v985 = vpop.f32.mrb[0].mxu0
      %v986 = vadd.f32 %v694, %v985
      %987 = vmatprep.mubr.f32.mxu0 %v433
      %988 = vmatmul.mubr.f32.gmra.mrb[0].mxu0 %v385
      %v989 = vpop.f32.mrb[0].mxu0
      %v990 = vadd.f32 %v690, %v989
      %v991 = vpop.f32.mrb[0].mxu0
      %v992 = vadd.f32 %v694, %v991
      %993 = vmatprep.mubr.f32.mxu0 %v434
      %994 = vmatmul.mubr.f32.gmra.mrb[0].mxu0 %v386
      %v995 = vpop.f32.mrb[0].mxu0
      %v996 = vadd.f32 %v690, %v995
      %v997 = vpop.f32.mrb[0].mxu0
      %v998 = vadd.f32 %v694, %v997
      %999 = vmatprep.mubr.f32.mxu0 %v435
      %1000 = vmatmul.mubr.f32.gmra.mrb[0].mxu0 %v387
      %v1001 = vpop.f32.mrb[0].mxu0
      %v1002 = vadd.f32 %v690, %v1001
      %v1003 = vpop.f32.mrb[0].mxu0
      %v1004 = vadd.f32 %v694, %v1003
      %1005 = vmatprep.mubr.f32.mxu0 %v436
      %1006 = vmatmul.mubr.f32.gmra.mrb[0].mxu0 %v388
      %v1007 = vpop.f32.mrb[0].mxu0
      %v1008 = vadd.f32 %v690, %v1007
      %v1009 = vpop.f32.mrb[0].mxu0
      %v1010 = vadd.f32 %v694, %v1009
      %1011 = vmatprep.mubr.f32.mxu0 %v437
      %1012 = vmatmul.mubr.f32.gmra.mrb[0].mxu0 %v389
      %v1013 = vpop.f32.mrb[0].mxu0
      %v1014 = vadd.f32 %v690, %v1013
      %v1015 = vpop.f32.mrb[0].mxu0
      %v1016 = vadd.f32 %v694, %v1015
      %1017 = vmatprep.mubr.f32.mxu0 %v438
      %1018 = vmatmul.mubr.f32.gmra.mrb[0].mxu0 %v390
      %v1019 = vpop.f32.mrb[0].mxu0
      %v1020 = vadd.f32 %v690, %v1019
      %v1021 = vpop.f32.mrb[0].mxu0
      %v1022 = vadd.f32 %v694, %v1021
      %1023 = vmatprep.mubr.f32.mxu0 %v439
      %1024 = vmatmul.mubr.f32.gmra.mrb[0].mxu0 %v391
      %v1025 = vpop.f32.mrb[0].mxu0
      %v1026 = vadd.f32 %v690, %v1025
      %v1027 = vpop.f32.mrb[0].mxu0
      %v1028 = vadd.f32 %v694, %v1027
      %1029 = vmatprep.mubr.f32.mxu0 %v440
      %1030 = vmatmul.mubr.f32.gmra.mrb[0].mxu0 %v392
      %v1031 = vpop.f32.mrb[0].mxu0
      %v1032 = vadd.f32 %v690, %v1031
      %v1033 = vpop.f32.mrb[0].mxu0
      %v1034 = vadd.f32 %v694, %v1033
      %1035 = vmatprep.mubr.f32.mxu0 %v441
      %1036 = vmatmul.mubr.f32.gmra.mrb[0].mxu0 %v393
      %v1037 = vpop.f32.mrb[0].mxu0
      %v1038 = vadd.f32 %v690, %v1037
      %v1039 = vpop.f32.mrb[0].mxu0
      %v1040 = vadd.f32 %v694, %v1039
      %1041 = vmatprep.mubr.f32.mxu0 %v442
      %1042 = vmatmul.mubr.f32.gmra.mrb[0].mxu0 %v394
      %v1043 = vpop.f32.mrb[0].mxu0
      %v1044 = vadd.f32 %v690, %v1043
      %v1045 = vpop.f32.mrb[0].mxu0
      %v1046 = vadd.f32 %v694, %v1045
      %1047 = vmatprep.mubr.f32.mxu0 %v443
      %1048 = vmatmul.mubr.f32.gmra.mrb[0].mxu0 %v395
      %v1049 = vpop.f32.mrb[0].mxu0
      %v1050 = vadd.f32 %v690, %v1049
      %v1051 = vpop.f32.mrb[0].mxu0
      %v1052 = vadd.f32 %v694, %v1051
      %1053 = vmatprep.mubr.f32.mxu0 %v444
      %1054 = vmatmul.mubr.f32.gmra.mrb[0].mxu0 %v396
      %v1055 = vpop.f32.mrb[0].mxu0
      %v1056 = vadd.f32 %v690, %v1055
      %v1057 = vpop.f32.mrb[0].mxu0
      %v1058 = vadd.f32 %v694, %v1057
      %1059 = vdwg.mxu0
      %1060 = vmatprep.subr.mxu0 %v622
      %1061 = vmatpush1.msra.mxu0 %v621
      %1062 = vmatprep.subr.mxu0 %v626
      %1063 = vmatpush1.msra.mxu0 %v625
      %1064 = vmatprep.subr.mxu0 %v630
      %1065 = vmatpush1.msra.mxu0 %v629
      %1066 = vmatprep.subr.mxu0 %v634
      %1067 = vmatpush1.msra.mxu0 %v633
      %1068 = vmatprep.subr.mxu0 %v638
      %1069 = vmatpush1.msra.mxu0 %v637
      %1070 = vmatprep.subr.mxu0 %v642
      %1071 = vmatpush1.msra.mxu0 %v641
      %1072 = vmatprep.subr.mxu0 %v646
      %1073 = vmatpush1.msra.mxu0 %v645
      %1074 = vmatprep.subr.mxu0 %v650
      %1075 = vmatpush1.msra.mxu0 %v649
      %1076 = vmatprep.subr.mxu0 %v654
      %1077 = vmatpush1.msra.mxu0 %v653
      %1078 = vmatprep.subr.mxu0 %v658
      %1079 = vmatpush1.msra.mxu0 %v657
      %1080 = vmatprep.subr.mxu0 %v662
      %1081 = vmatpush1.msra.mxu0 %v661
      %1082 = vmatprep.subr.mxu0 %v666
      %1083 = vmatpush1.msra.mxu0 %v665
      %1084 = vmatprep.subr.mxu0 %v670
      %1085 = vmatpush1.msra.mxu0 %v669
      %1086 = vmatprep.subr.mxu0 %v674
      %1087 = vmatpush1.msra.mxu0 %v673
      %1088 = vmatprep.subr.mxu0 %v678
      %1089 = vmatpush1.msra.mxu0 %v677
      %1090 = vmatprep.subr.mxu0 %v682
      %1091 = vmatpush1.msra.mxu0 %v681
      %1092 = vmatprep.subr.mxu0 0.0
      %1093 = vmatpush1.msra.mxu0 0.0
      %1094 = vmatprep.subr.mxu0 0.0
      %1095 = vmatpush1.msra.mxu0 0.0
      %1096 = vmatprep.subr.mxu0 0.0
      %1097 = vmatpush1.msra.mxu0 0.0
      %1098 = vmatprep.subr.mxu0 0.0
      %1099 = vmatpush1.msra.mxu0 0.0
      %1100 = vmatprep.subr.mxu0 0.0
      %1101 = vmatpush1.msra.mxu0 0.0
      %1102 = vmatprep.subr.mxu0 0.0
      %1103 = vmatpush1.msra.mxu0 0.0
      %1104 = vmatprep.subr.mxu0 0.0
      %1105 = vmatpush1.msra.mxu0 0.0
      %1106 = vmatprep.subr.mxu0 0.0
      %1107 = vmatpush1.msra.mxu0 0.0
      %1108 = vmatprep.subr.mxu0 0.0
      %1109 = vmatpush1.msra.mxu0 0.0
      %1110 = vmatprep.subr.mxu0 0.0
      %1111 = vmatpush1.msra.mxu0 0.0
      %1112 = vmatprep.subr.mxu0 0.0
      %1113 = vmatpush1.msra.mxu0 0.0
      %1114 = vmatprep.subr.mxu0 0.0
      %1115 = vmatpush1.msra.mxu0 0.0
      %1116 = vmatprep.subr.mxu0 0.0
      %1117 = vmatpush1.msra.mxu0 0.0
      %1118 = vmatprep.subr.mxu0 0.0
      %1119 = vmatpush1.msra.mxu0 0.0
      %1120 = vmatprep.subr.mxu0 0.0
      %1121 = vmatpush1.msra.mxu0 0.0
      %1122 = vmatprep.subr.mxu0 0.0
      %1123 = vmatpush1.msra.mxu0 0.0
      %1124 = vmatprep.mubr.f32.mxu0 0.0
      %1125 = vmatmul.mubr.f32.gmra.mrb[0].mxu0 %v445
      %v1126 = vpop.f32.mrb[0].mxu0
      %v1127 = vadd.f32 %v774, %v1126
      %v1128 = vpop.f32.mrb[0].mxu0
      %v1129 = vadd.f32 %v776, %v1128
      %1130 = vmatprep.mubr.f32.mxu0 0.0
      %1131 = vmatmul.mubr.f32.gmra.mrb[0].mxu0 %v446
      %v1132 = vpop.f32.mrb[0].mxu0
      %v1133 = vadd.f32 %v780, %v1132
      %v1134 = vpop.f32.mrb[0].mxu0
      %v1135 = vadd.f32 %v782, %v1134
      %1136 = vmatprep.mubr.f32.mxu0 0.0
      %1137 = vmatmul.mubr.f32.gmra.mrb[0].mxu0 %v447
      %v1138 = vpop.f32.mrb[0].mxu0
      %v1139 = vadd.f32 %v786, %v1138
      %v1140 = vpop.f32.mrb[0].mxu0
      %v1141 = vadd.f32 %v788, %v1140
      %1142 = vmatprep.mubr.f32.mxu0 0.0
      %1143 = vmatmul.mubr.f32.gmra.mrb[0].mxu0 %v448
      %v1144 = vpop.f32.mrb[0].mxu0
      %v1145 = vadd.f32 %v792, %v1144
      %v1146 = vpop.f32.mrb[0].mxu0
      %v1147 = vadd.f32 %v794, %v1146
      %1148 = vmatprep.mubr.f32.mxu0 0.0
      %1149 = vmatmul.mubr.f32.gmra.mrb[0].mxu0 %v449
      %v1150 = vpop.f32.mrb[0].mxu0
      %v1151 = vadd.f32 %v798, %v1150
      %v1152 = vpop.f32.mrb[0].mxu0
      %v1153 = vadd.f32 %v800, %v1152
      %1154 = vmatprep.mubr.f32.mxu0 0.0
      %1155 = vmatmul.mubr.f32.gmra.mrb[0].mxu0 %v450
      %v1156 = vpop.f32.mrb[0].mxu0
      %v1157 = vadd.f32 %v804, %v1156
      %v1158 = vpop.f32.mrb[0].mxu0
      %v1159 = vadd.f32 %v806, %v1158
      %1160 = vmatprep.mubr.f32.mxu0 0.0
      %1161 = vmatmul.mubr.f32.gmra.mrb[0].mxu0 %v451
      %v1162 = vpop.f32.mrb[0].mxu0
      %v1163 = vadd.f32 %v810, %v1162
      %v1164 = vpop.f32.mrb[0].mxu0
      %v1165 = vadd.f32 %v812, %v1164
      %1166 = vmatprep.mubr.f32.mxu0 0.0
      %1167 = vmatmul.mubr.f32.gmra.mrb[0].mxu0 %v452
      %v1168 = vpop.f32.mrb[0].mxu0
      %v1169 = vadd.f32 %v816, %v1168
      %v1170 = vpop.f32.mrb[0].mxu0
      %v1171 = vadd.f32 %v818, %v1170
      %1172 = vmatprep.mubr.f32.mxu0 0.0
      %1173 = vmatmul.mubr.f32.gmra.mrb[0].mxu0 %v453
      %v1174 = vpop.f32.mrb[0].mxu0
      %v1175 = vadd.f32 %v822, %v1174
      %v1176 = vpop.f32.mrb[0].mxu0
      %v1177 = vadd.f32 %v824, %v1176
      %1178 = vmatprep.mubr.f32.mxu0 0.0
      %1179 = vmatmul.mubr.f32.gmra.mrb[0].mxu0 %v454
      %v1180 = vpop.f32.mrb[0].mxu0
      %v1181 = vadd.f32 %v828, %v1180
      %v1182 = vpop.f32.mrb[0].mxu0
      %v1183 = vadd.f32 %v830, %v1182
      %1184 = vmatprep.mubr.f32.mxu0 0.0
      %1185 = vmatmul.mubr.f32.gmra.mrb[0].mxu0 %v455
      %v1186 = vpop.f32.mrb[0].mxu0
      %v1187 = vadd.f32 %v834, %v1186
      %v1188 = vpop.f32.mrb[0].mxu0
      %v1189 = vadd.f32 %v836, %v1188
      %1190 = vmatprep.mubr.f32.mxu0 0.0
      %1191 = vmatmul.mubr.f32.gmra.mrb[0].mxu0 %v456
      %v1192 = vpop.f32.mrb[0].mxu0
      %v1193 = vadd.f32 %v840, %v1192
      %v1194 = vpop.f32.mrb[0].mxu0
      %v1195 = vadd.f32 %v842, %v1194
      %1196 = vmatprep.mubr.f32.mxu0 0.0
      %1197 = vmatmul.mubr.f32.gmra.mrb[0].mxu0 %v457
      %v1198 = vpop.f32.mrb[0].mxu0
      %v1199 = vadd.f32 %v846, %v1198
      %v1200 = vpop.f32.mrb[0].mxu0
      %v1201 = vadd.f32 %v848, %v1200
      %1202 = vmatprep.mubr.f32.mxu0 0.0
      %1203 = vmatmul.mubr.f32.gmra.mrb[0].mxu0 %v458
      %v1204 = vpop.f32.mrb[0].mxu0
      %v1205 = vadd.f32 %v852, %v1204
      %v1206 = vpop.f32.mrb[0].mxu0
      %v1207 = vadd.f32 %v854, %v1206
      %1208 = vmatprep.mubr.f32.mxu0 0.0
      %1209 = vmatmul.mubr.f32.gmra.mrb[0].mxu0 %v459
      %v1210 = vpop.f32.mrb[0].mxu0
      %v1211 = vadd.f32 %v858, %v1210
      %v1212 = vpop.f32.mrb[0].mxu0
      %v1213 = vadd.f32 %v860, %v1212
      %1214 = vmatprep.mubr.f32.mxu0 0.0
      %1215 = vmatmul.mubr.f32.gmra.mrb[0].mxu0 %v460
      %v1216 = vpop.f32.mrb[0].mxu0
      %v1217 = vadd.f32 %v864, %v1216
      %v1218 = vpop.f32.mrb[0].mxu0
      %v1219 = vadd.f32 %v866, %v1218
      %1220 = vmatprep.mubr.f32.mxu0 0.0
      %1221 = vmatmul.mubr.f32.gmra.mrb[0].mxu0 %v461
      %v1222 = vpop.f32.mrb[0].mxu0
      %v1223 = vadd.f32 %v870, %v1222
      %v1224 = vpop.f32.mrb[0].mxu0
      %v1225 = vadd.f32 %v872, %v1224
      %1226 = vmatprep.mubr.f32.mxu0 0.0
      %1227 = vmatmul.mubr.f32.gmra.mrb[0].mxu0 %v462
      %v1228 = vpop.f32.mrb[0].mxu0
      %v1229 = vadd.f32 %v876, %v1228
      %v1230 = vpop.f32.mrb[0].mxu0
      %v1231 = vadd.f32 %v878, %v1230
      %1232 = vmatprep.mubr.f32.mxu0 0.0
      %1233 = vmatmul.mubr.f32.gmra.mrb[0].mxu0 %v463
      %v1234 = vpop.f32.mrb[0].mxu0
      %v1235 = vadd.f32 %v882, %v1234
      %v1236 = vpop.f32.mrb[0].mxu0
      %v1237 = vadd.f32 %v884, %v1236
      %1238 = vmatprep.mubr.f32.mxu0 0.0
      %1239 = vmatmul.mubr.f32.gmra.mrb[0].mxu0 %v464
      %v1240 = vpop.f32.mrb[0].mxu0
      %v1241 = vadd.f32 %v888, %v1240
      %v1242 = vpop.f32.mrb[0].mxu0
      %v1243 = vadd.f32 %v890, %v1242
      %1244 = vmatprep.mubr.f32.mxu0 0.0
      %1245 = vmatmul.mubr.f32.gmra.mrb[0].mxu0 %v465
      %v1246 = vpop.f32.mrb[0].mxu0
      %v1247 = vadd.f32 %v894, %v1246
      %v1248 = vpop.f32.mrb[0].mxu0
      %v1249 = vadd.f32 %v896, %v1248
      %1250 = vmatprep.mubr.f32.mxu0 0.0
      %1251 = vmatmul.mubr.f32.gmra.mrb[0].mxu0 %v466
      %v1252 = vpop.f32.mrb[0].mxu0
      %v1253 = vadd.f32 %v900, %v1252
      %v1254 = vpop.f32.mrb[0].mxu0
      %v1255 = vadd.f32 %v902, %v1254
      %1256 = vmatprep.mubr.f32.mxu0 0.0
      %1257 = vmatmul.mubr.f32.gmra.mrb[0].mxu0 %v467
      %v1258 = vpop.f32.mrb[0].mxu0
      %v1259 = vadd.f32 %v906, %v1258
      %v1260 = vpop.f32.mrb[0].mxu0
      %v1261 = vadd.f32 %v908, %v1260
      %1262 = vmatprep.mubr.f32.mxu0 0.0
      %1263 = vmatmul.mubr.f32.gmra.mrb[0].mxu0 %v468
      %v1264 = vpop.f32.mrb[0].mxu0
      %v1265 = vadd.f32 %v912, %v1264
      %v1266 = vpop.f32.mrb[0].mxu0
      %v1267 = vadd.f32 %v914, %v1266
      %1268 = vmatprep.mubr.f32.mxu0 0.0
      %1269 = vmatmul.mubr.f32.gmra.mrb[0].mxu0 %v469
      %v1270 = vpop.f32.mrb[0].mxu0
      %v1271 = vadd.f32 %v918, %v1270
      %v1272 = vpop.f32.mrb[0].mxu0
      %v1273 = vadd.f32 %v920, %v1272
      %1274 = vmatprep.mubr.f32.mxu0 0.0
      %1275 = vmatmul.mubr.f32.gmra.mrb[0].mxu0 %v470
      %v1276 = vpop.f32.mrb[0].mxu0
      %v1277 = vadd.f32 %v924, %v1276
      %v1278 = vpop.f32.mrb[0].mxu0
      %v1279 = vadd.f32 %v926, %v1278
      %1280 = vmatprep.mubr.f32.mxu0 0.0
      %1281 = vmatmul.mubr.f32.gmra.mrb[0].mxu0 %v471
      %v1282 = vpop.f32.mrb[0].mxu0
      %v1283 = vadd.f32 %v930, %v1282
      %v1284 = vpop.f32.mrb[0].mxu0
      %v1285 = vadd.f32 %v932, %v1284
      %1286 = vmatprep.mubr.f32.mxu0 0.0
      %1287 = vmatmul.mubr.f32.gmra.mrb[0].mxu0 %v472
      %v1288 = vpop.f32.mrb[0].mxu0
      %v1289 = vadd.f32 %v936, %v1288
      %v1290 = vpop.f32.mrb[0].mxu0
      %v1291 = vadd.f32 %v938, %v1290
      %1292 = vmatprep.mubr.f32.mxu0 0.0
      %1293 = vmatmul.mubr.f32.gmra.mrb[0].mxu0 %v473
      %v1294 = vpop.f32.mrb[0].mxu0
      %v1295 = vadd.f32 %v942, %v1294
      %v1296 = vpop.f32.mrb[0].mxu0
      %v1297 = vadd.f32 %v944, %v1296
      %1298 = vmatprep.mubr.f32.mxu0 0.0
      %1299 = vmatmul.mubr.f32.gmra.mrb[0].mxu0 %v474
      %v1300 = vpop.f32.mrb[0].mxu0
      %v1301 = vadd.f32 %v948, %v1300
      %v1302 = vpop.f32.mrb[0].mxu0
      %v1303 = vadd.f32 %v950, %v1302
      %1304 = vmatprep.mubr.f32.mxu0 0.0
      %1305 = vmatmul.mubr.f32.gmra.mrb[0].mxu0 %v475
      %v1306 = vpop.f32.mrb[0].mxu0
      %v1307 = vadd.f32 %v954, %v1306
      %v1308 = vpop.f32.mrb[0].mxu0
      %v1309 = vadd.f32 %v956, %v1308
      %1310 = vmatprep.mubr.f32.mxu0 0.0
      %1311 = vmatmul.mubr.f32.gmra.mrb[0].mxu0 %v476
      %v1312 = vpop.f32.mrb[0].mxu0
      %v1313 = vadd.f32 %v960, %v1312
      %v1314 = vpop.f32.mrb[0].mxu0
      %v1315 = vadd.f32 %v962, %v1314
      %1316 = vmatprep.mubr.f32.mxu0 0.0
      %1317 = vmatmul.mubr.f32.gmra.mrb[0].mxu0 %v477
      %v1318 = vpop.f32.mrb[0].mxu0
      %v1319 = vadd.f32 %v966, %v1318
      %v1320 = vpop.f32.mrb[0].mxu0
      %v1321 = vadd.f32 %v968, %v1320
      %1322 = vmatprep.mubr.f32.mxu0 0.0
      %1323 = vmatmul.mubr.f32.gmra.mrb[0].mxu0 %v478
      %v1324 = vpop.f32.mrb[0].mxu0
      %v1325 = vadd.f32 %v972, %v1324
      %v1326 = vpop.f32.mrb[0].mxu0
      %v1327 = vadd.f32 %v974, %v1326
      %1328 = vmatprep.mubr.f32.mxu0 0.0
      %1329 = vmatmul.mubr.f32.gmra.mrb[0].mxu0 %v479
      %v1330 = vpop.f32.mrb[0].mxu0
      %v1331 = vadd.f32 %v978, %v1330
      %v1332 = vpop.f32.mrb[0].mxu0
      %v1333 = vadd.f32 %v980, %v1332
      %1334 = vmatprep.mubr.f32.mxu0 0.0
      %1335 = vmatmul.mubr.f32.gmra.mrb[0].mxu0 %v480
      %v1336 = vpop.f32.mrb[0].mxu0
      %v1337 = vadd.f32 %v984, %v1336
      %v1338 = vpop.f32.mrb[0].mxu0
      %v1339 = vadd.f32 %v986, %v1338
      %1340 = vmatprep.mubr.f32.mxu0 0.0
      %1341 = vmatmul.mubr.f32.gmra.mrb[0].mxu0 %v481
      %v1342 = vpop.f32.mrb[0].mxu0
      %v1343 = vadd.f32 %v990, %v1342
      %v1344 = vpop.f32.mrb[0].mxu0
      %v1345 = vadd.f32 %v992, %v1344
      %1346 = vmatprep.mubr.f32.mxu0 0.0
      %1347 = vmatmul.mubr.f32.gmra.mrb[0].mxu0 %v482
      %v1348 = vpop.f32.mrb[0].mxu0
      %v1349 = vadd.f32 %v996, %v1348
      %v1350 = vpop.f32.mrb[0].mxu0
      %v1351 = vadd.f32 %v998, %v1350
      %1352 = vmatprep.mubr.f32.mxu0 0.0
      %1353 = vmatmul.mubr.f32.gmra.mrb[0].mxu0 %v483
      %v1354 = vpop.f32.mrb[0].mxu0
      %v1355 = vadd.f32 %v1002, %v1354
      %v1356 = vpop.f32.mrb[0].mxu0
      %v1357 = vadd.f32 %v1004, %v1356
      %1358 = vmatprep.mubr.f32.mxu0 0.0
      %1359 = vmatmul.mubr.f32.gmra.mrb[0].mxu0 %v484
      %v1360 = vpop.f32.mrb[0].mxu0
      %v1361 = vadd.f32 %v1008, %v1360
      %v1362 = vpop.f32.mrb[0].mxu0
      %v1363 = vadd.f32 %v1010, %v1362
      %1364 = vmatprep.mubr.f32.mxu0 0.0
      %1365 = vmatmul.mubr.f32.gmra.mrb[0].mxu0 %v485
      %v1366 = vpop.f32.mrb[0].mxu0
      %v1367 = vadd.f32 %v1014, %v1366
      %v1368 = vpop.f32.mrb[0].mxu0
      %v1369 = vadd.f32 %v1016, %v1368
      %1370 = vmatprep.mubr.f32.mxu0 0.0
      %1371 = vmatmul.mubr.f32.gmra.mrb[0].mxu0 %v486
      %v1372 = vpop.f32.mrb[0].mxu0
      %v1373 = vadd.f32 %v1020, %v1372
      %v1374 = vpop.f32.mrb[0].mxu0
      %v1375 = vadd.f32 %v1022, %v1374
      %1376 = vmatprep.mubr.f32.mxu0 0.0
      %1377 = vmatmul.mubr.f32.gmra.mrb[0].mxu0 %v487
      %v1378 = vpop.f32.mrb[0].mxu0
      %v1379 = vadd.f32 %v1026, %v1378
      %v1380 = vpop.f32.mrb[0].mxu0
      %v1381 = vadd.f32 %v1028, %v1380
      %1382 = vmatprep.mubr.f32.mxu0 0.0
      %1383 = vmatmul.mubr.f32.gmra.mrb[0].mxu0 %v488
      %v1384 = vpop.f32.mrb[0].mxu0
      %v1385 = vadd.f32 %v1032, %v1384
      %v1386 = vpop.f32.mrb[0].mxu0
      %v1387 = vadd.f32 %v1034, %v1386
      %1388 = vmatprep.mubr.f32.mxu0 0.0
      %1389 = vmatmul.mubr.f32.gmra.mrb[0].mxu0 %v489
      %v1390 = vpop.f32.mrb[0].mxu0
      %v1391 = vadd.f32 %v1038, %v1390
      %v1392 = vpop.f32.mrb[0].mxu0
      %v1393 = vadd.f32 %v1040, %v1392
      %1394 = vmatprep.mubr.f32.mxu0 0.0
      %1395 = vmatmul.mubr.f32.gmra.mrb[0].mxu0 %v490
      %v1396 = vpop.f32.mrb[0].mxu0
      %v1397 = vadd.f32 %v1044, %v1396
      %v1398 = vpop.f32.mrb[0].mxu0
      %v1399 = vadd.f32 %v1046, %v1398
      %1400 = vmatprep.mubr.f32.mxu0 0.0
      %1401 = vmatmul.mubr.f32.gmra.mrb[0].mxu0 %v491
      %v1402 = vpop.f32.mrb[0].mxu0
      %v1403 = vadd.f32 %v1050, %v1402
      %v1404 = vpop.f32.mrb[0].mxu0
      %v1405 = vadd.f32 %v1052, %v1404
      %1406 = vmatprep.mubr.f32.mxu0 0.0
      %1407 = vmatmul.mubr.f32.gmra.mrb[0].mxu0 %v492
      %v1408 = vpop.f32.mrb[0].mxu0
      %v1409 = vadd.f32 %v1056, %v1408
      %v1410 = vpop.f32.mrb[0].mxu0
      %v1411 = vadd.f32 %v1058, %v1410
      %1412 = vdwg.mxu0
      %1413 = vmatprep.subr.mxu0 %v496
      %1414 = vmatpush1.msra.mxu0 %v495
      %1415 = vmatprep.subr.mxu0 %v500
      %1416 = vmatpush1.msra.mxu0 %v499
      %1417 = vmatprep.subr.mxu0 %v504
      %1418 = vmatpush1.msra.mxu0 %v503
      %1419 = vmatprep.subr.mxu0 %v508
      %1420 = vmatpush1.msra.mxu0 %v507
      %1421 = vmatprep.subr.mxu0 %v512
      %1422 = vmatpush1.msra.mxu0 %v511
      %1423 = vmatprep.subr.mxu0 %v516
      %1424 = vmatpush1.msra.mxu0 %v515
      %1425 = vmatprep.subr.mxu0 %v520
      %1426 = vmatpush1.msra.mxu0 %v519
      %1427 = vmatprep.subr.mxu0 %v524
      %1428 = vmatpush1.msra.mxu0 %v523
      %1429 = vmatprep.subr.mxu0 %v528
      %1430 = vmatpush1.msra.mxu0 %v527
      %1431 = vmatprep.subr.mxu0 %v532
      %1432 = vmatpush1.msra.mxu0 %v531
      %1433 = vmatprep.subr.mxu0 %v536
      %1434 = vmatpush1.msra.mxu0 %v535
      %1435 = vmatprep.subr.mxu0 %v540
      %1436 = vmatpush1.msra.mxu0 %v539
      %1437 = vmatprep.subr.mxu0 %v544
      %1438 = vmatpush1.msra.mxu0 %v543
      %1439 = vmatprep.subr.mxu0 %v548
      %1440 = vmatpush1.msra.mxu0 %v547
      %1441 = vmatprep.subr.mxu0 %v552
      %1442 = vmatpush1.msra.mxu0 %v551
      %1443 = vmatprep.subr.mxu0 %v556
      %1444 = vmatpush1.msra.mxu0 %v555
      %1445 = vmatprep.subr.mxu0 %v560
      %1446 = vmatpush1.msra.mxu0 %v559
      %1447 = vmatprep.subr.mxu0 %v564
      %1448 = vmatpush1.msra.mxu0 %v563
      %1449 = vmatprep.subr.mxu0 %v568
      %1450 = vmatpush1.msra.mxu0 %v567
      %1451 = vmatprep.subr.mxu0 %v572
      %1452 = vmatpush1.msra.mxu0 %v571
      %1453 = vmatprep.subr.mxu0 %v576
      %1454 = vmatpush1.msra.mxu0 %v575
      %1455 = vmatprep.subr.mxu0 %v580
      %1456 = vmatpush1.msra.mxu0 %v579
      %1457 = vmatprep.subr.mxu0 %v584
      %1458 = vmatpush1.msra.mxu0 %v583
      %1459 = vmatprep.subr.mxu0 %v588
      %1460 = vmatpush1.msra.mxu0 %v587
      %1461 = vmatprep.subr.mxu0 %v592
      %1462 = vmatpush1.msra.mxu0 %v591
      %1463 = vmatprep.subr.mxu0 %v596
      %1464 = vmatpush1.msra.mxu0 %v595
      %1465 = vmatprep.subr.mxu0 %v600
      %1466 = vmatpush1.msra.mxu0 %v599
      %1467 = vmatprep.subr.mxu0 %v604
      %1468 = vmatpush1.msra.mxu0 %v603
      %1469 = vmatprep.subr.mxu0 %v608
      %1470 = vmatpush1.msra.mxu0 %v607
      %1471 = vmatprep.subr.mxu0 %v612
      %1472 = vmatpush1.msra.mxu0 %v611
      %1473 = vmatprep.subr.mxu0 %v616
      %1474 = vmatpush1.msra.mxu0 %v615
      %1475 = vmatprep.subr.mxu0 %v620
      %1476 = vmatpush1.msra.mxu0 %v619
      %1477 = vmatprep.mubr.f32.mxu0 %v397
      %1478 = vmatmul.mubr.f32.gmra.mrb[0].mxu0 %v349
      %v1479 = vpop.f32.mrb[0].mxu0
      %v1480 = vadd.f32 %v698, %v1479
      %v1481 = vpop.f32.mrb[0].mxu0
      %v1482 = vadd.f32 %v702, %v1481
      %1483 = vmatprep.mubr.f32.mxu0 %v398
      %1484 = vmatmul.mubr.f32.gmra.mrb[0].mxu0 %v350
      %v1485 = vpop.f32.mrb[0].mxu0
      %v1486 = vadd.f32 %v698, %v1485
      %v1487 = vpop.f32.mrb[0].mxu0
      %v1488 = vadd.f32 %v702, %v1487
      %1489 = vmatprep.mubr.f32.mxu0 %v399
      %1490 = vmatmul.mubr.f32.gmra.mrb[0].mxu0 %v351
      %v1491 = vpop.f32.mrb[0].mxu0
      %v1492 = vadd.f32 %v698, %v1491
      %v1493 = vpop.f32.mrb[0].mxu0
      %v1494 = vadd.f32 %v702, %v1493
      %1495 = vmatprep.mubr.f32.mxu0 %v400
      %1496 = vmatmul.mubr.f32.gmra.mrb[0].mxu0 %v352
      %v1497 = vpop.f32.mrb[0].mxu0
      %v1498 = vadd.f32 %v698, %v1497
      %v1499 = vpop.f32.mrb[0].mxu0
      %v1500 = vadd.f32 %v702, %v1499
      %1501 = vmatprep.mubr.f32.mxu0 %v401
      %1502 = vmatmul.mubr.f32.gmra.mrb[0].mxu0 %v353
      %v1503 = vpop.f32.mrb[0].mxu0
      %v1504 = vadd.f32 %v698, %v1503
      %v1505 = vpop.f32.mrb[0].mxu0
      %v1506 = vadd.f32 %v702, %v1505
      %1507 = vmatprep.mubr.f32.mxu0 %v402
      %1508 = vmatmul.mubr.f32.gmra.mrb[0].mxu0 %v354
      %v1509 = vpop.f32.mrb[0].mxu0
      %v1510 = vadd.f32 %v698, %v1509
      %v1511 = vpop.f32.mrb[0].mxu0
      %v1512 = vadd.f32 %v702, %v1511
      %1513 = vmatprep.mubr.f32.mxu0 %v403
      %1514 = vmatmul.mubr.f32.gmra.mrb[0].mxu0 %v355
      %v1515 = vpop.f32.mrb[0].mxu0
      %v1516 = vadd.f32 %v698, %v1515
      %v1517 = vpop.f32.mrb[0].mxu0
      %v1518 = vadd.f32 %v702, %v1517
      %1519 = vmatprep.mubr.f32.mxu0 %v404
      %1520 = vmatmul.mubr.f32.gmra.mrb[0].mxu0 %v356
      %v1521 = vpop.f32.mrb[0].mxu0
      %v1522 = vadd.f32 %v698, %v1521
      %v1523 = vpop.f32.mrb[0].mxu0
      %v1524 = vadd.f32 %v702, %v1523
      %1525 = vmatprep.mubr.f32.mxu0 %v405
      %1526 = vmatmul.mubr.f32.gmra.mrb[0].mxu0 %v357
      %v1527 = vpop.f32.mrb[0].mxu0
      %v1528 = vadd.f32 %v698, %v1527
      %v1529 = vpop.f32.mrb[0].mxu0
      %v1530 = vadd.f32 %v702, %v1529
      %1531 = vmatprep.mubr.f32.mxu0 %v406
      %1532 = vmatmul.mubr.f32.gmra.mrb[0].mxu0 %v358
      %v1533 = vpop.f32.mrb[0].mxu0
      %v1534 = vadd.f32 %v698, %v1533
      %v1535 = vpop.f32.mrb[0].mxu0
      %v1536 = vadd.f32 %v702, %v1535
      %1537 = vmatprep.mubr.f32.mxu0 %v407
      %1538 = vmatmul.mubr.f32.gmra.mrb[0].mxu0 %v359
      %v1539 = vpop.f32.mrb[0].mxu0
      %v1540 = vadd.f32 %v698, %v1539
      %v1541 = vpop.f32.mrb[0].mxu0
      %v1542 = vadd.f32 %v702, %v1541
      %1543 = vmatprep.mubr.f32.mxu0 %v408
      %1544 = vmatmul.mubr.f32.gmra.mrb[0].mxu0 %v360
      %v1545 = vpop.f32.mrb[0].mxu0
      %v1546 = vadd.f32 %v698, %v1545
      %v1547 = vpop.f32.mrb[0].mxu0
      %v1548 = vadd.f32 %v702, %v1547
      %1549 = vmatprep.mubr.f32.mxu0 %v409
      %1550 = vmatmul.mubr.f32.gmra.mrb[0].mxu0 %v361
      %v1551 = vpop.f32.mrb[0].mxu0
      %v1552 = vadd.f32 %v698, %v1551
      %v1553 = vpop.f32.mrb[0].mxu0
      %v1554 = vadd.f32 %v702, %v1553
      %1555 = vmatprep.mubr.f32.mxu0 %v410
      %1556 = vmatmul.mubr.f32.gmra.mrb[0].mxu0 %v362
      %v1557 = vpop.f32.mrb[0].mxu0
      %v1558 = vadd.f32 %v698, %v1557
      %v1559 = vpop.f32.mrb[0].mxu0
      %v1560 = vadd.f32 %v702, %v1559
      %1561 = vmatprep.mubr.f32.mxu0 %v411
      %1562 = vmatmul.mubr.f32.gmra.mrb[0].mxu0 %v363
      %v1563 = vpop.f32.mrb[0].mxu0
      %v1564 = vadd.f32 %v698, %v1563
      %v1565 = vpop.f32.mrb[0].mxu0
      %v1566 = vadd.f32 %v702, %v1565
      %1567 = vmatprep.mubr.f32.mxu0 %v412
      %1568 = vmatmul.mubr.f32.gmra.mrb[0].mxu0 %v364
      %v1569 = vpop.f32.mrb[0].mxu0
      %v1570 = vadd.f32 %v698, %v1569
      %v1571 = vpop.f32.mrb[0].mxu0
      %v1572 = vadd.f32 %v702, %v1571
      %1573 = vmatprep.mubr.f32.mxu0 %v413
      %1574 = vmatmul.mubr.f32.gmra.mrb[0].mxu0 %v365
      %v1575 = vpop.f32.mrb[0].mxu0
      %v1576 = vadd.f32 %v698, %v1575
      %v1577 = vpop.f32.mrb[0].mxu0
      %v1578 = vadd.f32 %v702, %v1577
      %1579 = vmatprep.mubr.f32.mxu0 %v414
      %1580 = vmatmul.mubr.f32.gmra.mrb[0].mxu0 %v366
      %v1581 = vpop.f32.mrb[0].mxu0
      %v1582 = vadd.f32 %v698, %v1581
      %v1583 = vpop.f32.mrb[0].mxu0
      %v1584 = vadd.f32 %v702, %v1583
      %1585 = vmatprep.mubr.f32.mxu0 %v415
      %1586 = vmatmul.mubr.f32.gmra.mrb[0].mxu0 %v367
      %v1587 = vpop.f32.mrb[0].mxu0
      %v1588 = vadd.f32 %v698, %v1587
      %v1589 = vpop.f32.mrb[0].mxu0
      %v1590 = vadd.f32 %v702, %v1589
      %1591 = vmatprep.mubr.f32.mxu0 %v416
      %1592 = vmatmul.mubr.f32.gmra.mrb[0].mxu0 %v368
      %v1593 = vpop.f32.mrb[0].mxu0
      %v1594 = vadd.f32 %v698, %v1593
      %v1595 = vpop.f32.mrb[0].mxu0
      %v1596 = vadd.f32 %v702, %v1595
      %1597 = vmatprep.mubr.f32.mxu0 %v417
      %1598 = vmatmul.mubr.f32.gmra.mrb[0].mxu0 %v369
      %v1599 = vpop.f32.mrb[0].mxu0
      %v1600 = vadd.f32 %v698, %v1599
      %v1601 = vpop.f32.mrb[0].mxu0
      %v1602 = vadd.f32 %v702, %v1601
      %1603 = vmatprep.mubr.f32.mxu0 %v418
      %1604 = vmatmul.mubr.f32.gmra.mrb[0].mxu0 %v370
      %v1605 = vpop.f32.mrb[0].mxu0
      %v1606 = vadd.f32 %v698, %v1605
      %v1607 = vpop.f32.mrb[0].mxu0
      %v1608 = vadd.f32 %v702, %v1607
      %1609 = vmatprep.mubr.f32.mxu0 %v419
      %1610 = vmatmul.mubr.f32.gmra.mrb[0].mxu0 %v371
      %v1611 = vpop.f32.mrb[0].mxu0
      %v1612 = vadd.f32 %v698, %v1611
      %v1613 = vpop.f32.mrb[0].mxu0
      %v1614 = vadd.f32 %v702, %v1613
      %1615 = vmatprep.mubr.f32.mxu0 %v420
      %1616 = vmatmul.mubr.f32.gmra.mrb[0].mxu0 %v372
      %v1617 = vpop.f32.mrb[0].mxu0
      %v1618 = vadd.f32 %v698, %v1617
      %v1619 = vpop.f32.mrb[0].mxu0
      %v1620 = vadd.f32 %v702, %v1619
      %1621 = vmatprep.mubr.f32.mxu0 %v421
      %1622 = vmatmul.mubr.f32.gmra.mrb[0].mxu0 %v373
      %v1623 = vpop.f32.mrb[0].mxu0
      %v1624 = vadd.f32 %v698, %v1623
      %v1625 = vpop.f32.mrb[0].mxu0
      %v1626 = vadd.f32 %v702, %v1625
      %1627 = vmatprep.mubr.f32.mxu0 %v422
      %1628 = vmatmul.mubr.f32.gmra.mrb[0].mxu0 %v374
      %v1629 = vpop.f32.mrb[0].mxu0
      %v1630 = vadd.f32 %v698, %v1629
      %v1631 = vpop.f32.mrb[0].mxu0
      %v1632 = vadd.f32 %v702, %v1631
      %1633 = vmatprep.mubr.f32.mxu0 %v423
      %1634 = vmatmul.mubr.f32.gmra.mrb[0].mxu0 %v375
      %v1635 = vpop.f32.mrb[0].mxu0
      %v1636 = vadd.f32 %v698, %v1635
      %v1637 = vpop.f32.mrb[0].mxu0
      %v1638 = vadd.f32 %v702, %v1637
      %1639 = vmatprep.mubr.f32.mxu0 %v424
      %1640 = vmatmul.mubr.f32.gmra.mrb[0].mxu0 %v376
      %v1641 = vpop.f32.mrb[0].mxu0
      %v1642 = vadd.f32 %v698, %v1641
      %v1643 = vpop.f32.mrb[0].mxu0
      %v1644 = vadd.f32 %v702, %v1643
      %1645 = vmatprep.mubr.f32.mxu0 %v425
      %1646 = vmatmul.mubr.f32.gmra.mrb[0].mxu0 %v377
      %v1647 = vpop.f32.mrb[0].mxu0
      %v1648 = vadd.f32 %v698, %v1647
      %v1649 = vpop.f32.mrb[0].mxu0
      %v1650 = vadd.f32 %v702, %v1649
      %1651 = vmatprep.mubr.f32.mxu0 %v426
      %1652 = vmatmul.mubr.f32.gmra.mrb[0].mxu0 %v378
      %v1653 = vpop.f32.mrb[0].mxu0
      %v1654 = vadd.f32 %v698, %v1653
      %v1655 = vpop.f32.mrb[0].mxu0
      %v1656 = vadd.f32 %v702, %v1655
      %1657 = vmatprep.mubr.f32.mxu0 %v427
      %1658 = vmatmul.mubr.f32.gmra.mrb[0].mxu0 %v379
      %v1659 = vpop.f32.mrb[0].mxu0
      %v1660 = vadd.f32 %v698, %v1659
      %v1661 = vpop.f32.mrb[0].mxu0
      %v1662 = vadd.f32 %v702, %v1661
      %1663 = vmatprep.mubr.f32.mxu0 %v428
      %1664 = vmatmul.mubr.f32.gmra.mrb[0].mxu0 %v380
      %v1665 = vpop.f32.mrb[0].mxu0
      %v1666 = vadd.f32 %v698, %v1665
      %v1667 = vpop.f32.mrb[0].mxu0
      %v1668 = vadd.f32 %v702, %v1667
      %1669 = vmatprep.mubr.f32.mxu0 %v429
      %1670 = vmatmul.mubr.f32.gmra.mrb[0].mxu0 %v381
      %v1671 = vpop.f32.mrb[0].mxu0
      %v1672 = vadd.f32 %v698, %v1671
      %v1673 = vpop.f32.mrb[0].mxu0
      %v1674 = vadd.f32 %v702, %v1673
      %1675 = vmatprep.mubr.f32.mxu0 %v430
      %1676 = vmatmul.mubr.f32.gmra.mrb[0].mxu0 %v382
      %v1677 = vpop.f32.mrb[0].mxu0
      %v1678 = vadd.f32 %v698, %v1677
      %v1679 = vpop.f32.mrb[0].mxu0
      %v1680 = vadd.f32 %v702, %v1679
      %1681 = vmatprep.mubr.f32.mxu0 %v431
      %1682 = vmatmul.mubr.f32.gmra.mrb[0].mxu0 %v383
      %v1683 = vpop.f32.mrb[0].mxu0
      %v1684 = vadd.f32 %v698, %v1683
      %v1685 = vpop.f32.mrb[0].mxu0
      %v1686 = vadd.f32 %v702, %v1685
      %1687 = vmatprep.mubr.f32.mxu0 %v432
      %1688 = vmatmul.mubr.f32.gmra.mrb[0].mxu0 %v384
      %v1689 = vpop.f32.mrb[0].mxu0
      %v1690 = vadd.f32 %v698, %v1689
      %v1691 = vpop.f32.mrb[0].mxu0
      %v1692 = vadd.f32 %v702, %v1691
      %1693 = vmatprep.mubr.f32.mxu0 %v433
      %1694 = vmatmul.mubr.f32.gmra.mrb[0].mxu0 %v385
      %v1695 = vpop.f32.mrb[0].mxu0
      %v1696 = vadd.f32 %v698, %v1695
      %v1697 = vpop.f32.mrb[0].mxu0
      %v1698 = vadd.f32 %v702, %v1697
      %1699 = vmatprep.mubr.f32.mxu0 %v434
      %1700 = vmatmul.mubr.f32.gmra.mrb[0].mxu0 %v386
      %v1701 = vpop.f32.mrb[0].mxu0
      %v1702 = vadd.f32 %v698, %v1701
      %v1703 = vpop.f32.mrb[0].mxu0
      %v1704 = vadd.f32 %v702, %v1703
      %1705 = vmatprep.mubr.f32.mxu0 %v435
      %1706 = vmatmul.mubr.f32.gmra.mrb[0].mxu0 %v387
      %v1707 = vpop.f32.mrb[0].mxu0
      %v1708 = vadd.f32 %v698, %v1707
      %v1709 = vpop.f32.mrb[0].mxu0
      %v1710 = vadd.f32 %v702, %v1709
      %1711 = vmatprep.mubr.f32.mxu0 %v436
      %1712 = vmatmul.mubr.f32.gmra.mrb[0].mxu0 %v388
      %v1713 = vpop.f32.mrb[0].mxu0
      %v1714 = vadd.f32 %v698, %v1713
      %v1715 = vpop.f32.mrb[0].mxu0
      %v1716 = vadd.f32 %v702, %v1715
      %1717 = vmatprep.mubr.f32.mxu0 %v437
      %1718 = vmatmul.mubr.f32.gmra.mrb[0].mxu0 %v389
      %v1719 = vpop.f32.mrb[0].mxu0
      %v1720 = vadd.f32 %v698, %v1719
      %v1721 = vpop.f32.mrb[0].mxu0
      %v1722 = vadd.f32 %v702, %v1721
      %1723 = vmatprep.mubr.f32.mxu0 %v438
      %1724 = vmatmul.mubr.f32.gmra.mrb[0].mxu0 %v390
      %v1725 = vpop.f32.mrb[0].mxu0
      %v1726 = vadd.f32 %v698, %v1725
      %v1727 = vpop.f32.mrb[0].mxu0
      %v1728 = vadd.f32 %v702, %v1727
      %1729 = vmatprep.mubr.f32.mxu0 %v439
      %1730 = vmatmul.mubr.f32.gmra.mrb[0].mxu0 %v391
      %v1731 = vpop.f32.mrb[0].mxu0
      %v1732 = vadd.f32 %v698, %v1731
      %v1733 = vpop.f32.mrb[0].mxu0
      %v1734 = vadd.f32 %v702, %v1733
      %1735 = vmatprep.mubr.f32.mxu0 %v440
      %1736 = vmatmul.mubr.f32.gmra.mrb[0].mxu0 %v392
      %v1737 = vpop.f32.mrb[0].mxu0
      %v1738 = vadd.f32 %v698, %v1737
      %v1739 = vpop.f32.mrb[0].mxu0
      %v1740 = vadd.f32 %v702, %v1739
      %1741 = vmatprep.mubr.f32.mxu0 %v441
      %1742 = vmatmul.mubr.f32.gmra.mrb[0].mxu0 %v393
      %v1743 = vpop.f32.mrb[0].mxu0
      %v1744 = vadd.f32 %v698, %v1743
      %v1745 = vpop.f32.mrb[0].mxu0
      %v1746 = vadd.f32 %v702, %v1745
      %1747 = vmatprep.mubr.f32.mxu0 %v442
      %1748 = vmatmul.mubr.f32.gmra.mrb[0].mxu0 %v394
      %v1749 = vpop.f32.mrb[0].mxu0
      %v1750 = vadd.f32 %v698, %v1749
      %v1751 = vpop.f32.mrb[0].mxu0
      %v1752 = vadd.f32 %v702, %v1751
      %1753 = vmatprep.mubr.f32.mxu0 %v443
      %1754 = vmatmul.mubr.f32.gmra.mrb[0].mxu0 %v395
      %v1755 = vpop.f32.mrb[0].mxu0
      %v1756 = vadd.f32 %v698, %v1755
      %v1757 = vpop.f32.mrb[0].mxu0
      %v1758 = vadd.f32 %v702, %v1757
      %1759 = vmatprep.mubr.f32.mxu0 %v444
      %1760 = vmatmul.mubr.f32.gmra.mrb[0].mxu0 %v396
      %v1761 = vpop.f32.mrb[0].mxu0
      %v1762 = vadd.f32 %v698, %v1761
      %v1763 = vpop.f32.mrb[0].mxu0
      %v1764 = vadd.f32 %v702, %v1763
      %1765 = vdwg.mxu0
      %1766 = vmatprep.subr.mxu0 %v624
      %1767 = vmatpush1.msra.mxu0 %v623
      %1768 = vmatprep.subr.mxu0 %v628
      %1769 = vmatpush1.msra.mxu0 %v627
      %1770 = vmatprep.subr.mxu0 %v632
      %1771 = vmatpush1.msra.mxu0 %v631
      %1772 = vmatprep.subr.mxu0 %v636
      %1773 = vmatpush1.msra.mxu0 %v635
      %1774 = vmatprep.subr.mxu0 %v640
      %1775 = vmatpush1.msra.mxu0 %v639
      %1776 = vmatprep.subr.mxu0 %v644
      %1777 = vmatpush1.msra.mxu0 %v643
      %1778 = vmatprep.subr.mxu0 %v648
      %1779 = vmatpush1.msra.mxu0 %v647
      %1780 = vmatprep.subr.mxu0 %v652
      %1781 = vmatpush1.msra.mxu0 %v651
      %1782 = vmatprep.subr.mxu0 %v656
      %1783 = vmatpush1.msra.mxu0 %v655
      %1784 = vmatprep.subr.mxu0 %v660
      %1785 = vmatpush1.msra.mxu0 %v659
      %1786 = vmatprep.subr.mxu0 %v664
      %1787 = vmatpush1.msra.mxu0 %v663
      %1788 = vmatprep.subr.mxu0 %v668
      %1789 = vmatpush1.msra.mxu0 %v667
      %1790 = vmatprep.subr.mxu0 %v672
      %1791 = vmatpush1.msra.mxu0 %v671
      %1792 = vmatprep.subr.mxu0 %v676
      %1793 = vmatpush1.msra.mxu0 %v675
      %1794 = vmatprep.subr.mxu0 %v680
      %1795 = vmatpush1.msra.mxu0 %v679
      %1796 = vmatprep.subr.mxu0 %v684
      %1797 = vmatpush1.msra.mxu0 %v683
      %1798 = vmatprep.subr.mxu0 0.0
      %1799 = vmatpush1.msra.mxu0 0.0
      %1800 = vmatprep.subr.mxu0 0.0
      %1801 = vmatpush1.msra.mxu0 0.0
      %1802 = vmatprep.subr.mxu0 0.0
      %1803 = vmatpush1.msra.mxu0 0.0
      %1804 = vmatprep.subr.mxu0 0.0
      %1805 = vmatpush1.msra.mxu0 0.0
      %1806 = vmatprep.subr.mxu0 0.0
      %1807 = vmatpush1.msra.mxu0 0.0
      %1808 = vmatprep.subr.mxu0 0.0
      %1809 = vmatpush1.msra.mxu0 0.0
      %1810 = vmatprep.subr.mxu0 0.0
      %1811 = vmatpush1.msra.mxu0 0.0
      %1812 = vmatprep.subr.mxu0 0.0
      %1813 = vmatpush1.msra.mxu0 0.0
      %1814 = vmatprep.subr.mxu0 0.0
      %1815 = vmatpush1.msra.mxu0 0.0
      %1816 = vmatprep.subr.mxu0 0.0
      %1817 = vmatpush1.msra.mxu0 0.0
      %1818 = vmatprep.subr.mxu0 0.0
      %1819 = vmatpush1.msra.mxu0 0.0
      %1820 = vmatprep.subr.mxu0 0.0
      %1821 = vmatpush1.msra.mxu0 0.0
      %1822 = vmatprep.subr.mxu0 0.0
      %1823 = vmatpush1.msra.mxu0 0.0
      %1824 = vmatprep.subr.mxu0 0.0
      %1825 = vmatpush1.msra.mxu0 0.0
      %1826 = vmatprep.subr.mxu0 0.0
      %1827 = vmatpush1.msra.mxu0 0.0
      %1828 = vmatprep.subr.mxu0 0.0
      %1829 = vmatpush1.msra.mxu0 0.0
      %1830 = vmatprep.mubr.f32.mxu0 0.0
      %1831 = vmatmul.mubr.f32.gmra.mrb[0].mxu0 %v445
      %v1832 = vpop.f32.mrb[0].mxu0
      %v1833 = vadd.f32 %v1480, %v1832
      %v1834 = vpop.f32.mrb[0].mxu0
      %v1835 = vadd.f32 %v1482, %v1834
      %1836 = vmatprep.mubr.f32.mxu0 0.0
      %1837 = vmatmul.mubr.f32.gmra.mrb[0].mxu0 %v446
      %v1838 = vpop.f32.mrb[0].mxu0
      %v1839 = vadd.f32 %v1486, %v1838
      %v1840 = vpop.f32.mrb[0].mxu0
      %v1841 = vadd.f32 %v1488, %v1840
      %1842 = vmatprep.mubr.f32.mxu0 0.0
      %1843 = vmatmul.mubr.f32.gmra.mrb[0].mxu0 %v447
      %v1844 = vpop.f32.mrb[0].mxu0
      %v1845 = vadd.f32 %v1492, %v1844
      %v1846 = vpop.f32.mrb[0].mxu0
      %v1847 = vadd.f32 %v1494, %v1846
      %1848 = vmatprep.mubr.f32.mxu0 0.0
      %1849 = vmatmul.mubr.f32.gmra.mrb[0].mxu0 %v448
      %v1850 = vpop.f32.mrb[0].mxu0
      %v1851 = vadd.f32 %v1498, %v1850
      %v1852 = vpop.f32.mrb[0].mxu0
      %v1853 = vadd.f32 %v1500, %v1852
      %1854 = vmatprep.mubr.f32.mxu0 0.0
      %1855 = vmatmul.mubr.f32.gmra.mrb[0].mxu0 %v449
      %v1856 = vpop.f32.mrb[0].mxu0
      %v1857 = vadd.f32 %v1504, %v1856
      %v1858 = vpop.f32.mrb[0].mxu0
      %v1859 = vadd.f32 %v1506, %v1858
      %1860 = vmatprep.mubr.f32.mxu0 0.0
      %1861 = vmatmul.mubr.f32.gmra.mrb[0].mxu0 %v450
      %v1862 = vpop.f32.mrb[0].mxu0
      %v1863 = vadd.f32 %v1510, %v1862
      %v1864 = vpop.f32.mrb[0].mxu0
      %v1865 = vadd.f32 %v1512, %v1864
      %1866 = vmatprep.mubr.f32.mxu0 0.0
      %1867 = vmatmul.mubr.f32.gmra.mrb[0].mxu0 %v451
      %v1868 = vpop.f32.mrb[0].mxu0
      %v1869 = vadd.f32 %v1516, %v1868
      %v1870 = vpop.f32.mrb[0].mxu0
      %v1871 = vadd.f32 %v1518, %v1870
      %1872 = vmatprep.mubr.f32.mxu0 0.0
      %1873 = vmatmul.mubr.f32.gmra.mrb[0].mxu0 %v452
      %v1874 = vpop.f32.mrb[0].mxu0
      %v1875 = vadd.f32 %v1522, %v1874
      %v1876 = vpop.f32.mrb[0].mxu0
      %v1877 = vadd.f32 %v1524, %v1876
      %1878 = vmatprep.mubr.f32.mxu0 0.0
      %1879 = vmatmul.mubr.f32.gmra.mrb[0].mxu0 %v453
      %v1880 = vpop.f32.mrb[0].mxu0
      %v1881 = vadd.f32 %v1528, %v1880
      %v1882 = vpop.f32.mrb[0].mxu0
      %v1883 = vadd.f32 %v1530, %v1882
      %1884 = vmatprep.mubr.f32.mxu0 0.0
      %1885 = vmatmul.mubr.f32.gmra.mrb[0].mxu0 %v454
      %v1886 = vpop.f32.mrb[0].mxu0
      %v1887 = vadd.f32 %v1534, %v1886
      %v1888 = vpop.f32.mrb[0].mxu0
      %v1889 = vadd.f32 %v1536, %v1888
      %1890 = vmatprep.mubr.f32.mxu0 0.0
      %1891 = vmatmul.mubr.f32.gmra.mrb[0].mxu0 %v455
      %v1892 = vpop.f32.mrb[0].mxu0
      %v1893 = vadd.f32 %v1540, %v1892
      %v1894 = vpop.f32.mrb[0].mxu0
      %v1895 = vadd.f32 %v1542, %v1894
      %1896 = vmatprep.mubr.f32.mxu0 0.0
      %1897 = vmatmul.mubr.f32.gmra.mrb[0].mxu0 %v456
      %v1898 = vpop.f32.mrb[0].mxu0
      %v1899 = vadd.f32 %v1546, %v1898
      %v1900 = vpop.f32.mrb[0].mxu0
      %v1901 = vadd.f32 %v1548, %v1900
      %1902 = vmatprep.mubr.f32.mxu0 0.0
      %1903 = vmatmul.mubr.f32.gmra.mrb[0].mxu0 %v457
      %v1904 = vpop.f32.mrb[0].mxu0
      %v1905 = vadd.f32 %v1552, %v1904
      %v1906 = vpop.f32.mrb[0].mxu0
      %v1907 = vadd.f32 %v1554, %v1906
      %1908 = vmatprep.mubr.f32.mxu0 0.0
      %1909 = vmatmul.mubr.f32.gmra.mrb[0].mxu0 %v458
      %v1910 = vpop.f32.mrb[0].mxu0
      %v1911 = vadd.f32 %v1558, %v1910
      %v1912 = vpop.f32.mrb[0].mxu0
      %v1913 = vadd.f32 %v1560, %v1912
      %1914 = vmatprep.mubr.f32.mxu0 0.0
      %1915 = vmatmul.mubr.f32.gmra.mrb[0].mxu0 %v459
      %v1916 = vpop.f32.mrb[0].mxu0
      %v1917 = vadd.f32 %v1564, %v1916
      %v1918 = vpop.f32.mrb[0].mxu0
      %v1919 = vadd.f32 %v1566, %v1918
      %1920 = vmatprep.mubr.f32.mxu0 0.0
      %1921 = vmatmul.mubr.f32.gmra.mrb[0].mxu0 %v460
      %v1922 = vpop.f32.mrb[0].mxu0
      %v1923 = vadd.f32 %v1570, %v1922
      %v1924 = vpop.f32.mrb[0].mxu0
      %v1925 = vadd.f32 %v1572, %v1924
      %1926 = vmatprep.mubr.f32.mxu0 0.0
      %1927 = vmatmul.mubr.f32.gmra.mrb[0].mxu0 %v461
      %v1928 = vpop.f32.mrb[0].mxu0
      %v1929 = vadd.f32 %v1576, %v1928
      %v1930 = vpop.f32.mrb[0].mxu0
      %v1931 = vadd.f32 %v1578, %v1930
      %1932 = vmatprep.mubr.f32.mxu0 0.0
      %1933 = vmatmul.mubr.f32.gmra.mrb[0].mxu0 %v462
      %v1934 = vpop.f32.mrb[0].mxu0
      %v1935 = vadd.f32 %v1582, %v1934
      %v1936 = vpop.f32.mrb[0].mxu0
      %v1937 = vadd.f32 %v1584, %v1936
      %1938 = vmatprep.mubr.f32.mxu0 0.0
      %1939 = vmatmul.mubr.f32.gmra.mrb[0].mxu0 %v463
      %v1940 = vpop.f32.mrb[0].mxu0
      %v1941 = vadd.f32 %v1588, %v1940
      %v1942 = vpop.f32.mrb[0].mxu0
      %v1943 = vadd.f32 %v1590, %v1942
      %1944 = vmatprep.mubr.f32.mxu0 0.0
      %1945 = vmatmul.mubr.f32.gmra.mrb[0].mxu0 %v464
      %v1946 = vpop.f32.mrb[0].mxu0
      %v1947 = vadd.f32 %v1594, %v1946
      %v1948 = vpop.f32.mrb[0].mxu0
      %v1949 = vadd.f32 %v1596, %v1948
      %1950 = vmatprep.mubr.f32.mxu0 0.0
      %1951 = vmatmul.mubr.f32.gmra.mrb[0].mxu0 %v465
      %v1952 = vpop.f32.mrb[0].mxu0
      %v1953 = vadd.f32 %v1600, %v1952
      %v1954 = vpop.f32.mrb[0].mxu0
      %v1955 = vadd.f32 %v1602, %v1954
      %1956 = vmatprep.mubr.f32.mxu0 0.0
      %1957 = vmatmul.mubr.f32.gmra.mrb[0].mxu0 %v466
      %v1958 = vpop.f32.mrb[0].mxu0
      %v1959 = vadd.f32 %v1606, %v1958
      %v1960 = vpop.f32.mrb[0].mxu0
      %v1961 = vadd.f32 %v1608, %v1960
      %1962 = vmatprep.mubr.f32.mxu0 0.0
      %1963 = vmatmul.mubr.f32.gmra.mrb[0].mxu0 %v467
      %v1964 = vpop.f32.mrb[0].mxu0
      %v1965 = vadd.f32 %v1612, %v1964
      %v1966 = vpop.f32.mrb[0].mxu0
      %v1967 = vadd.f32 %v1614, %v1966
      %1968 = vmatprep.mubr.f32.mxu0 0.0
      %1969 = vmatmul.mubr.f32.gmra.mrb[0].mxu0 %v468
      %v1970 = vpop.f32.mrb[0].mxu0
      %v1971 = vadd.f32 %v1618, %v1970
      %v1972 = vpop.f32.mrb[0].mxu0
      %v1973 = vadd.f32 %v1620, %v1972
      %1974 = vmatprep.mubr.f32.mxu0 0.0
      %1975 = vmatmul.mubr.f32.gmra.mrb[0].mxu0 %v469
      %v1976 = vpop.f32.mrb[0].mxu0
      %v1977 = vadd.f32 %v1624, %v1976
      %v1978 = vpop.f32.mrb[0].mxu0
      %v1979 = vadd.f32 %v1626, %v1978
      %1980 = vmatprep.mubr.f32.mxu0 0.0
      %1981 = vmatmul.mubr.f32.gmra.mrb[0].mxu0 %v470
      %v1982 = vpop.f32.mrb[0].mxu0
      %v1983 = vadd.f32 %v1630, %v1982
      %v1984 = vpop.f32.mrb[0].mxu0
      %v1985 = vadd.f32 %v1632, %v1984
      %1986 = vmatprep.mubr.f32.mxu0 0.0
      %1987 = vmatmul.mubr.f32.gmra.mrb[0].mxu0 %v471
      %v1988 = vpop.f32.mrb[0].mxu0
      %v1989 = vadd.f32 %v1636, %v1988
      %v1990 = vpop.f32.mrb[0].mxu0
      %v1991 = vadd.f32 %v1638, %v1990
      %1992 = vmatprep.mubr.f32.mxu0 0.0
      %1993 = vmatmul.mubr.f32.gmra.mrb[0].mxu0 %v472
      %v1994 = vpop.f32.mrb[0].mxu0
      %v1995 = vadd.f32 %v1642, %v1994
      %v1996 = vpop.f32.mrb[0].mxu0
      %v1997 = vadd.f32 %v1644, %v1996
      %1998 = vmatprep.mubr.f32.mxu0 0.0
      %1999 = vmatmul.mubr.f32.gmra.mrb[0].mxu0 %v473
      %v2000 = vpop.f32.mrb[0].mxu0
      %v2001 = vadd.f32 %v1648, %v2000
      %v2002 = vpop.f32.mrb[0].mxu0
      %v2003 = vadd.f32 %v1650, %v2002
      %2004 = vmatprep.mubr.f32.mxu0 0.0
      %2005 = vmatmul.mubr.f32.gmra.mrb[0].mxu0 %v474
      %v2006 = vpop.f32.mrb[0].mxu0
      %v2007 = vadd.f32 %v1654, %v2006
      %v2008 = vpop.f32.mrb[0].mxu0
      %v2009 = vadd.f32 %v1656, %v2008
      %2010 = vmatprep.mubr.f32.mxu0 0.0
      %2011 = vmatmul.mubr.f32.gmra.mrb[0].mxu0 %v475
      %v2012 = vpop.f32.mrb[0].mxu0
      %v2013 = vadd.f32 %v1660, %v2012
      %v2014 = vpop.f32.mrb[0].mxu0
      %v2015 = vadd.f32 %v1662, %v2014
      %2016 = vmatprep.mubr.f32.mxu0 0.0
      %2017 = vmatmul.mubr.f32.gmra.mrb[0].mxu0 %v476
      %v2018 = vpop.f32.mrb[0].mxu0
      %v2019 = vadd.f32 %v1666, %v2018
      %v2020 = vpop.f32.mrb[0].mxu0
      %v2021 = vadd.f32 %v1668, %v2020
      %2022 = vmatprep.mubr.f32.mxu0 0.0
      %2023 = vmatmul.mubr.f32.gmra.mrb[0].mxu0 %v477
      %v2024 = vpop.f32.mrb[0].mxu0
      %v2025 = vadd.f32 %v1672, %v2024
      %v2026 = vpop.f32.mrb[0].mxu0
      %v2027 = vadd.f32 %v1674, %v2026
      %2028 = vmatprep.mubr.f32.mxu0 0.0
      %2029 = vmatmul.mubr.f32.gmra.mrb[0].mxu0 %v478
      %v2030 = vpop.f32.mrb[0].mxu0
      %v2031 = vadd.f32 %v1678, %v2030
      %v2032 = vpop.f32.mrb[0].mxu0
      %v2033 = vadd.f32 %v1680, %v2032
      %2034 = vmatprep.mubr.f32.mxu0 0.0
      %2035 = vmatmul.mubr.f32.gmra.mrb[0].mxu0 %v479
      %v2036 = vpop.f32.mrb[0].mxu0
      %v2037 = vadd.f32 %v1684, %v2036
      %v2038 = vpop.f32.mrb[0].mxu0
      %v2039 = vadd.f32 %v1686, %v2038
      %2040 = vmatprep.mubr.f32.mxu0 0.0
      %2041 = vmatmul.mubr.f32.gmra.mrb[0].mxu0 %v480
      %v2042 = vpop.f32.mrb[0].mxu0
      %v2043 = vadd.f32 %v1690, %v2042
      %v2044 = vpop.f32.mrb[0].mxu0
      %v2045 = vadd.f32 %v1692, %v2044
      %2046 = vmatprep.mubr.f32.mxu0 0.0
      %2047 = vmatmul.mubr.f32.gmra.mrb[0].mxu0 %v481
      %v2048 = vpop.f32.mrb[0].mxu0
      %v2049 = vadd.f32 %v1696, %v2048
      %v2050 = vpop.f32.mrb[0].mxu0
      %v2051 = vadd.f32 %v1698, %v2050
      %2052 = vmatprep.mubr.f32.mxu0 0.0
      %2053 = vmatmul.mubr.f32.gmra.mrb[0].mxu0 %v482
      %v2054 = vpop.f32.mrb[0].mxu0
      %v2055 = vadd.f32 %v1702, %v2054
      %v2056 = vpop.f32.mrb[0].mxu0
      %v2057 = vadd.f32 %v1704, %v2056
      %2058 = vmatprep.mubr.f32.mxu0 0.0
      %2059 = vmatmul.mubr.f32.gmra.mrb[0].mxu0 %v483
      %v2060 = vpop.f32.mrb[0].mxu0
      %v2061 = vadd.f32 %v1708, %v2060
      %v2062 = vpop.f32.mrb[0].mxu0
      %v2063 = vadd.f32 %v1710, %v2062
      %2064 = vmatprep.mubr.f32.mxu0 0.0
      %2065 = vmatmul.mubr.f32.gmra.mrb[0].mxu0 %v484
      %v2066 = vpop.f32.mrb[0].mxu0
      %v2067 = vadd.f32 %v1714, %v2066
      %v2068 = vpop.f32.mrb[0].mxu0
      %v2069 = vadd.f32 %v1716, %v2068
      %2070 = vmatprep.mubr.f32.mxu0 0.0
      %2071 = vmatmul.mubr.f32.gmra.mrb[0].mxu0 %v485
      %v2072 = vpop.f32.mrb[0].mxu0
      %v2073 = vadd.f32 %v1720, %v2072
      %v2074 = vpop.f32.mrb[0].mxu0
      %v2075 = vadd.f32 %v1722, %v2074
      %2076 = vmatprep.mubr.f32.mxu0 0.0
      %2077 = vmatmul.mubr.f32.gmra.mrb[0].mxu0 %v486
      %v2078 = vpop.f32.mrb[0].mxu0
      %v2079 = vadd.f32 %v1726, %v2078
      %v2080 = vpop.f32.mrb[0].mxu0
      %v2081 = vadd.f32 %v1728, %v2080
      %2082 = vmatprep.mubr.f32.mxu0 0.0
      %2083 = vmatmul.mubr.f32.gmra.mrb[0].mxu0 %v487
      %v2084 = vpop.f32.mrb[0].mxu0
      %v2085 = vadd.f32 %v1732, %v2084
      %v2086 = vpop.f32.mrb[0].mxu0
      %v2087 = vadd.f32 %v1734, %v2086
      %2088 = vmatprep.mubr.f32.mxu0 0.0
      %2089 = vmatmul.mubr.f32.gmra.mrb[0].mxu0 %v488
      %v2090 = vpop.f32.mrb[0].mxu0
      %v2091 = vadd.f32 %v1738, %v2090
      %v2092 = vpop.f32.mrb[0].mxu0
      %v2093 = vadd.f32 %v1740, %v2092
      %2094 = vmatprep.mubr.f32.mxu0 0.0
      %2095 = vmatmul.mubr.f32.gmra.mrb[0].mxu0 %v489
      %v2096 = vpop.f32.mrb[0].mxu0
      %v2097 = vadd.f32 %v1744, %v2096
      %v2098 = vpop.f32.mrb[0].mxu0
      %v2099 = vadd.f32 %v1746, %v2098
      %2100 = vmatprep.mubr.f32.mxu0 0.0
      %2101 = vmatmul.mubr.f32.gmra.mrb[0].mxu0 %v490
      %v2102 = vpop.f32.mrb[0].mxu0
      %v2103 = vadd.f32 %v1750, %v2102
      %v2104 = vpop.f32.mrb[0].mxu0
      %v2105 = vadd.f32 %v1752, %v2104
      %2106 = vmatprep.mubr.f32.mxu0 0.0
      %2107 = vmatmul.mubr.f32.gmra.mrb[0].mxu0 %v491
      %v2108 = vpop.f32.mrb[0].mxu0
      %v2109 = vadd.f32 %v1756, %v2108
      %v2110 = vpop.f32.mrb[0].mxu0
      %v2111 = vadd.f32 %v1758, %v2110
      %2112 = vmatprep.mubr.f32.mxu0 0.0
      %2113 = vmatmul.mubr.f32.gmra.mrb[0].mxu0 %v492
      %v2114 = vpop.f32.mrb[0].mxu0
      %v2115 = vadd.f32 %v1762, %v2114
      %v2116 = vpop.f32.mrb[0].mxu0
      %v2117 = vadd.f32 %v1764, %v2116
      %2118 = vdwg.mxu0
      %v2119 = vmax.f32 %v1127, 0.0
      %v2120 = vmax.f32 %v1129, 0.0
      %v2121 = vmax.f32 %v1833, 0.0
      %v2122 = vmax.f32 %v1835, 0.0
      %v2123 = vmax.f32 %v1133, 0.0
      %v2124 = vmax.f32 %v1135, 0.0
      %v2125 = vmax.f32 %v1839, 0.0
      %v2126 = vmax.f32 %v1841, 0.0
      %v2127 = vmax.f32 %v1139, 0.0
      %v2128 = vmax.f32 %v1141, 0.0
      %v2129 = vmax.f32 %v1845, 0.0
      %v2130 = vmax.f32 %v1847, 0.0
      %v2131 = vmax.f32 %v1145, 0.0
      %v2132 = vmax.f32 %v1147, 0.0
      %v2133 = vmax.f32 %v1851, 0.0
      %v2134 = vmax.f32 %v1853, 0.0
      %v2135 = vmax.f32 %v1151, 0.0
      %v2136 = vmax.f32 %v1153, 0.0
      %v2137 = vmax.f32 %v1857, 0.0
      %v2138 = vmax.f32 %v1859, 0.0
      %v2139 = vmax.f32 %v1157, 0.0
      %v2140 = vmax.f32 %v1159, 0.0
      %v2141 = vmax.f32 %v1863, 0.0
      %v2142 = vmax.f32 %v1865, 0.0
      %v2143 = vmax.f32 %v1163, 0.0
      %v2144 = vmax.f32 %v1165, 0.0
      %v2145 = vmax.f32 %v1869, 0.0
      %v2146 = vmax.f32 %v1871, 0.0
      %v2147 = vmax.f32 %v1169, 0.0
      %v2148 = vmax.f32 %v1171, 0.0
      %v2149 = vmax.f32 %v1875, 0.0
      %v2150 = vmax.f32 %v1877, 0.0
      %v2151 = vmax.f32 %v1175, 0.0
      %v2152 = vmax.f32 %v1177, 0.0
      %v2153 = vmax.f32 %v1881, 0.0
      %v2154 = vmax.f32 %v1883, 0.0
      %v2155 = vmax.f32 %v1181, 0.0
      %v2156 = vmax.f32 %v1183, 0.0
      %v2157 = vmax.f32 %v1887, 0.0
      %v2158 = vmax.f32 %v1889, 0.0
      %v2159 = vmax.f32 %v1187, 0.0
      %v2160 = vmax.f32 %v1189, 0.0
      %v2161 = vmax.f32 %v1893, 0.0
      %v2162 = vmax.f32 %v1895, 0.0
      %v2163 = vmax.f32 %v1193, 0.0
      %v2164 = vmax.f32 %v1195, 0.0
      %v2165 = vmax.f32 %v1899, 0.0
      %v2166 = vmax.f32 %v1901, 0.0
      %v2167 = vmax.f32 %v1199, 0.0
      %v2168 = vmax.f32 %v1201, 0.0
      %v2169 = vmax.f32 %v1905, 0.0
      %v2170 = vmax.f32 %v1907, 0.0
      %v2171 = vmax.f32 %v1205, 0.0
      %v2172 = vmax.f32 %v1207, 0.0
      %v2173 = vmax.f32 %v1911, 0.0
      %v2174 = vmax.f32 %v1913, 0.0
      %v2175 = vmax.f32 %v1211, 0.0
      %v2176 = vmax.f32 %v1213, 0.0
      %v2177 = vmax.f32 %v1917, 0.0
      %v2178 = vmax.f32 %v1919, 0.0
      %v2179 = vmax.f32 %v1217, 0.0
      %v2180 = vmax.f32 %v1219, 0.0
      %v2181 = vmax.f32 %v1923, 0.0
      %v2182 = vmax.f32 %v1925, 0.0
      %v2183 = vmax.f32 %v1223, 0.0
      %v2184 = vmax.f32 %v1225, 0.0
      %v2185 = vmax.f32 %v1929, 0.0
      %v2186 = vmax.f32 %v1931, 0.0
      %v2187 = vmax.f32 %v1229, 0.0
      %v2188 = vmax.f32 %v1231, 0.0
      %v2189 = vmax.f32 %v1935, 0.0
      %v2190 = vmax.f32 %v1937, 0.0
      %v2191 = vmax.f32 %v1235, 0.0
      %v2192 = vmax.f32 %v1237, 0.0
      %v2193 = vmax.f32 %v1941, 0.0
      %v2194 = vmax.f32 %v1943, 0.0
      %v2195 = vmax.f32 %v1241, 0.0
      %v2196 = vmax.f32 %v1243, 0.0
      %v2197 = vmax.f32 %v1947, 0.0
      %v2198 = vmax.f32 %v1949, 0.0
      %v2199 = vmax.f32 %v1247, 0.0
      %v2200 = vmax.f32 %v1249, 0.0
      %v2201 = vmax.f32 %v1953, 0.0
      %v2202 = vmax.f32 %v1955, 0.0
      %v2203 = vmax.f32 %v1253, 0.0
      %v2204 = vmax.f32 %v1255, 0.0
      %v2205 = vmax.f32 %v1959, 0.0
      %v2206 = vmax.f32 %v1961, 0.0
      %v2207 = vmax.f32 %v1259, 0.0
      %v2208 = vmax.f32 %v1261, 0.0
      %v2209 = vmax.f32 %v1965, 0.0
      %v2210 = vmax.f32 %v1967, 0.0
      %v2211 = vmax.f32 %v1265, 0.0
      %v2212 = vmax.f32 %v1267, 0.0
      %v2213 = vmax.f32 %v1971, 0.0
      %v2214 = vmax.f32 %v1973, 0.0
      %v2215 = vmax.f32 %v1271, 0.0
      %v2216 = vmax.f32 %v1273, 0.0
      %v2217 = vmax.f32 %v1977, 0.0
      %v2218 = vmax.f32 %v1979, 0.0
      %v2219 = vmax.f32 %v1277, 0.0
      %v2220 = vmax.f32 %v1279, 0.0
      %v2221 = vmax.f32 %v1983, 0.0
      %v2222 = vmax.f32 %v1985, 0.0
      %v2223 = vmax.f32 %v1283, 0.0
      %v2224 = vmax.f32 %v1285, 0.0
      %v2225 = vmax.f32 %v1989, 0.0
      %v2226 = vmax.f32 %v1991, 0.0
      %v2227 = vmax.f32 %v1289, 0.0
      %v2228 = vmax.f32 %v1291, 0.0
      %v2229 = vmax.f32 %v1995, 0.0
      %v2230 = vmax.f32 %v1997, 0.0
      %v2231 = vmax.f32 %v1295, 0.0
      %v2232 = vmax.f32 %v1297, 0.0
      %v2233 = vmax.f32 %v2001, 0.0
      %v2234 = vmax.f32 %v2003, 0.0
      %v2235 = vmax.f32 %v1301, 0.0
      %v2236 = vmax.f32 %v1303, 0.0
      %v2237 = vmax.f32 %v2007, 0.0
      %v2238 = vmax.f32 %v2009, 0.0
      %v2239 = vmax.f32 %v1307, 0.0
      %v2240 = vmax.f32 %v1309, 0.0
      %v2241 = vmax.f32 %v2013, 0.0
      %v2242 = vmax.f32 %v2015, 0.0
      %v2243 = vmax.f32 %v1313, 0.0
      %v2244 = vmax.f32 %v1315, 0.0
      %v2245 = vmax.f32 %v2019, 0.0
      %v2246 = vmax.f32 %v2021, 0.0
      %v2247 = vmax.f32 %v1319, 0.0
      %v2248 = vmax.f32 %v1321, 0.0
      %v2249 = vmax.f32 %v2025, 0.0
      %v2250 = vmax.f32 %v2027, 0.0
      %v2251 = vmax.f32 %v1325, 0.0
      %v2252 = vmax.f32 %v1327, 0.0
      %v2253 = vmax.f32 %v2031, 0.0
      %v2254 = vmax.f32 %v2033, 0.0
      %v2255 = vmax.f32 %v1331, 0.0
      %v2256 = vmax.f32 %v1333, 0.0
      %v2257 = vmax.f32 %v2037, 0.0
      %v2258 = vmax.f32 %v2039, 0.0
      %v2259 = vmax.f32 %v1337, 0.0
      %v2260 = vmax.f32 %v1339, 0.0
      %v2261 = vmax.f32 %v2043, 0.0
      %v2262 = vmax.f32 %v2045, 0.0
      %v2263 = vmax.f32 %v1343, 0.0
      %v2264 = vmax.f32 %v1345, 0.0
      %v2265 = vmax.f32 %v2049, 0.0
      %v2266 = vmax.f32 %v2051, 0.0
      %v2267 = vmax.f32 %v1349, 0.0
      %v2268 = vmax.f32 %v1351, 0.0
      %v2269 = vmax.f32 %v2055, 0.0
      %v2270 = vmax.f32 %v2057, 0.0
      %v2271 = vmax.f32 %v1355, 0.0
      %v2272 = vmax.f32 %v1357, 0.0
      %v2273 = vmax.f32 %v2061, 0.0
      %v2274 = vmax.f32 %v2063, 0.0
      %v2275 = vmax.f32 %v1361, 0.0
      %v2276 = vmax.f32 %v1363, 0.0
      %v2277 = vmax.f32 %v2067, 0.0
      %v2278 = vmax.f32 %v2069, 0.0
      %v2279 = vmax.f32 %v1367, 0.0
      %v2280 = vmax.f32 %v1369, 0.0
      %v2281 = vmax.f32 %v2073, 0.0
      %v2282 = vmax.f32 %v2075, 0.0
      %v2283 = vmax.f32 %v1373, 0.0
      %v2284 = vmax.f32 %v1375, 0.0
      %v2285 = vmax.f32 %v2079, 0.0
      %v2286 = vmax.f32 %v2081, 0.0
      %v2287 = vmax.f32 %v1379, 0.0
      %v2288 = vmax.f32 %v1381, 0.0
      %v2289 = vmax.f32 %v2085, 0.0
      %v2290 = vmax.f32 %v2087, 0.0
      %v2291 = vmax.f32 %v1385, 0.0
      %v2292 = vmax.f32 %v1387, 0.0
      %v2293 = vmax.f32 %v2091, 0.0
      %v2294 = vmax.f32 %v2093, 0.0
      %v2295 = vmax.f32 %v1391, 0.0
      %v2296 = vmax.f32 %v1393, 0.0
      %v2297 = vmax.f32 %v2097, 0.0
      %v2298 = vmax.f32 %v2099, 0.0
      %v2299 = vmax.f32 %v1397, 0.0
      %v2300 = vmax.f32 %v1399, 0.0
      %v2301 = vmax.f32 %v2103, 0.0
      %v2302 = vmax.f32 %v2105, 0.0
      %v2303 = vmax.f32 %v1403, 0.0
      %v2304 = vmax.f32 %v1405, 0.0
      %v2305 = vmax.f32 %v2109, 0.0
      %v2306 = vmax.f32 %v2111, 0.0
      %v2307 = vmax.f32 %v1409, 0.0
      %v2308 = vmax.f32 %v1411, 0.0
      %v2309 = vmax.f32 %v2115, 0.0
      %v2310 = vmax.f32 %v2117, 0.0
      %v2311 = vadd.f32 %v2119, %v2123
      %v2312 = vrot.slane %v2311, 4
      %v2313 = vadd.f32 %v2311, %v2312
      %v2314 = vrot.slane %v2313, 2
      %v2315 = vadd.f32 %v2313, %v2314
      %v2316 = vrot.slane %v2315, 1
      %v2317 = vadd.f32 %v2315, %v2316
      %v2318 = vadd.f32 %v2120, %v2124
      %v2319 = vrot.slane %v2318, 4
      %v2320 = vadd.f32 %v2318, %v2319
      %v2321 = vrot.slane %v2320, 2
      %v2322 = vadd.f32 %v2320, %v2321
      %v2323 = vrot.slane %v2322, 1
      %v2324 = vadd.f32 %v2322, %v2323
      %v2325 = vadd.f32 %v2121, %v2125
      %v2326 = vrot.slane %v2325, 4
      %v2327 = vadd.f32 %v2325, %v2326
      %v2328 = vrot.slane %v2327, 2
      %v2329 = vadd.f32 %v2327, %v2328
      %v2330 = vrot.slane %v2329, 1
      %v2331 = vadd.f32 %v2329, %v2330
      %v2332 = vadd.f32 %v2122, %v2126
      %v2333 = vrot.slane %v2332, 4
      %v2334 = vadd.f32 %v2332, %v2333
      %v2335 = vrot.slane %v2334, 2
      %v2336 = vadd.f32 %v2334, %v2335
      %v2337 = vrot.slane %v2336, 1
      %v2338 = vadd.f32 %v2336, %v2337
      %v2339 = vadd.f32 %v2127, %v2131
      %v2340 = vrot.slane %v2339, 4
      %v2341 = vadd.f32 %v2339, %v2340
      %v2342 = vrot.slane %v2341, 2
      %v2343 = vadd.f32 %v2341, %v2342
      %v2344 = vrot.slane %v2343, 1
      %v2345 = vadd.f32 %v2343, %v2344
      %v2346 = vadd.f32 %v2128, %v2132
      %v2347 = vrot.slane %v2346, 4
      %v2348 = vadd.f32 %v2346, %v2347
      %v2349 = vrot.slane %v2348, 2
      %v2350 = vadd.f32 %v2348, %v2349
      %v2351 = vrot.slane %v2350, 1
      %v2352 = vadd.f32 %v2350, %v2351
      %v2353 = vadd.f32 %v2129, %v2133
      %v2354 = vrot.slane %v2353, 4
      %v2355 = vadd.f32 %v2353, %v2354
      %v2356 = vrot.slane %v2355, 2
      %v2357 = vadd.f32 %v2355, %v2356
      %v2358 = vrot.slane %v2357, 1
      %v2359 = vadd.f32 %v2357, %v2358
      %v2360 = vadd.f32 %v2130, %v2134
      %v2361 = vrot.slane %v2360, 4
      %v2362 = vadd.f32 %v2360, %v2361
      %v2363 = vrot.slane %v2362, 2
      %v2364 = vadd.f32 %v2362, %v2363
      %v2365 = vrot.slane %v2364, 1
      %v2366 = vadd.f32 %v2364, %v2365
      %v2367 = vadd.f32 %v2135, %v2139
      %v2368 = vrot.slane %v2367, 4
      %v2369 = vadd.f32 %v2367, %v2368
      %v2370 = vrot.slane %v2369, 2
      %v2371 = vadd.f32 %v2369, %v2370
      %v2372 = vrot.slane %v2371, 1
      %v2373 = vadd.f32 %v2371, %v2372
      %v2374 = vadd.f32 %v2136, %v2140
      %v2375 = vrot.slane %v2374, 4
      %v2376 = vadd.f32 %v2374, %v2375
      %v2377 = vrot.slane %v2376, 2
      %v2378 = vadd.f32 %v2376, %v2377
      %v2379 = vrot.slane %v2378, 1
      %v2380 = vadd.f32 %v2378, %v2379
      %v2381 = vadd.f32 %v2137, %v2141
      %v2382 = vrot.slane %v2381, 4
      %v2383 = vadd.f32 %v2381, %v2382
      %v2384 = vrot.slane %v2383, 2
      %v2385 = vadd.f32 %v2383, %v2384
      %v2386 = vrot.slane %v2385, 1
      %v2387 = vadd.f32 %v2385, %v2386
      %v2388 = vadd.f32 %v2138, %v2142
      %v2389 = vrot.slane %v2388, 4
      %v2390 = vadd.f32 %v2388, %v2389
      %v2391 = vrot.slane %v2390, 2
      %v2392 = vadd.f32 %v2390, %v2391
      %v2393 = vrot.slane %v2392, 1
      %v2394 = vadd.f32 %v2392, %v2393
      %v2395 = vadd.f32 %v2143, %v2147
      %v2396 = vrot.slane %v2395, 4
      %v2397 = vadd.f32 %v2395, %v2396
      %v2398 = vrot.slane %v2397, 2
      %v2399 = vadd.f32 %v2397, %v2398
      %v2400 = vrot.slane %v2399, 1
      %v2401 = vadd.f32 %v2399, %v2400
      %v2402 = vadd.f32 %v2144, %v2148
      %v2403 = vrot.slane %v2402, 4
      %v2404 = vadd.f32 %v2402, %v2403
      %v2405 = vrot.slane %v2404, 2
      %v2406 = vadd.f32 %v2404, %v2405
      %v2407 = vrot.slane %v2406, 1
      %v2408 = vadd.f32 %v2406, %v2407
      %v2409 = vadd.f32 %v2145, %v2149
      %v2410 = vrot.slane %v2409, 4
      %v2411 = vadd.f32 %v2409, %v2410
      %v2412 = vrot.slane %v2411, 2
      %v2413 = vadd.f32 %v2411, %v2412
      %v2414 = vrot.slane %v2413, 1
      %v2415 = vadd.f32 %v2413, %v2414
      %v2416 = vadd.f32 %v2146, %v2150
      %v2417 = vrot.slane %v2416, 4
      %v2418 = vadd.f32 %v2416, %v2417
      %v2419 = vrot.slane %v2418, 2
      %v2420 = vadd.f32 %v2418, %v2419
      %v2421 = vrot.slane %v2420, 1
      %v2422 = vadd.f32 %v2420, %v2421
      %v2423 = vadd.f32 %v2151, %v2155
      %v2424 = vrot.slane %v2423, 4
      %v2425 = vadd.f32 %v2423, %v2424
      %v2426 = vrot.slane %v2425, 2
      %v2427 = vadd.f32 %v2425, %v2426
      %v2428 = vrot.slane %v2427, 1
      %v2429 = vadd.f32 %v2427, %v2428
      %v2430 = vadd.f32 %v2152, %v2156
      %v2431 = vrot.slane %v2430, 4
      %v2432 = vadd.f32 %v2430, %v2431
      %v2433 = vrot.slane %v2432, 2
      %v2434 = vadd.f32 %v2432, %v2433
      %v2435 = vrot.slane %v2434, 1
      %v2436 = vadd.f32 %v2434, %v2435
      %v2437 = vadd.f32 %v2153, %v2157
      %v2438 = vrot.slane %v2437, 4
      %v2439 = vadd.f32 %v2437, %v2438
      %v2440 = vrot.slane %v2439, 2
      %v2441 = vadd.f32 %v2439, %v2440
      %v2442 = vrot.slane %v2441, 1
      %v2443 = vadd.f32 %v2441, %v2442
      %v2444 = vadd.f32 %v2154, %v2158
      %v2445 = vrot.slane %v2444, 4
      %v2446 = vadd.f32 %v2444, %v2445
      %v2447 = vrot.slane %v2446, 2
      %v2448 = vadd.f32 %v2446, %v2447
      %v2449 = vrot.slane %v2448, 1
      %v2450 = vadd.f32 %v2448, %v2449
      %v2451 = vadd.f32 %v2159, %v2163
      %v2452 = vrot.slane %v2451, 4
      %v2453 = vadd.f32 %v2451, %v2452
      %v2454 = vrot.slane %v2453, 2
      %v2455 = vadd.f32 %v2453, %v2454
      %v2456 = vrot.slane %v2455, 1
      %v2457 = vadd.f32 %v2455, %v2456
      %v2458 = vadd.f32 %v2160, %v2164
      %v2459 = vrot.slane %v2458, 4
      %v2460 = vadd.f32 %v2458, %v2459
      %v2461 = vrot.slane %v2460, 2
      %v2462 = vadd.f32 %v2460, %v2461
      %v2463 = vrot.slane %v2462, 1
      %v2464 = vadd.f32 %v2462, %v2463
      %v2465 = vadd.f32 %v2161, %v2165
      %v2466 = vrot.slane %v2465, 4
      %v2467 = vadd.f32 %v2465, %v2466
      %v2468 = vrot.slane %v2467, 2
      %v2469 = vadd.f32 %v2467, %v2468
      %v2470 = vrot.slane %v2469, 1
      %v2471 = vadd.f32 %v2469, %v2470
      %v2472 = vadd.f32 %v2162, %v2166
      %v2473 = vrot.slane %v2472, 4
      %v2474 = vadd.f32 %v2472, %v2473
      %v2475 = vrot.slane %v2474, 2
      %v2476 = vadd.f32 %v2474, %v2475
      %v2477 = vrot.slane %v2476, 1
      %v2478 = vadd.f32 %v2476, %v2477
      %v2479 = vadd.f32 %v2167, %v2171
      %v2480 = vrot.slane %v2479, 4
      %v2481 = vadd.f32 %v2479, %v2480
      %v2482 = vrot.slane %v2481, 2
      %v2483 = vadd.f32 %v2481, %v2482
      %v2484 = vrot.slane %v2483, 1
      %v2485 = vadd.f32 %v2483, %v2484
      %v2486 = vadd.f32 %v2168, %v2172
      %v2487 = vrot.slane %v2486, 4
      %v2488 = vadd.f32 %v2486, %v2487
      %v2489 = vrot.slane %v2488, 2
      %v2490 = vadd.f32 %v2488, %v2489
      %v2491 = vrot.slane %v2490, 1
      %v2492 = vadd.f32 %v2490, %v2491
      %v2493 = vadd.f32 %v2169, %v2173
      %v2494 = vrot.slane %v2493, 4
      %v2495 = vadd.f32 %v2493, %v2494
      %v2496 = vrot.slane %v2495, 2
      %v2497 = vadd.f32 %v2495, %v2496
      %v2498 = vrot.slane %v2497, 1
      %v2499 = vadd.f32 %v2497, %v2498
      %v2500 = vadd.f32 %v2170, %v2174
      %v2501 = vrot.slane %v2500, 4
      %v2502 = vadd.f32 %v2500, %v2501
      %v2503 = vrot.slane %v2502, 2
      %v2504 = vadd.f32 %v2502, %v2503
      %v2505 = vrot.slane %v2504, 1
      %v2506 = vadd.f32 %v2504, %v2505
      %v2507 = vadd.f32 %v2175, %v2179
      %v2508 = vrot.slane %v2507, 4
      %v2509 = vadd.f32 %v2507, %v2508
      %v2510 = vrot.slane %v2509, 2
      %v2511 = vadd.f32 %v2509, %v2510
      %v2512 = vrot.slane %v2511, 1
      %v2513 = vadd.f32 %v2511, %v2512
      %v2514 = vadd.f32 %v2176, %v2180
      %v2515 = vrot.slane %v2514, 4
      %v2516 = vadd.f32 %v2514, %v2515
      %v2517 = vrot.slane %v2516, 2
      %v2518 = vadd.f32 %v2516, %v2517
      %v2519 = vrot.slane %v2518, 1
      %v2520 = vadd.f32 %v2518, %v2519
      %v2521 = vadd.f32 %v2177, %v2181
      %v2522 = vrot.slane %v2521, 4
      %v2523 = vadd.f32 %v2521, %v2522
      %v2524 = vrot.slane %v2523, 2
      %v2525 = vadd.f32 %v2523, %v2524
      %v2526 = vrot.slane %v2525, 1
      %v2527 = vadd.f32 %v2525, %v2526
      %v2528 = vadd.f32 %v2178, %v2182
      %v2529 = vrot.slane %v2528, 4
      %v2530 = vadd.f32 %v2528, %v2529
      %v2531 = vrot.slane %v2530, 2
      %v2532 = vadd.f32 %v2530, %v2531
      %v2533 = vrot.slane %v2532, 1
      %v2534 = vadd.f32 %v2532, %v2533
      %v2535 = vadd.f32 %v2183, %v2187
      %v2536 = vrot.slane %v2535, 4
      %v2537 = vadd.f32 %v2535, %v2536
      %v2538 = vrot.slane %v2537, 2
      %v2539 = vadd.f32 %v2537, %v2538
      %v2540 = vrot.slane %v2539, 1
      %v2541 = vadd.f32 %v2539, %v2540
      %v2542 = vadd.f32 %v2184, %v2188
      %v2543 = vrot.slane %v2542, 4
      %v2544 = vadd.f32 %v2542, %v2543
      %v2545 = vrot.slane %v2544, 2
      %v2546 = vadd.f32 %v2544, %v2545
      %v2547 = vrot.slane %v2546, 1
      %v2548 = vadd.f32 %v2546, %v2547
      %v2549 = vadd.f32 %v2185, %v2189
      %v2550 = vrot.slane %v2549, 4
      %v2551 = vadd.f32 %v2549, %v2550
      %v2552 = vrot.slane %v2551, 2
      %v2553 = vadd.f32 %v2551, %v2552
      %v2554 = vrot.slane %v2553, 1
      %v2555 = vadd.f32 %v2553, %v2554
      %v2556 = vadd.f32 %v2186, %v2190
      %v2557 = vrot.slane %v2556, 4
      %v2558 = vadd.f32 %v2556, %v2557
      %v2559 = vrot.slane %v2558, 2
      %v2560 = vadd.f32 %v2558, %v2559
      %v2561 = vrot.slane %v2560, 1
      %v2562 = vadd.f32 %v2560, %v2561
      %v2563 = vadd.f32 %v2191, %v2195
      %v2564 = vrot.slane %v2563, 4
      %v2565 = vadd.f32 %v2563, %v2564
      %v2566 = vrot.slane %v2565, 2
      %v2567 = vadd.f32 %v2565, %v2566
      %v2568 = vrot.slane %v2567, 1
      %v2569 = vadd.f32 %v2567, %v2568
      %v2570 = vadd.f32 %v2192, %v2196
      %v2571 = vrot.slane %v2570, 4
      %v2572 = vadd.f32 %v2570, %v2571
      %v2573 = vrot.slane %v2572, 2
      %v2574 = vadd.f32 %v2572, %v2573
      %v2575 = vrot.slane %v2574, 1
      %v2576 = vadd.f32 %v2574, %v2575
      %v2577 = vadd.f32 %v2193, %v2197
      %v2578 = vrot.slane %v2577, 4
      %v2579 = vadd.f32 %v2577, %v2578
      %v2580 = vrot.slane %v2579, 2
      %v2581 = vadd.f32 %v2579, %v2580
      %v2582 = vrot.slane %v2581, 1
      %v2583 = vadd.f32 %v2581, %v2582
      %v2584 = vadd.f32 %v2194, %v2198
      %v2585 = vrot.slane %v2584, 4
      %v2586 = vadd.f32 %v2584, %v2585
      %v2587 = vrot.slane %v2586, 2
      %v2588 = vadd.f32 %v2586, %v2587
      %v2589 = vrot.slane %v2588, 1
      %v2590 = vadd.f32 %v2588, %v2589
      %v2591 = vadd.f32 %v2199, %v2203
      %v2592 = vrot.slane %v2591, 4
      %v2593 = vadd.f32 %v2591, %v2592
      %v2594 = vrot.slane %v2593, 2
      %v2595 = vadd.f32 %v2593, %v2594
      %v2596 = vrot.slane %v2595, 1
      %v2597 = vadd.f32 %v2595, %v2596
      %v2598 = vadd.f32 %v2200, %v2204
      %v2599 = vrot.slane %v2598, 4
      %v2600 = vadd.f32 %v2598, %v2599
      %v2601 = vrot.slane %v2600, 2
      %v2602 = vadd.f32 %v2600, %v2601
      %v2603 = vrot.slane %v2602, 1
      %v2604 = vadd.f32 %v2602, %v2603
      %v2605 = vadd.f32 %v2201, %v2205
      %v2606 = vrot.slane %v2605, 4
      %v2607 = vadd.f32 %v2605, %v2606
      %v2608 = vrot.slane %v2607, 2
      %v2609 = vadd.f32 %v2607, %v2608
      %v2610 = vrot.slane %v2609, 1
      %v2611 = vadd.f32 %v2609, %v2610
      %v2612 = vadd.f32 %v2202, %v2206
      %v2613 = vrot.slane %v2612, 4
      %v2614 = vadd.f32 %v2612, %v2613
      %v2615 = vrot.slane %v2614, 2
      %v2616 = vadd.f32 %v2614, %v2615
      %v2617 = vrot.slane %v2616, 1
      %v2618 = vadd.f32 %v2616, %v2617
      %v2619 = vadd.f32 %v2207, %v2211
      %v2620 = vrot.slane %v2619, 4
      %v2621 = vadd.f32 %v2619, %v2620
      %v2622 = vrot.slane %v2621, 2
      %v2623 = vadd.f32 %v2621, %v2622
      %v2624 = vrot.slane %v2623, 1
      %v2625 = vadd.f32 %v2623, %v2624
      %v2626 = vadd.f32 %v2208, %v2212
      %v2627 = vrot.slane %v2626, 4
      %v2628 = vadd.f32 %v2626, %v2627
      %v2629 = vrot.slane %v2628, 2
      %v2630 = vadd.f32 %v2628, %v2629
      %v2631 = vrot.slane %v2630, 1
      %v2632 = vadd.f32 %v2630, %v2631
      %v2633 = vadd.f32 %v2209, %v2213
      %v2634 = vrot.slane %v2633, 4
      %v2635 = vadd.f32 %v2633, %v2634
      %v2636 = vrot.slane %v2635, 2
      %v2637 = vadd.f32 %v2635, %v2636
      %v2638 = vrot.slane %v2637, 1
      %v2639 = vadd.f32 %v2637, %v2638
      %v2640 = vadd.f32 %v2210, %v2214
      %v2641 = vrot.slane %v2640, 4
      %v2642 = vadd.f32 %v2640, %v2641
      %v2643 = vrot.slane %v2642, 2
      %v2644 = vadd.f32 %v2642, %v2643
      %v2645 = vrot.slane %v2644, 1
      %v2646 = vadd.f32 %v2644, %v2645
      %v2647 = vadd.f32 %v2215, %v2219
      %v2648 = vrot.slane %v2647, 4
      %v2649 = vadd.f32 %v2647, %v2648
      %v2650 = vrot.slane %v2649, 2
      %v2651 = vadd.f32 %v2649, %v2650
      %v2652 = vrot.slane %v2651, 1
      %v2653 = vadd.f32 %v2651, %v2652
      %v2654 = vadd.f32 %v2216, %v2220
      %v2655 = vrot.slane %v2654, 4
      %v2656 = vadd.f32 %v2654, %v2655
      %v2657 = vrot.slane %v2656, 2
      %v2658 = vadd.f32 %v2656, %v2657
      %v2659 = vrot.slane %v2658, 1
      %v2660 = vadd.f32 %v2658, %v2659
      %v2661 = vadd.f32 %v2217, %v2221
      %v2662 = vrot.slane %v2661, 4
      %v2663 = vadd.f32 %v2661, %v2662
      %v2664 = vrot.slane %v2663, 2
      %v2665 = vadd.f32 %v2663, %v2664
      %v2666 = vrot.slane %v2665, 1
      %v2667 = vadd.f32 %v2665, %v2666
      %v2668 = vadd.f32 %v2218, %v2222
      %v2669 = vrot.slane %v2668, 4
      %v2670 = vadd.f32 %v2668, %v2669
      %v2671 = vrot.slane %v2670, 2
      %v2672 = vadd.f32 %v2670, %v2671
      %v2673 = vrot.slane %v2672, 1
      %v2674 = vadd.f32 %v2672, %v2673
      %v2675 = vadd.f32 %v2223, %v2227
      %v2676 = vrot.slane %v2675, 4
      %v2677 = vadd.f32 %v2675, %v2676
      %v2678 = vrot.slane %v2677, 2
      %v2679 = vadd.f32 %v2677, %v2678
      %v2680 = vrot.slane %v2679, 1
      %v2681 = vadd.f32 %v2679, %v2680
      %v2682 = vadd.f32 %v2224, %v2228
      %v2683 = vrot.slane %v2682, 4
      %v2684 = vadd.f32 %v2682, %v2683
      %v2685 = vrot.slane %v2684, 2
      %v2686 = vadd.f32 %v2684, %v2685
      %v2687 = vrot.slane %v2686, 1
      %v2688 = vadd.f32 %v2686, %v2687
      %v2689 = vadd.f32 %v2225, %v2229
      %v2690 = vrot.slane %v2689, 4
      %v2691 = vadd.f32 %v2689, %v2690
      %v2692 = vrot.slane %v2691, 2
      %v2693 = vadd.f32 %v2691, %v2692
      %v2694 = vrot.slane %v2693, 1
      %v2695 = vadd.f32 %v2693, %v2694
      %v2696 = vadd.f32 %v2226, %v2230
      %v2697 = vrot.slane %v2696, 4
      %v2698 = vadd.f32 %v2696, %v2697
      %v2699 = vrot.slane %v2698, 2
      %v2700 = vadd.f32 %v2698, %v2699
      %v2701 = vrot.slane %v2700, 1
      %v2702 = vadd.f32 %v2700, %v2701
      %v2703 = vadd.f32 %v2231, %v2235
      %v2704 = vrot.slane %v2703, 4
      %v2705 = vadd.f32 %v2703, %v2704
      %v2706 = vrot.slane %v2705, 2
      %v2707 = vadd.f32 %v2705, %v2706
      %v2708 = vrot.slane %v2707, 1
      %v2709 = vadd.f32 %v2707, %v2708
      %v2710 = vadd.f32 %v2232, %v2236
      %v2711 = vrot.slane %v2710, 4
      %v2712 = vadd.f32 %v2710, %v2711
      %v2713 = vrot.slane %v2712, 2
      %v2714 = vadd.f32 %v2712, %v2713
      %v2715 = vrot.slane %v2714, 1
      %v2716 = vadd.f32 %v2714, %v2715
      %v2717 = vadd.f32 %v2233, %v2237
      %v2718 = vrot.slane %v2717, 4
      %v2719 = vadd.f32 %v2717, %v2718
      %v2720 = vrot.slane %v2719, 2
      %v2721 = vadd.f32 %v2719, %v2720
      %v2722 = vrot.slane %v2721, 1
      %v2723 = vadd.f32 %v2721, %v2722
      %v2724 = vadd.f32 %v2234, %v2238
      %v2725 = vrot.slane %v2724, 4
      %v2726 = vadd.f32 %v2724, %v2725
      %v2727 = vrot.slane %v2726, 2
      %v2728 = vadd.f32 %v2726, %v2727
      %v2729 = vrot.slane %v2728, 1
      %v2730 = vadd.f32 %v2728, %v2729
      %v2731 = vadd.f32 %v2239, %v2243
      %v2732 = vrot.slane %v2731, 4
      %v2733 = vadd.f32 %v2731, %v2732
      %v2734 = vrot.slane %v2733, 2
      %v2735 = vadd.f32 %v2733, %v2734
      %v2736 = vrot.slane %v2735, 1
      %v2737 = vadd.f32 %v2735, %v2736
      %v2738 = vadd.f32 %v2240, %v2244
      %v2739 = vrot.slane %v2738, 4
      %v2740 = vadd.f32 %v2738, %v2739
      %v2741 = vrot.slane %v2740, 2
      %v2742 = vadd.f32 %v2740, %v2741
      %v2743 = vrot.slane %v2742, 1
      %v2744 = vadd.f32 %v2742, %v2743
      %v2745 = vadd.f32 %v2241, %v2245
      %v2746 = vrot.slane %v2745, 4
      %v2747 = vadd.f32 %v2745, %v2746
      %v2748 = vrot.slane %v2747, 2
      %v2749 = vadd.f32 %v2747, %v2748
      %v2750 = vrot.slane %v2749, 1
      %v2751 = vadd.f32 %v2749, %v2750
      %v2752 = vadd.f32 %v2242, %v2246
      %v2753 = vrot.slane %v2752, 4
      %v2754 = vadd.f32 %v2752, %v2753
      %v2755 = vrot.slane %v2754, 2
      %v2756 = vadd.f32 %v2754, %v2755
      %v2757 = vrot.slane %v2756, 1
      %v2758 = vadd.f32 %v2756, %v2757
      %v2759 = vadd.f32 %v2247, %v2251
      %v2760 = vrot.slane %v2759, 4
      %v2761 = vadd.f32 %v2759, %v2760
      %v2762 = vrot.slane %v2761, 2
      %v2763 = vadd.f32 %v2761, %v2762
      %v2764 = vrot.slane %v2763, 1
      %v2765 = vadd.f32 %v2763, %v2764
      %v2766 = vadd.f32 %v2248, %v2252
      %v2767 = vrot.slane %v2766, 4
      %v2768 = vadd.f32 %v2766, %v2767
      %v2769 = vrot.slane %v2768, 2
      %v2770 = vadd.f32 %v2768, %v2769
      %v2771 = vrot.slane %v2770, 1
      %v2772 = vadd.f32 %v2770, %v2771
      %v2773 = vadd.f32 %v2249, %v2253
      %v2774 = vrot.slane %v2773, 4
      %v2775 = vadd.f32 %v2773, %v2774
      %v2776 = vrot.slane %v2775, 2
      %v2777 = vadd.f32 %v2775, %v2776
      %v2778 = vrot.slane %v2777, 1
      %v2779 = vadd.f32 %v2777, %v2778
      %v2780 = vadd.f32 %v2250, %v2254
      %v2781 = vrot.slane %v2780, 4
      %v2782 = vadd.f32 %v2780, %v2781
      %v2783 = vrot.slane %v2782, 2
      %v2784 = vadd.f32 %v2782, %v2783
      %v2785 = vrot.slane %v2784, 1
      %v2786 = vadd.f32 %v2784, %v2785
      %v2787 = vadd.f32 %v2255, %v2259
      %v2788 = vrot.slane %v2787, 4
      %v2789 = vadd.f32 %v2787, %v2788
      %v2790 = vrot.slane %v2789, 2
      %v2791 = vadd.f32 %v2789, %v2790
      %v2792 = vrot.slane %v2791, 1
      %v2793 = vadd.f32 %v2791, %v2792
      %v2794 = vadd.f32 %v2256, %v2260
      %v2795 = vrot.slane %v2794, 4
      %v2796 = vadd.f32 %v2794, %v2795
      %v2797 = vrot.slane %v2796, 2
      %v2798 = vadd.f32 %v2796, %v2797
      %v2799 = vrot.slane %v2798, 1
      %v2800 = vadd.f32 %v2798, %v2799
      %v2801 = vadd.f32 %v2257, %v2261
      %v2802 = vrot.slane %v2801, 4
      %v2803 = vadd.f32 %v2801, %v2802
      %v2804 = vrot.slane %v2803, 2
      %v2805 = vadd.f32 %v2803, %v2804
      %v2806 = vrot.slane %v2805, 1
      %v2807 = vadd.f32 %v2805, %v2806
      %v2808 = vadd.f32 %v2258, %v2262
      %v2809 = vrot.slane %v2808, 4
      %v2810 = vadd.f32 %v2808, %v2809
      %v2811 = vrot.slane %v2810, 2
      %v2812 = vadd.f32 %v2810, %v2811
      %v2813 = vrot.slane %v2812, 1
      %v2814 = vadd.f32 %v2812, %v2813
      %v2815 = vadd.f32 %v2263, %v2267
      %v2816 = vrot.slane %v2815, 4
      %v2817 = vadd.f32 %v2815, %v2816
      %v2818 = vrot.slane %v2817, 2
      %v2819 = vadd.f32 %v2817, %v2818
      %v2820 = vrot.slane %v2819, 1
      %v2821 = vadd.f32 %v2819, %v2820
      %v2822 = vadd.f32 %v2264, %v2268
      %v2823 = vrot.slane %v2822, 4
      %v2824 = vadd.f32 %v2822, %v2823
      %v2825 = vrot.slane %v2824, 2
      %v2826 = vadd.f32 %v2824, %v2825
      %v2827 = vrot.slane %v2826, 1
      %v2828 = vadd.f32 %v2826, %v2827
      %v2829 = vadd.f32 %v2265, %v2269
      %v2830 = vrot.slane %v2829, 4
      %v2831 = vadd.f32 %v2829, %v2830
      %v2832 = vrot.slane %v2831, 2
      %v2833 = vadd.f32 %v2831, %v2832
      %v2834 = vrot.slane %v2833, 1
      %v2835 = vadd.f32 %v2833, %v2834
      %v2836 = vadd.f32 %v2266, %v2270
      %v2837 = vrot.slane %v2836, 4
      %v2838 = vadd.f32 %v2836, %v2837
      %v2839 = vrot.slane %v2838, 2
      %v2840 = vadd.f32 %v2838, %v2839
      %v2841 = vrot.slane %v2840, 1
      %v2842 = vadd.f32 %v2840, %v2841
      %v2843 = vadd.f32 %v2271, %v2275
      %v2844 = vrot.slane %v2843, 4
      %v2845 = vadd.f32 %v2843, %v2844
      %v2846 = vrot.slane %v2845, 2
      %v2847 = vadd.f32 %v2845, %v2846
      %v2848 = vrot.slane %v2847, 1
      %v2849 = vadd.f32 %v2847, %v2848
      %v2850 = vadd.f32 %v2272, %v2276
      %v2851 = vrot.slane %v2850, 4
      %v2852 = vadd.f32 %v2850, %v2851
      %v2853 = vrot.slane %v2852, 2
      %v2854 = vadd.f32 %v2852, %v2853
      %v2855 = vrot.slane %v2854, 1
      %v2856 = vadd.f32 %v2854, %v2855
      %v2857 = vadd.f32 %v2273, %v2277
      %v2858 = vrot.slane %v2857, 4
      %v2859 = vadd.f32 %v2857, %v2858
      %v2860 = vrot.slane %v2859, 2
      %v2861 = vadd.f32 %v2859, %v2860
      %v2862 = vrot.slane %v2861, 1
      %v2863 = vadd.f32 %v2861, %v2862
      %v2864 = vadd.f32 %v2274, %v2278
      %v2865 = vrot.slane %v2864, 4
      %v2866 = vadd.f32 %v2864, %v2865
      %v2867 = vrot.slane %v2866, 2
      %v2868 = vadd.f32 %v2866, %v2867
      %v2869 = vrot.slane %v2868, 1
      %v2870 = vadd.f32 %v2868, %v2869
      %v2871 = vadd.f32 %v2279, %v2283
      %v2872 = vrot.slane %v2871, 4
      %v2873 = vadd.f32 %v2871, %v2872
      %v2874 = vrot.slane %v2873, 2
      %v2875 = vadd.f32 %v2873, %v2874
      %v2876 = vrot.slane %v2875, 1
      %v2877 = vadd.f32 %v2875, %v2876
      %v2878 = vadd.f32 %v2280, %v2284
      %v2879 = vrot.slane %v2878, 4
      %v2880 = vadd.f32 %v2878, %v2879
      %v2881 = vrot.slane %v2880, 2
      %v2882 = vadd.f32 %v2880, %v2881
      %v2883 = vrot.slane %v2882, 1
      %v2884 = vadd.f32 %v2882, %v2883
      %v2885 = vadd.f32 %v2281, %v2285
      %v2886 = vrot.slane %v2885, 4
      %v2887 = vadd.f32 %v2885, %v2886
      %v2888 = vrot.slane %v2887, 2
      %v2889 = vadd.f32 %v2887, %v2888
      %v2890 = vrot.slane %v2889, 1
      %v2891 = vadd.f32 %v2889, %v2890
      %v2892 = vadd.f32 %v2282, %v2286
      %v2893 = vrot.slane %v2892, 4
      %v2894 = vadd.f32 %v2892, %v2893
      %v2895 = vrot.slane %v2894, 2
      %v2896 = vadd.f32 %v2894, %v2895
      %v2897 = vrot.slane %v2896, 1
      %v2898 = vadd.f32 %v2896, %v2897
      %v2899 = vadd.f32 %v2287, %v2291
      %v2900 = vrot.slane %v2899, 4
      %v2901 = vadd.f32 %v2899, %v2900
      %v2902 = vrot.slane %v2901, 2
      %v2903 = vadd.f32 %v2901, %v2902
      %v2904 = vrot.slane %v2903, 1
      %v2905 = vadd.f32 %v2903, %v2904
      %v2906 = vadd.f32 %v2288, %v2292
      %v2907 = vrot.slane %v2906, 4
      %v2908 = vadd.f32 %v2906, %v2907
      %v2909 = vrot.slane %v2908, 2
      %v2910 = vadd.f32 %v2908, %v2909
      %v2911 = vrot.slane %v2910, 1
      %v2912 = vadd.f32 %v2910, %v2911
      %v2913 = vadd.f32 %v2289, %v2293
      %v2914 = vrot.slane %v2913, 4
      %v2915 = vadd.f32 %v2913, %v2914
      %v2916 = vrot.slane %v2915, 2
      %v2917 = vadd.f32 %v2915, %v2916
      %v2918 = vrot.slane %v2917, 1
      %v2919 = vadd.f32 %v2917, %v2918
      %v2920 = vadd.f32 %v2290, %v2294
      %v2921 = vrot.slane %v2920, 4
      %v2922 = vadd.f32 %v2920, %v2921
      %v2923 = vrot.slane %v2922, 2
      %v2924 = vadd.f32 %v2922, %v2923
      %v2925 = vrot.slane %v2924, 1
      %v2926 = vadd.f32 %v2924, %v2925
      %v2927 = vadd.f32 %v2295, %v2299
      %v2928 = vrot.slane %v2927, 4
      %v2929 = vadd.f32 %v2927, %v2928
      %v2930 = vrot.slane %v2929, 2
      %v2931 = vadd.f32 %v2929, %v2930
      %v2932 = vrot.slane %v2931, 1
      %v2933 = vadd.f32 %v2931, %v2932
      %v2934 = vadd.f32 %v2296, %v2300
      %v2935 = vrot.slane %v2934, 4
      %v2936 = vadd.f32 %v2934, %v2935
      %v2937 = vrot.slane %v2936, 2
      %v2938 = vadd.f32 %v2936, %v2937
      %v2939 = vrot.slane %v2938, 1
      %v2940 = vadd.f32 %v2938, %v2939
      %v2941 = vadd.f32 %v2297, %v2301
      %v2942 = vrot.slane %v2941, 4
      %v2943 = vadd.f32 %v2941, %v2942
      %v2944 = vrot.slane %v2943, 2
      %v2945 = vadd.f32 %v2943, %v2944
      %v2946 = vrot.slane %v2945, 1
      %v2947 = vadd.f32 %v2945, %v2946
      %v2948 = vadd.f32 %v2298, %v2302
      %v2949 = vrot.slane %v2948, 4
      %v2950 = vadd.f32 %v2948, %v2949
      %v2951 = vrot.slane %v2950, 2
      %v2952 = vadd.f32 %v2950, %v2951
      %v2953 = vrot.slane %v2952, 1
      %v2954 = vadd.f32 %v2952, %v2953
      %v2955 = vadd.f32 %v2303, %v2307
      %v2956 = vrot.slane %v2955, 4
      %v2957 = vadd.f32 %v2955, %v2956
      %v2958 = vrot.slane %v2957, 2
      %v2959 = vadd.f32 %v2957, %v2958
      %v2960 = vrot.slane %v2959, 1
      %v2961 = vadd.f32 %v2959, %v2960
      %v2962 = vadd.f32 %v2304, %v2308
      %v2963 = vrot.slane %v2962, 4
      %v2964 = vadd.f32 %v2962, %v2963
      %v2965 = vrot.slane %v2964, 2
      %v2966 = vadd.f32 %v2964, %v2965
      %v2967 = vrot.slane %v2966, 1
      %v2968 = vadd.f32 %v2966, %v2967
      %v2969 = vadd.f32 %v2305, %v2309
      %v2970 = vrot.slane %v2969, 4
      %v2971 = vadd.f32 %v2969, %v2970
      %v2972 = vrot.slane %v2971, 2
      %v2973 = vadd.f32 %v2971, %v2972
      %v2974 = vrot.slane %v2973, 1
      %v2975 = vadd.f32 %v2973, %v2974
      %v2976 = vadd.f32 %v2306, %v2310
      %v2977 = vrot.slane %v2976, 4
      %v2978 = vadd.f32 %v2976, %v2977
      %v2979 = vrot.slane %v2978, 2
      %v2980 = vadd.f32 %v2978, %v2979
      %v2981 = vrot.slane %v2980, 1
      %v2982 = vadd.f32 %v2980, %v2981
      %v2983 = vld [vmem:[%s3] sm:$0xff]
      %v2984 = vld [vmem:[%s3 + $0x8] sm:$0xff]
      %v2985 = vld [vmem:[%s3 + $0x10] sm:$0xff]
      %v2986 = vld [vmem:[%s3 + $0x18] sm:$0xff]
      %v2987 = vld [vmem:[%s3 + $0x20] sm:$0xff]
      %v2988 = vld [vmem:[%s3 + $0x28] sm:$0xff]
      %v2989 = vld [vmem:[%s3 + $0x30] sm:$0xff]
      %v2990 = vld [vmem:[%s3 + $0x38] sm:$0xff]
      %v2991 = vld [vmem:[%s3 + $0x40] sm:$0xff]
      %v2992 = vld [vmem:[%s3 + $0x48] sm:$0xff]
      %v2993 = vld [vmem:[%s3 + $0x50] sm:$0xff]
      %v2994 = vld [vmem:[%s3 + $0x58] sm:$0xff]
      %v2995 = vld [vmem:[%s3 + $0x60] sm:$0xff]
      %v2996 = vld [vmem:[%s3 + $0x68] sm:$0xff]
      %v2997 = vld [vmem:[%s3 + $0x70] sm:$0xff]
      %v2998 = vld [vmem:[%s3 + $0x78] sm:$0xff]
      %v2999 = vld [vmem:[%s3 + $0x80] sm:$0xff]
      %v3000 = vld [vmem:[%s3 + $0x88] sm:$0xff]
      %v3001 = vld [vmem:[%s3 + $0x90] sm:$0xff]
      %v3002 = vld [vmem:[%s3 + $0x98] sm:$0xff]
      %v3003 = vld [vmem:[%s3 + $0xa0] sm:$0xff]
      %v3004 = vld [vmem:[%s3 + $0xa8] sm:$0xff]
      %v3005 = vld [vmem:[%s3 + $0xb0] sm:$0xff]
      %v3006 = vld [vmem:[%s3 + $0xb8] sm:$0xff]
      %v3007 = vld [vmem:[%s3 + $0xc0] sm:$0xff]
      %v3008 = vld [vmem:[%s3 + $0xc8] sm:$0xff]
      %v3009 = vld [vmem:[%s3 + $0xd0] sm:$0xff]
      %v3010 = vld [vmem:[%s3 + $0xd8] sm:$0xff]
      %v3011 = vld [vmem:[%s3 + $0xe0] sm:$0xff]
      %v3012 = vld [vmem:[%s3 + $0xe8] sm:$0xff]
      %v3013 = vld [vmem:[%s3 + $0xf0] sm:$0xff]
      %v3014 = vld [vmem:[%s3 + $0xf8] sm:$0xff]
      %v3015 = vld [vmem:[%s3 + $0x100] sm:$0xff]
      %v3016 = vld [vmem:[%s3 + $0x108] sm:$0xff]
      %v3017 = vld [vmem:[%s3 + $0x110] sm:$0xff]
      %v3018 = vld [vmem:[%s3 + $0x118] sm:$0xff]
      %v3019 = vld [vmem:[%s3 + $0x120] sm:$0xff]
      %v3020 = vld [vmem:[%s3 + $0x128] sm:$0xff]
      %v3021 = vld [vmem:[%s3 + $0x130] sm:$0xff]
      %v3022 = vld [vmem:[%s3 + $0x138] sm:$0xff]
      %v3023 = vld [vmem:[%s3 + $0x140] sm:$0xff]
      %v3024 = vld [vmem:[%s3 + $0x148] sm:$0xff]
      %v3025 = vld [vmem:[%s3 + $0x150] sm:$0xff]
      %v3026 = vld [vmem:[%s3 + $0x158] sm:$0xff]
      %v3027 = vld [vmem:[%s3 + $0x160] sm:$0xff]
      %v3028 = vld [vmem:[%s3 + $0x168] sm:$0xff]
      %v3029 = vld [vmem:[%s3 + $0x170] sm:$0xff]
      %v3030 = vld [vmem:[%s3 + $0x178] sm:$0xff]
      %v3031 = vld [vmem:[%s3 + $0x180] sm:$0xff]
      %v3032 = vld [vmem:[%s3 + $0x188] sm:$0xff]
      %v3033 = vld [vmem:[%s3 + $0x190] sm:$0xff]
      %v3034 = vld [vmem:[%s3 + $0x198] sm:$0xff]
      %v3035 = vld [vmem:[%s3 + $0x1a0] sm:$0xff]
      %v3036 = vld [vmem:[%s3 + $0x1a8] sm:$0xff]
      %v3037 = vld [vmem:[%s3 + $0x1b0] sm:$0xff]
      %v3038 = vld [vmem:[%s3 + $0x1b8] sm:$0xff]
      %v3039 = vld [vmem:[%s3 + $0x1c0] sm:$0xff]
      %v3040 = vld [vmem:[%s3 + $0x1c8] sm:$0xff]
      %v3041 = vld [vmem:[%s3 + $0x1d0] sm:$0xff]
      %v3042 = vld [vmem:[%s3 + $0x1d8] sm:$0xff]
      %v3043 = vld [vmem:[%s3 + $0x1e0] sm:$0xff]
      %v3044 = vld [vmem:[%s3 + $0x1e8] sm:$0xff]
      %v3045 = vld [vmem:[%s3 + $0x1f0] sm:$0xff]
      %v3046 = vld [vmem:[%s3 + $0x1f8] sm:$0xff]
      %vm3143 = vcmask 1041409
      %v3144 = vsel %vm3143, %v2345, %v2317
      %vm3145 = vcmask 1042434
      %v3146 = vsel %vm3145, %v2373, %v3144
      %vm3147 = vcmask 1043459
      %v3148 = vsel %vm3147, %v2401, %v3146
      %vm3149 = vcmask 1044484
      %v3150 = vsel %vm3149, %v2429, %v3148
      %vm3151 = vcmask 1045509
      %v3152 = vsel %vm3151, %v2457, %v3150
      %vm3153 = vcmask 1046534
      %v3154 = vsel %vm3153, %v2485, %v3152
      %vm3155 = vcmask 1047559
      %v3156 = vsel %vm3155, %v2513, %v3154
      %v3157 = vsel %vm3143, %v2352, %v2324
      %v3158 = vsel %vm3145, %v2380, %v3157
      %v3159 = vsel %vm3147, %v2408, %v3158
      %v3160 = vsel %vm3149, %v2436, %v3159
      %v3161 = vsel %vm3151, %v2464, %v3160
      %v3162 = vsel %vm3153, %v2492, %v3161
      %v3163 = vsel %vm3155, %v2520, %v3162
      %v3164 = vsel %vm3143, %v2359, %v2331
      %v3165 = vsel %vm3145, %v2387, %v3164
      %v3166 = vsel %vm3147, %v2415, %v3165
      %v3167 = vsel %vm3149, %v2443, %v3166
      %v3168 = vsel %vm3151, %v2471, %v3167
      %v3169 = vsel %vm3153, %v2499, %v3168
      %v3170 = vsel %vm3155, %v2527, %v3169
      %v3171 = vsel %vm3143, %v2366, %v2338
      %v3172 = vsel %vm3145, %v2394, %v3171
      %v3173 = vsel %vm3147, %v2422, %v3172
      %v3174 = vsel %vm3149, %v2450, %v3173
      %v3175 = vsel %vm3151, %v2478, %v3174
      %v3176 = vsel %vm3153, %v2506, %v3175
      %v3177 = vsel %vm3155, %v2534, %v3176
      %v3178 = vsel %vm3143, %v2569, %v2541
      %v3179 = vsel %vm3145, %v2597, %v3178
      %v3180 = vsel %vm3147, %v2625, %v3179
      %v3181 = vsel %vm3149, %v2653, %v3180
      %v3182 = vsel %vm3151, %v2681, %v3181
      %v3183 = vsel %vm3153, %v2709, %v3182
      %v3184 = vsel %vm3155, %v2737, %v3183
      %v3185 = vsel %vm3143, %v2576, %v2548
      %v3186 = vsel %vm3145, %v2604, %v3185
      %v3187 = vsel %vm3147, %v2632, %v3186
      %v3188 = vsel %vm3149, %v2660, %v3187
      %v3189 = vsel %vm3151, %v2688, %v3188
      %v3190 = vsel %vm3153, %v2716, %v3189
      %v3191 = vsel %vm3155, %v2744, %v3190
      %v3192 = vsel %vm3143, %v2583, %v2555
      %v3193 = vsel %vm3145, %v2611, %v3192
      %v3194 = vsel %vm3147, %v2639, %v3193
      %v3195 = vsel %vm3149, %v2667, %v3194
      %v3196 = vsel %vm3151, %v2695, %v3195
      %v3197 = vsel %vm3153, %v2723, %v3196
      %v3198 = vsel %vm3155, %v2751, %v3197
      %v3199 = vsel %vm3143, %v2590, %v2562
      %v3200 = vsel %vm3145, %v2618, %v3199
      %v3201 = vsel %vm3147, %v2646, %v3200
      %v3202 = vsel %vm3149, %v2674, %v3201
      %v3203 = vsel %vm3151, %v2702, %v3202
      %v3204 = vsel %vm3153, %v2730, %v3203
      %v3205 = vsel %vm3155, %v2758, %v3204
      %v3206 = vsel %vm3143, %v2793, %v2765
      %v3207 = vsel %vm3145, %v2821, %v3206
      %v3208 = vsel %vm3147, %v2849, %v3207
      %v3209 = vsel %vm3149, %v2877, %v3208
      %v3210 = vsel %vm3151, %v2905, %v3209
      %v3211 = vsel %vm3153, %v2933, %v3210
      %v3212 = vsel %vm3155, %v2961, %v3211
      %v3213 = vsel %vm3143, %v2800, %v2772
      %v3214 = vsel %vm3145, %v2828, %v3213
      %v3215 = vsel %vm3147, %v2856, %v3214
      %v3216 = vsel %vm3149, %v2884, %v3215
      %v3217 = vsel %vm3151, %v2912, %v3216
      %v3218 = vsel %vm3153, %v2940, %v3217
      %v3219 = vsel %vm3155, %v2968, %v3218
      %v3220 = vsel %vm3143, %v2807, %v2779
      %v3221 = vsel %vm3145, %v2835, %v3220
      %v3222 = vsel %vm3147, %v2863, %v3221
      %v3223 = vsel %vm3149, %v2891, %v3222
      %v3224 = vsel %vm3151, %v2919, %v3223
      %v3225 = vsel %vm3153, %v2947, %v3224
      %v3226 = vsel %vm3155, %v2975, %v3225
      %v3227 = vsel %vm3143, %v2814, %v2786
      %v3228 = vsel %vm3145, %v2842, %v3227
      %v3229 = vsel %vm3147, %v2870, %v3228
      %v3230 = vsel %vm3149, %v2898, %v3229
      %v3231 = vsel %vm3151, %v2926, %v3230
      %v3232 = vsel %vm3153, %v2954, %v3231
      %v3233 = vsel %vm3155, %v2982, %v3232
      %3246 = vmatprep.subr.mxu0 0.0
      %3247 = vmatpush1.msra.mxu0 %v2983
      %3248 = vmatprep.subr.mxu0 0.0
      %3249 = vmatpush1.msra.mxu0 %v2984
      %3250 = vmatprep.subr.mxu0 0.0
      %3251 = vmatpush1.msra.mxu0 %v2985
      %3252 = vmatprep.subr.mxu0 0.0
      %3253 = vmatpush1.msra.mxu0 %v2986
      %3254 = vmatprep.subr.mxu0 0.0
      %3255 = vmatpush1.msra.mxu0 %v2987
      %3256 = vmatprep.subr.mxu0 0.0
      %3257 = vmatpush1.msra.mxu0 %v2988
      %3258 = vmatprep.subr.mxu0 0.0
      %3259 = vmatpush1.msra.mxu0 %v2989
      %3260 = vmatprep.subr.mxu0 0.0
      %3261 = vmatpush1.msra.mxu0 %v2990
      %3262 = vmatprep.subr.mxu0 0.0
      %3263 = vmatpush1.msra.mxu0 %v2991
      %3264 = vmatprep.subr.mxu0 0.0
      %3265 = vmatpush1.msra.mxu0 %v2992
      %3266 = vmatprep.subr.mxu0 0.0
      %3267 = vmatpush1.msra.mxu0 %v2993
      %3268 = vmatprep.subr.mxu0 0.0
      %3269 = vmatpush1.msra.mxu0 %v2994
      %3270 = vmatprep.subr.mxu0 0.0
      %3271 = vmatpush1.msra.mxu0 %v2995
      %3272 = vmatprep.subr.mxu0 0.0
      %3273 = vmatpush1.msra.mxu0 %v2996
      %3274 = vmatprep.subr.mxu0 0.0
      %3275 = vmatpush1.msra.mxu0 %v2997
      %3276 = vmatprep.subr.mxu0 0.0
      %3277 = vmatpush1.msra.mxu0 %v2998
      %3278 = vmatprep.subr.mxu0 0.0
      %3279 = vmatpush1.msra.mxu0 %v2999
      %3280 = vmatprep.subr.mxu0 0.0
      %3281 = vmatpush1.msra.mxu0 %v3000
      %3282 = vmatprep.subr.mxu0 0.0
      %3283 = vmatpush1.msra.mxu0 %v3001
      %3284 = vmatprep.subr.mxu0 0.0
      %3285 = vmatpush1.msra.mxu0 %v3002
      %3286 = vmatprep.subr.mxu0 0.0
      %3287 = vmatpush1.msra.mxu0 %v3003
      %3288 = vmatprep.subr.mxu0 0.0
      %3289 = vmatpush1.msra.mxu0 %v3004
      %3290 = vmatprep.subr.mxu0 0.0
      %3291 = vmatpush1.msra.mxu0 %v3005
      %3292 = vmatprep.subr.mxu0 0.0
      %3293 = vmatpush1.msra.mxu0 %v3006
      %3294 = vmatprep.subr.mxu0 0.0
      %3295 = vmatpush1.msra.mxu0 %v3007
      %3296 = vmatprep.subr.mxu0 0.0
      %3297 = vmatpush1.msra.mxu0 %v3008
      %3298 = vmatprep.subr.mxu0 0.0
      %3299 = vmatpush1.msra.mxu0 %v3009
      %3300 = vmatprep.subr.mxu0 0.0
      %3301 = vmatpush1.msra.mxu0 %v3010
      %3302 = vmatprep.subr.mxu0 0.0
      %3303 = vmatpush1.msra.mxu0 %v3011
      %3304 = vmatprep.subr.mxu0 0.0
      %3305 = vmatpush1.msra.mxu0 %v3012
      %3306 = vmatprep.subr.mxu0 0.0
      %3307 = vmatpush1.msra.mxu0 %v3013
      %3308 = vmatprep.subr.mxu0 0.0
      %3309 = vmatpush1.msra.mxu0 %v3014
      %3310 = vmatprep.mubr.f32.mxu0 %v3163
      %3311 = vmatmul.mubr.f32.gmra.mrb[0].mxu0 %v3156
      %v3312 = vpop.f32.mrb[0].mxu0
      %v3313 = vadd.f32 0.0, %v3312
      %v3314 = vpop.f32.mrb[0].mxu0
      %3315 = vmatprep.mubr.f32.mxu0 %v3191
      %3316 = vmatmul.mubr.f32.gmra.mrb[0].mxu0 %v3184
      %v3317 = vpop.f32.mrb[0].mxu0
      %v3318 = vadd.f32 0.0, %v3317
      %v3319 = vpop.f32.mrb[0].mxu0
      %3320 = vmatprep.mubr.f32.mxu0 %v3219
      %3321 = vmatmul.mubr.f32.gmra.mrb[0].mxu0 %v3212
      %v3322 = vpop.f32.mrb[0].mxu0
      %v3323 = vadd.f32 0.0, %v3322
      %v3324 = vpop.f32.mrb[0].mxu0
      %3325 = vdwg.mxu0
      %3326 = vmatprep.subr.mxu0 0.0
      %3327 = vmatpush1.msra.mxu0 %v3015
      %3328 = vmatprep.subr.mxu0 0.0
      %3329 = vmatpush1.msra.mxu0 %v3016
      %3330 = vmatprep.subr.mxu0 0.0
      %3331 = vmatpush1.msra.mxu0 %v3017
      %3332 = vmatprep.subr.mxu0 0.0
      %3333 = vmatpush1.msra.mxu0 %v3018
      %3334 = vmatprep.subr.mxu0 0.0
      %3335 = vmatpush1.msra.mxu0 %v3019
      %3336 = vmatprep.subr.mxu0 0.0
      %3337 = vmatpush1.msra.mxu0 %v3020
      %3338 = vmatprep.subr.mxu0 0.0
      %3339 = vmatpush1.msra.mxu0 %v3021
      %3340 = vmatprep.subr.mxu0 0.0
      %3341 = vmatpush1.msra.mxu0 %v3022
      %3342 = vmatprep.subr.mxu0 0.0
      %3343 = vmatpush1.msra.mxu0 %v3023
      %3344 = vmatprep.subr.mxu0 0.0
      %3345 = vmatpush1.msra.mxu0 %v3024
      %3346 = vmatprep.subr.mxu0 0.0
      %3347 = vmatpush1.msra.mxu0 %v3025
      %3348 = vmatprep.subr.mxu0 0.0
      %3349 = vmatpush1.msra.mxu0 %v3026
      %3350 = vmatprep.subr.mxu0 0.0
      %3351 = vmatpush1.msra.mxu0 %v3027
      %3352 = vmatprep.subr.mxu0 0.0
      %3353 = vmatpush1.msra.mxu0 %v3028
      %3354 = vmatprep.subr.mxu0 0.0
      %3355 = vmatpush1.msra.mxu0 %v3029
      %3356 = vmatprep.subr.mxu0 0.0
      %3357 = vmatpush1.msra.mxu0 %v3030
      %3358 = vmatprep.subr.mxu0 0.0
      %3359 = vmatpush1.msra.mxu0 %v3031
      %3360 = vmatprep.subr.mxu0 0.0
      %3361 = vmatpush1.msra.mxu0 %v3032
      %3362 = vmatprep.subr.mxu0 0.0
      %3363 = vmatpush1.msra.mxu0 %v3033
      %3364 = vmatprep.subr.mxu0 0.0
      %3365 = vmatpush1.msra.mxu0 %v3034
      %3366 = vmatprep.subr.mxu0 0.0
      %3367 = vmatpush1.msra.mxu0 %v3035
      %3368 = vmatprep.subr.mxu0 0.0
      %3369 = vmatpush1.msra.mxu0 %v3036
      %3370 = vmatprep.subr.mxu0 0.0
      %3371 = vmatpush1.msra.mxu0 %v3037
      %3372 = vmatprep.subr.mxu0 0.0
      %3373 = vmatpush1.msra.mxu0 %v3038
      %3374 = vmatprep.subr.mxu0 0.0
      %3375 = vmatpush1.msra.mxu0 %v3039
      %3376 = vmatprep.subr.mxu0 0.0
      %3377 = vmatpush1.msra.mxu0 %v3040
      %3378 = vmatprep.subr.mxu0 0.0
      %3379 = vmatpush1.msra.mxu0 %v3041
      %3380 = vmatprep.subr.mxu0 0.0
      %3381 = vmatpush1.msra.mxu0 %v3042
      %3382 = vmatprep.subr.mxu0 0.0
      %3383 = vmatpush1.msra.mxu0 %v3043
      %3384 = vmatprep.subr.mxu0 0.0
      %3385 = vmatpush1.msra.mxu0 %v3044
      %3386 = vmatprep.subr.mxu0 0.0
      %3387 = vmatpush1.msra.mxu0 %v3045
      %3388 = vmatprep.subr.mxu0 0.0
      %3389 = vmatpush1.msra.mxu0 %v3046
      %3390 = vmatprep.mubr.f32.mxu0 %v3177
      %3391 = vmatmul.mubr.f32.gmra.mrb[0].mxu0 %v3170
      %v3392 = vpop.f32.mrb[0].mxu0
      %v3393 = vadd.f32 %v3313, %v3392
      %v3394 = vpop.f32.mrb[0].mxu0
      %3395 = vmatprep.mubr.f32.mxu0 %v3205
      %3396 = vmatmul.mubr.f32.gmra.mrb[0].mxu0 %v3198
      %v3397 = vpop.f32.mrb[0].mxu0
      %v3398 = vadd.f32 %v3318, %v3397
      %v3399 = vpop.f32.mrb[0].mxu0
      %3400 = vmatprep.mubr.f32.mxu0 %v3233
      %3401 = vmatmul.mubr.f32.gmra.mrb[0].mxu0 %v3226
      %v3402 = vpop.f32.mrb[0].mxu0
      %v3403 = vadd.f32 %v3323, %v3402
      %v3404 = vpop.f32.mrb[0].mxu0
      %3405 = vdwg.mxu0
      %3406 = vst [vmem:[%s202] sm:$0xff] %v3393
      %3407 = vst [vmem:[%s202 + $0x8] sm:$0xff] %v3398
      %3408 = vst [vmem:[%s202 + $0x10] sm:$0xff] %v3403
      %s3409 = smul.u32 3, %s15
      %p3410 = scmp.lt.s32.totalorder %s3409, 5
      %s3411 = scalar_select %p3410, %s3409, 5
      %s3412 = smul.addr %s3411, 8
      %s3413 = scalar_lea.vmem %s4, %s3412
      // Predicated region
      $region37: #{protonet_forward.1} parent=35 // pred_check
        %p3414 = pneg %p122
      $region38: #{protonet_forward.1} parent=35 // pred_check_branch
        %3416 = sbr.rel (%p3414) target = $region40
      $region39: #{protonet_forward.1} parent=35 // pred_region
        %s3417 = smul.u32 3, %s15
      $region40: #{protonet_forward.1} parent=35 // pred_fallthru
        _
    $region36: #{protonet_forward.1} parent=5 // pred_fallthru
      _
    %p3418 = scmp.le.s32.totalorder 2, %s10
    // Predicated region
    $region41: #{protonet_forward.1} parent=5 // pred_check
      %p3419 = pneg %p3418
    $region42: #{protonet_forward.1} parent=5 // pred_check_branch
      %3421 = sbr.rel (%p3419) target = $region44
    $region43: #{protonet_forward.1} parent=5 // pred_region
      %s3422 = ssub.s32 %s10, 2
      // Predicated region
      $region45: #{protonet_forward.1} parent=43 // pred_check
        %p3423 = pneg %p128
      $region46: #{protonet_forward.1} parent=43 // pred_check_branch
        %3425 = sbr.rel (%p3423) target = $region48
      $region47: #{protonet_forward.1} parent=43 // pred_region
        %s3426 = smul.u32 3, %s16
        %p3427 = scmp.lt.s32.totalorder %s3426, 5
        %s3428 = scalar_select %p3427, %s3426, 5
        %s3429 = smul.addr %s3428, 8
        %s3430 = scalar_lea.vmem %s4, %s3429
      $region48: #{protonet_forward.1} parent=43 // pred_fallthru
        _
    $region44: #{protonet_forward.1} parent=5 // pred_fallthru
      _
  $region6: #{protonet_forward.1} parent=0 // loop_footer
    %s14 = sadd.s32 1, %s10
  $region7: #{protonet_forward.1} parent=0 // loop_footer_branch
    %9 = sbr.rel target = $region3
  $region8: #{protonet_forward.1} parent=0 // loop_exit
    _

</llo_original>
